<compile_context>
chip_gen: v7x
topology: tpu7x:2x2x1
jax: 0.10.0
libtpu: 0.0.40
codegen_flags: <defaults>
</compile_context>

<pallas_src>
import jax
import jax.numpy as jnp
from jax.experimental import pallas as pl
from jax.experimental.pallas import tpu as pltpu

# ---- model hyper-parameters (module defaults, except num_layers kept small for the demo) ----
EMBED = 64          # embedding_dim
HEADS = 4           # num_heads
HEAD_DIM = EMBED // HEADS
FFN = 512           # dim_feedforward
VOCAB = 74          # vocab_size
VPAD = 128          # vocab padded to a lane-dense width
NUM_LAYERS = 2      # module default is 12; kernel reads L from the weight stack
LN_EPS = 1e-5


def _layer_norm(x, w, b):
    mu = jnp.mean(x, axis=-1, keepdims=True)
    var = jnp.mean((x - mu) ** 2, axis=-1, keepdims=True)
    return (x - mu) * jax.lax.rsqrt(var + LN_EPS) * w + b


# --------------------------- fused Pallas kernel --------------------------------
def ecg_bert_kernel(x_ref,
                    wq_ref, wk_ref, wv_ref, bq_ref, bk_ref, bv_ref,
                    wo_ref, bo_ref,
                    w1_ref, b1_ref, w2_ref, b2_ref,
                    ln1w_ref, ln1b_ref, ln2w_ref, ln2b_ref,
                    wf_ref, bf_ref, o_ref):
    # x_ref : (S, E) -- one batch element (grid axis 0 is the batch, "parallel").
    # Per-layer weights carry a leading L axis; matmul weights are bf16, the rest f32.
    x0 = x_ref[...].astype(jnp.float32)                   # (S, E)
    S = x0.shape[0]
    L = wq_ref.shape[0]

    def layer(l, x):
        # ---- Q/K/V projections: heads live on a leading batch axis, never on lanes ----
        xb = jnp.broadcast_to(x.astype(jnp.bfloat16)[None], (HEADS, S, EMBED))   # (H, S, E)
        qh = jnp.einsum('hte,hde->htd', xb, wq_ref[l],
                        preferred_element_type=jnp.float32) + bq_ref[l]          # (H, S, D)
        kh = jnp.einsum('hte,hde->htd', xb, wk_ref[l],
                        preferred_element_type=jnp.float32) + bk_ref[l]
        vh = jnp.einsum('hte,hde->htd', xb, wv_ref[l],
                        preferred_element_type=jnp.float32) + bv_ref[l]

        # ---- attention (1/sqrt(D) already folded into Q); softmax in f32 ----
        s = jnp.einsum('hqd,hkd->hqk', qh.astype(jnp.bfloat16), kh.astype(jnp.bfloat16),
                       preferred_element_type=jnp.float32)                       # (H, S, S)
        s = s - jnp.max(s, axis=-1, keepdims=True)
        p = jnp.exp(s)
        p = p * pl.reciprocal(jnp.sum(p, axis=-1, keepdims=True), approx=True)
        ctx = jnp.einsum('hqk,hkd->hqd', p.astype(jnp.bfloat16), vh.astype(jnp.bfloat16),
                         preferred_element_type=jnp.float32)                     # (H, S, D)
        attn = jnp.einsum('hqd,hed->hqe', ctx.astype(jnp.bfloat16), wo_ref[l],
                          preferred_element_type=jnp.float32)                    # (H, S, E)
        attn = jnp.sum(attn, axis=0) + bo_ref[l]                                 # (S, E)

        # ---- residual + LN1, feed-forward + residual + LN2 (f32) ----
        y = _layer_norm(x + attn, ln1w_ref[l], ln1b_ref[l])
        yb = y.astype(jnp.bfloat16)
        h1 = jnp.maximum(
            jnp.dot(yb, w1_ref[l], preferred_element_type=jnp.float32) + b1_ref[l], 0.0)
        h2 = jnp.dot(h1.astype(jnp.bfloat16), w2_ref[l],
                     preferred_element_type=jnp.float32) + b2_ref[l]
        return _layer_norm(y + h2, ln2w_ref[l], ln2b_ref[l])

    x = jax.lax.fori_loop(0, L, layer, x0, unroll=True)

    # ---- final linear, lane-dense padded to VPAD=128 ----
    logits = jnp.dot(x.astype(jnp.bfloat16), wf_ref[...],
                     preferred_element_type=jnp.float32) + bf_ref[...]
    o_ref[...] = logits.astype(o_ref.dtype)


# --------------------------- parameter packing -----------------------------------
def pack_params(layer_params, wf, bf):
    """Per-head reshape of QKV/out-proj weights (heads -> leading axis), fold 1/sqrt(D) into Q,
    cast matmul weights to bf16, stack per-layer params along L, pad vocab to 128 lanes."""
    scale = 1.0 / (HEAD_DIM ** 0.5)

    def per_layer(lp):
        wq, wk, wv = jnp.split(lp["wqkv"], 3, axis=1)            # each (E_in, E_out)
        bq, bk, bv = jnp.split(lp["bqkv"][0], 3)                 # each (E,)
        # (E_in, E_out) -> (H, D, E_in): output axis splits head-major into (H, D)
        to_hde = lambda w: w.reshape(EMBED, HEADS, HEAD_DIM).transpose(1, 2, 0)
        wq_h = to_hde(wq) * scale
        wk_h = to_hde(wk)
        wv_h = to_hde(wv)
        bq_h = (bq * scale).reshape(HEADS, 1, HEAD_DIM)
        bk_h = bk.reshape(HEADS, 1, HEAD_DIM)
        bv_h = bv.reshape(HEADS, 1, HEAD_DIM)
        # out-proj (E_in, E_out) with E_in = concat(heads) -> (H, E_out, D)
        wo_h = lp["wo"].reshape(HEADS, HEAD_DIM, EMBED).transpose(0, 2, 1)
        return wq_h, wk_h, wv_h, bq_h, bk_h, bv_h, wo_h

    parts = [per_layer(lp) for lp in layer_params]
    stk = lambda i: jnp.stack([p[i] for p in parts], axis=0)
    st = lambda k: jnp.stack([lp[k] for lp in layer_params], axis=0)
    bf16 = jnp.bfloat16

    wq = stk(0).astype(bf16); wk = stk(1).astype(bf16); wv = stk(2).astype(bf16)
    bq, bk, bv = stk(3), stk(4), stk(5)
    wo = stk(6).astype(bf16)
    wf_pad = jnp.zeros((EMBED, VPAD), jnp.float32).at[:, :VOCAB].set(wf).astype(bf16)
    bf_pad = jnp.zeros((1, VPAD), jnp.float32).at[:, :VOCAB].set(bf)

    return (wq, wk, wv, bq, bk, bv,
            wo, st("bo"),
            st("w1").astype(bf16), st("b1"), st("w2").astype(bf16), st("b2"),
            st("ln1w"), st("ln1b"), st("ln2w"), st("ln2b"),
            wf_pad, bf_pad)


# --------------------------- wrapper -------------------------------------------
@jax.jit
def ecg_bert_forward(x_sbe, packed):
    """x_sbe: (S, B, E) (PyTorch batch_first=False) -> (S, B, VOCAB)."""
    S, B, E = x_sbe.shape
    L = packed[0].shape[0]
    x_bse = jnp.transpose(x_sbe, (1, 0, 2))                # (B, S, E): contiguous per-batch slabs

    flops = int(B * L * (6 * S * E * E            # QKV projections
                         + 4 * HEADS * S * S * HEAD_DIM    # scores + ctx
                         + 2 * S * E * E                   # out projection
                         + 4 * S * E * FFN)                # feed-forward
                + B * 2 * S * E * VPAD)                    # final linear
    transcendentals = int(B * L * HEADS * S * S)           # softmax exps
    bytes_accessed = int(x_bse.size * x_bse.dtype.itemsize
                         + sum(p.size * p.dtype.itemsize for p in packed)
                         + B * S * VPAD * 4)

    in_specs = [pl.BlockSpec((None, S, E), lambda b: (b, 0, 0),
                             memory_space=pltpu.MemorySpace.VMEM)]
    for p in packed:   # full-array weight blocks, resident in VMEM, constant across the grid
        in_specs.append(pl.BlockSpec(p.shape, lambda b, z=(0,) * p.ndim: z,
                                     memory_space=pltpu.MemorySpace.VMEM))

    out_pad = pl.pallas_call(
        ecg_bert_kernel,
        out_shape=jax.ShapeDtypeStruct((B, S, VPAD), x_sbe.dtype),
        grid=(B,),
        in_specs=in_specs,
        out_specs=pl.BlockSpec((None, S, VPAD), lambda b: (b, 0, 0),
                               memory_space=pltpu.MemorySpace.VMEM),
        compiler_params=pltpu.CompilerParams(
            dimension_semantics=("parallel",),
            vmem_limit_bytes=32 * 1024 * 1024),
        cost_estimate=pl.CostEstimate(flops=flops, transcendentals=transcendentals,
                                      bytes_accessed=bytes_accessed),
    )(x_bse, *packed)
    return jnp.transpose(out_pad[:, :, :VOCAB], (1, 0, 2))


# --------------------------- parameter init ------------------------------------
def init_params(key):
    layer_params = []
    for _ in range(NUM_LAYERS):
        key, *ks = jax.random.split(key, 7)
        lp = {
            # stored pre-transposed for x @ W style matmuls
            "wqkv": jax.random.normal(ks[0], (EMBED, 3 * EMBED), jnp.float32) * 0.05,
            "bqkv": jax.random.normal(ks[1], (1, 3 * EMBED), jnp.float32) * 0.02,
            "wo":   jax.random.normal(ks[2], (EMBED, EMBED), jnp.float32) * 0.05,
            "bo":   jnp.zeros((1, EMBED), jnp.float32),
            "w1":   jax.random.normal(ks[3], (EMBED, FFN), jnp.float32) * 0.05,
            "b1":   jax.random.normal(ks[4], (1, FFN), jnp.float32) * 0.02,
            "w2":   jax.random.normal(ks[5], (FFN, EMBED), jnp.float32) * 0.05,
            "b2":   jnp.zeros((1, EMBED), jnp.float32),
            "ln1w": jnp.ones((1, EMBED), jnp.float32),
            "ln1b": jnp.zeros((1, EMBED), jnp.float32),
            "ln2w": jnp.ones((1, EMBED), jnp.float32),
            "ln2b": jnp.zeros((1, EMBED), jnp.float32),
        }
        layer_params.append(lp)
    key, k1, k2 = jax.random.split(key, 3)
    wf = jax.random.normal(k1, (EMBED, VOCAB), jnp.float32) * 0.05
    bf = jax.random.normal(k2, (1, VOCAB), jnp.float32) * 0.02
    return layer_params, wf, bf


# --------------------------- pure-JAX f32 reference ------------------------------
def ref_layer(x, lp):  # x: (B, S, E)
    B, S, _ = x.shape
    qkv = x @ lp["wqkv"] + lp["bqkv"]
    q, k, v = jnp.split(qkv, 3, axis=-1)
    to_heads = lambda t: t.reshape(B, S, HEADS, HEAD_DIM).transpose(0, 2, 1, 3)
    qh, kh, vh = to_heads(q), to_heads(k), to_heads(v)
    s = jnp.einsum('bhsd,bhtd->bhst', qh, kh) / (HEAD_DIM ** 0.5)
    p = jax.nn.softmax(s, axis=-1)
    ctx = jnp.einsum('bhst,bhtd->bhsd', p, vh).transpose(0, 2, 1, 3).reshape(B, S, EMBED)
    attn = ctx @ lp["wo"] + lp["bo"]
    y = _layer_norm(x + attn, lp["ln1w"], lp["ln1b"])
    h = jax.nn.relu(y @ lp["w1"] + lp["b1"])
    return _layer_norm(y + h @ lp["w2"] + lp["b2"], lp["ln2w"], lp["ln2b"])


def ref_forward(x_sbe, layer_params, wf, bf):
    x = jnp.transpose(x_sbe, (1, 0, 2))
    for lp in layer_params:
        x = ref_layer(x, lp)
    return jnp.transpose(x @ wf + bf, (1, 0, 2))


# ------------------------------- main -------------------------------------------
if __name__ == "__main__":
    SEQ, BATCH = 8, 2
    key = jax.random.PRNGKey(0)
    key, kx = jax.random.split(key)
    x = jax.random.normal(kx, (SEQ, BATCH, EMBED), jnp.float32)   # (S, B, E)

    layer_params, wf, bf = init_params(key)
    packed = pack_params(layer_params, wf, bf)

    out = jax.block_until_ready(ecg_bert_forward(x, packed))
    assert out.shape == (SEQ, BATCH, VOCAB), out.shape

    ref = jax.block_until_ready(ref_forward(x, layer_params, wf, bf))
    # Tolerance reflects bf16 matmul operands (MXU-native) with f32 accumulation/LN/softmax,
    # plus the EUP approximate reciprocal in the softmax denominator; reference is pure f32.
    err = float(jnp.max(jnp.abs(out - ref)))
    assert jnp.allclose(out, ref, atol=5e-2, rtol=5e-2), err

    print("KERNEL_OK")
</pallas_src>

<mosaic_0001>
module attributes {stable_mosaic.version = 11 : i64} {
  func.func @ecg_bert_kernel(%arg0: i32, %arg1: memref<1x8x64xf32, #tpu.memory_space<vmem>>, %arg2: memref<2x4x16x64xbf16, #tpu.memory_space<vmem>>, %arg3: memref<2x4x16x64xbf16, #tpu.memory_space<vmem>>, %arg4: memref<2x4x16x64xbf16, #tpu.memory_space<vmem>>, %arg5: memref<2x4x1x16xf32, #tpu.memory_space<vmem>>, %arg6: memref<2x4x1x16xf32, #tpu.memory_space<vmem>>, %arg7: memref<2x4x1x16xf32, #tpu.memory_space<vmem>>, %arg8: memref<2x4x64x16xbf16, #tpu.memory_space<vmem>>, %arg9: memref<2x1x64xf32, #tpu.memory_space<vmem>>, %arg10: memref<2x64x512xbf16, #tpu.memory_space<vmem>>, %arg11: memref<2x1x512xf32, #tpu.memory_space<vmem>>, %arg12: memref<2x512x64xbf16, #tpu.memory_space<vmem>>, %arg13: memref<2x1x64xf32, #tpu.memory_space<vmem>>, %arg14: memref<2x1x64xf32, #tpu.memory_space<vmem>>, %arg15: memref<2x1x64xf32, #tpu.memory_space<vmem>>, %arg16: memref<2x1x64xf32, #tpu.memory_space<vmem>>, %arg17: memref<2x1x64xf32, #tpu.memory_space<vmem>>, %arg18: memref<64x128xbf16, #tpu.memory_space<vmem>>, %arg19: memref<1x128xf32, #tpu.memory_space<vmem>>, %arg20: memref<1x8x128xf32, #tpu.memory_space<vmem>>) attributes {dimension_semantics = [#tpu.dimension_semantics<parallel>], iteration_bounds = array<i64: 2>, scalar_prefetch = 0 : i64, scratch_operands = 0 : i64, tpu.core_type = #tpu.core_type<tc>, window_params = [{transform_indices = @transform_0, window_bounds = array<i64: 1, 8, 64>}, {pipeline_mode = #tpu.pipeline_mode<synchronous>, transform_indices = @transform_1, window_bounds = array<i64: 2, 4, 16, 64>}, {pipeline_mode = #tpu.pipeline_mode<synchronous>, transform_indices = @transform_2, window_bounds = array<i64: 2, 4, 16, 64>}, {pipeline_mode = #tpu.pipeline_mode<synchronous>, transform_indices = @transform_3, window_bounds = array<i64: 2, 4, 16, 64>}, {pipeline_mode = #tpu.pipeline_mode<synchronous>, transform_indices = @transform_4, window_bounds = array<i64: 2, 4, 1, 16>}, {pipeline_mode = #tpu.pipeline_mode<synchronous>, transform_indices = @transform_5, window_bounds = array<i64: 2, 4, 1, 16>}, {pipeline_mode = #tpu.pipeline_mode<synchronous>, transform_indices = @transform_6, window_bounds = array<i64: 2, 4, 1, 16>}, {pipeline_mode = #tpu.pipeline_mode<synchronous>, transform_indices = @transform_7, window_bounds = array<i64: 2, 4, 64, 16>}, {pipeline_mode = #tpu.pipeline_mode<synchronous>, transform_indices = @transform_8, window_bounds = array<i64: 2, 1, 64>}, {pipeline_mode = #tpu.pipeline_mode<synchronous>, transform_indices = @transform_9, window_bounds = array<i64: 2, 64, 512>}, {pipeline_mode = #tpu.pipeline_mode<synchronous>, transform_indices = @transform_10, window_bounds = array<i64: 2, 1, 512>}, {pipeline_mode = #tpu.pipeline_mode<synchronous>, transform_indices = @transform_11, window_bounds = array<i64: 2, 512, 64>}, {pipeline_mode = #tpu.pipeline_mode<synchronous>, transform_indices = @transform_12, window_bounds = array<i64: 2, 1, 64>}, {pipeline_mode = #tpu.pipeline_mode<synchronous>, transform_indices = @transform_13, window_bounds = array<i64: 2, 1, 64>}, {pipeline_mode = #tpu.pipeline_mode<synchronous>, transform_indices = @transform_14, window_bounds = array<i64: 2, 1, 64>}, {pipeline_mode = #tpu.pipeline_mode<synchronous>, transform_indices = @transform_15, window_bounds = array<i64: 2, 1, 64>}, {pipeline_mode = #tpu.pipeline_mode<synchronous>, transform_indices = @transform_16, window_bounds = array<i64: 2, 1, 64>}, {pipeline_mode = #tpu.pipeline_mode<synchronous>, transform_indices = @transform_17, window_bounds = array<i64: 64, 128>}, {pipeline_mode = #tpu.pipeline_mode<synchronous>, transform_indices = @transform_18, window_bounds = array<i64: 1, 128>}, {transform_indices = @transform_19, window_bounds = array<i64: 1, 8, 128>}]} {
    %c0 = arith.constant 0 : index
    %c0_0 = arith.constant 0 : index
    %c0_1 = arith.constant 0 : index
    %0 = vector.load %arg1[%c0, %c0_0, %c0_1] : memref<1x8x64xf32, #tpu.memory_space<vmem>>, vector<1x8x64xf32>
    %1 = vector.shape_cast %0 : vector<1x8x64xf32> to vector<8x64xf32>
    %c0_i32 = arith.constant 0 : i32
    %2 = arith.truncf %1 : vector<8x64xf32> to vector<8x64xbf16>
    %3 = vector.shape_cast %2 : vector<8x64xbf16> to vector<1x8x64xbf16>
    %4 = vector.shape_cast %3 : vector<1x8x64xbf16> to vector<1x8x64xbf16>
    %5 = vector.broadcast %4 : vector<1x8x64xbf16> to vector<4x8x64xbf16>
    %6 = arith.index_cast %c0_i32 : i32 to index
    %c0_2 = arith.constant 0 : index
    %c0_3 = arith.constant 0 : index
    %c0_4 = arith.constant 0 : index
    %7 = vector.load %arg2[%6, %c0_2, %c0_3, %c0_4] : memref<2x4x16x64xbf16, #tpu.memory_space<vmem>>, vector<1x4x16x64xbf16>
    %8 = vector.shape_cast %7 : vector<1x4x16x64xbf16> to vector<4x16x64xbf16>
    "tpu.trace_start"() <{level = 10 : i32, message = "hte,hde->htd"}> : () -> ()
    %cst = arith.constant dense<0.000000e+00> : vector<4x8x16xf32>
    %9 = tpu.matmul %5, %8, %cst {dimension_numbers = #tpu.dot_dimension_numbers<[2], [2], [1], [1], [0, 0, 0, 1, 1, 1], [0], [0]>} : vector<4x8x64xbf16>, vector<4x16x64xbf16>, vector<4x8x16xf32> -> vector<4x8x16xf32>
    "tpu.trace_stop"() : () -> ()
    %10 = arith.index_cast %c0_i32 : i32 to index
    %c0_5 = arith.constant 0 : index
    %c0_6 = arith.constant 0 : index
    %c0_7 = arith.constant 0 : index
    %11 = vector.load %arg5[%10, %c0_5, %c0_6, %c0_7] : memref<2x4x1x16xf32, #tpu.memory_space<vmem>>, vector<1x4x1x16xf32>
    %12 = vector.shape_cast %11 : vector<1x4x1x16xf32> to vector<4x1x16xf32>
    %13 = vector.broadcast %12 : vector<4x1x16xf32> to vector<4x8x16xf32>
    %14 = arith.addf %9, %13 : vector<4x8x16xf32>
    %15 = arith.index_cast %c0_i32 : i32 to index
    %c0_8 = arith.constant 0 : index
    %c0_9 = arith.constant 0 : index
    %c0_10 = arith.constant 0 : index
    %16 = vector.load %arg3[%15, %c0_8, %c0_9, %c0_10] : memref<2x4x16x64xbf16, #tpu.memory_space<vmem>>, vector<1x4x16x64xbf16>
    %17 = vector.shape_cast %16 : vector<1x4x16x64xbf16> to vector<4x16x64xbf16>
    "tpu.trace_start"() <{level = 10 : i32, message = "hte,hde->htd"}> : () -> ()
    %cst_11 = arith.constant dense<0.000000e+00> : vector<4x8x16xf32>
    %18 = tpu.matmul %5, %17, %cst_11 {dimension_numbers = #tpu.dot_dimension_numbers<[2], [2], [1], [1], [0, 0, 0, 1, 1, 1], [0], [0]>} : vector<4x8x64xbf16>, vector<4x16x64xbf16>, vector<4x8x16xf32> -> vector<4x8x16xf32>
    "tpu.trace_stop"() : () -> ()
    %19 = arith.index_cast %c0_i32 : i32 to index
    %c0_12 = arith.constant 0 : index
    %c0_13 = arith.constant 0 : index
    %c0_14 = arith.constant 0 : index
    %20 = vector.load %arg6[%19, %c0_12, %c0_13, %c0_14] : memref<2x4x1x16xf32, #tpu.memory_space<vmem>>, vector<1x4x1x16xf32>
    %21 = vector.shape_cast %20 : vector<1x4x1x16xf32> to vector<4x1x16xf32>
    %22 = vector.broadcast %21 : vector<4x1x16xf32> to vector<4x8x16xf32>
    %23 = arith.addf %18, %22 : vector<4x8x16xf32>
    %24 = arith.index_cast %c0_i32 : i32 to index
    %c0_15 = arith.constant 0 : index
    %c0_16 = arith.constant 0 : index
    %c0_17 = arith.constant 0 : index
    %25 = vector.load %arg4[%24, %c0_15, %c0_16, %c0_17] : memref<2x4x16x64xbf16, #tpu.memory_space<vmem>>, vector<1x4x16x64xbf16>
    %26 = vector.shape_cast %25 : vector<1x4x16x64xbf16> to vector<4x16x64xbf16>
    "tpu.trace_start"() <{level = 10 : i32, message = "hte,hde->htd"}> : () -> ()
    %cst_18 = arith.constant dense<0.000000e+00> : vector<4x8x16xf32>
    %27 = tpu.matmul %5, %26, %cst_18 {dimension_numbers = #tpu.dot_dimension_numbers<[2], [2], [1], [1], [0, 0, 0, 1, 1, 1], [0], [0]>} : vector<4x8x64xbf16>, vector<4x16x64xbf16>, vector<4x8x16xf32> -> vector<4x8x16xf32>
    "tpu.trace_stop"() : () -> ()
    %28 = arith.index_cast %c0_i32 : i32 to index
    %c0_19 = arith.constant 0 : index
    %c0_20 = arith.constant 0 : index
    %c0_21 = arith.constant 0 : index
    %29 = vector.load %arg7[%28, %c0_19, %c0_20, %c0_21] : memref<2x4x1x16xf32, #tpu.memory_space<vmem>>, vector<1x4x1x16xf32>
    %30 = vector.shape_cast %29 : vector<1x4x1x16xf32> to vector<4x1x16xf32>
    %31 = vector.broadcast %30 : vector<4x1x16xf32> to vector<4x8x16xf32>
    %32 = arith.addf %27, %31 : vector<4x8x16xf32>
    %33 = arith.truncf %14 : vector<4x8x16xf32> to vector<4x8x16xbf16>
    %34 = arith.truncf %23 : vector<4x8x16xf32> to vector<4x8x16xbf16>
    "tpu.trace_start"() <{level = 10 : i32, message = "hqd,hkd->hqk"}> : () -> ()
    %cst_22 = arith.constant dense<0.000000e+00> : vector<4x8x8xf32>
    %35 = tpu.matmul %33, %34, %cst_22 {dimension_numbers = #tpu.dot_dimension_numbers<[2], [2], [1], [1], [0, 0, 0, 1, 1, 1], [0], [0]>} : vector<4x8x16xbf16>, vector<4x8x16xbf16>, vector<4x8x8xf32> -> vector<4x8x8xf32>
    "tpu.trace_stop"() : () -> ()
    %cst_23 = arith.constant dense<0xFF800000> : vector<4x8xf32>
    %36 = vector.multi_reduction <maximumf>, %35, %cst_23 [2] : vector<4x8x8xf32> to vector<4x8xf32>
    %37 = vector.shape_cast %36 : vector<4x8xf32> to vector<4x8x1xf32>
    %38 = vector.broadcast %37 : vector<4x8x1xf32> to vector<4x8x8xf32>
    %39 = arith.subf %35, %38 : vector<4x8x8xf32>
    %40 = math.exp %39 : vector<4x8x8xf32>
    %cst_24 = arith.constant dense<0.000000e+00> : vector<4x8xf32>
    %41 = vector.multi_reduction <add>, %40, %cst_24 [2] : vector<4x8x8xf32> to vector<4x8xf32>
    %42 = vector.shape_cast %41 : vector<4x8xf32> to vector<4x8x1xf32>
    %43 = tpu.reciprocal %42 {approx = true} : vector<4x8x1xf32> -> vector<4x8x1xf32>
    %44 = vector.broadcast %43 : vector<4x8x1xf32> to vector<4x8x8xf32>
    %45 = arith.mulf %40, %44 : vector<4x8x8xf32>
    %46 = arith.truncf %45 : vector<4x8x8xf32> to vector<4x8x8xbf16>
    %47 = arith.truncf %32 : vector<4x8x16xf32> to vector<4x8x16xbf16>
    "tpu.trace_start"() <{level = 10 : i32, message = "hqk,hkd->hqd"}> : () -> ()
    %cst_25 = arith.constant dense<0.000000e+00> : vector<4x8x16xf32>
    %48 = tpu.matmul %46, %47, %cst_25 {dimension_numbers = #tpu.dot_dimension_numbers<[2], [1], [1], [2], [0, 0, 0, 1, 1, 2], [0], [0]>} : vector<4x8x8xbf16>, vector<4x8x16xbf16>, vector<4x8x16xf32> -> vector<4x8x16xf32>
    "tpu.trace_stop"() : () -> ()
    %49 = arith.truncf %48 : vector<4x8x16xf32> to vector<4x8x16xbf16>
    %50 = arith.index_cast %c0_i32 : i32 to index
    %c0_26 = arith.constant 0 : index
    %c0_27 = arith.constant 0 : index
    %c0_28 = arith.constant 0 : index
    %51 = vector.load %arg8[%50, %c0_26, %c0_27, %c0_28] : memref<2x4x64x16xbf16, #tpu.memory_space<vmem>>, vector<1x4x64x16xbf16>
    %52 = vector.shape_cast %51 : vector<1x4x64x16xbf16> to vector<4x64x16xbf16>
    "tpu.trace_start"() <{level = 10 : i32, message = "hqd,hed->hqe"}> : () -> ()
    %cst_29 = arith.constant dense<0.000000e+00> : vector<4x8x64xf32>
    %53 = tpu.matmul %49, %52, %cst_29 {dimension_numbers = #tpu.dot_dimension_numbers<[2], [2], [1], [1], [0, 0, 0, 1, 1, 1], [0], [0]>} : vector<4x8x16xbf16>, vector<4x64x16xbf16>, vector<4x8x64xf32> -> vector<4x8x64xf32>
    "tpu.trace_stop"() : () -> ()
    %cst_30 = arith.constant dense<0.000000e+00> : vector<8x64xf32>
    %54 = vector.multi_reduction <add>, %53, %cst_30 [0] : vector<4x8x64xf32> to vector<8x64xf32>
    %55 = arith.index_cast %c0_i32 : i32 to index
    %c0_31 = arith.constant 0 : index
    %c0_32 = arith.constant 0 : index
    %56 = vector.load %arg9[%55, %c0_31, %c0_32] : memref<2x1x64xf32, #tpu.memory_space<vmem>>, vector<1x1x64xf32>
    %57 = vector.shape_cast %56 : vector<1x1x64xf32> to vector<1x64xf32>
    %58 = vector.broadcast %57 : vector<1x64xf32> to vector<8x64xf32>
    %59 = arith.addf %54, %58 : vector<8x64xf32>
    %60 = arith.addf %1, %59 : vector<8x64xf32>
    %61 = arith.index_cast %c0_i32 : i32 to index
    %c0_33 = arith.constant 0 : index
    %c0_34 = arith.constant 0 : index
    %62 = vector.load %arg14[%61, %c0_33, %c0_34] : memref<2x1x64xf32, #tpu.memory_space<vmem>>, vector<1x1x64xf32>
    %63 = vector.shape_cast %62 : vector<1x1x64xf32> to vector<1x64xf32>
    %64 = arith.index_cast %c0_i32 : i32 to index
    %c0_35 = arith.constant 0 : index
    %c0_36 = arith.constant 0 : index
    %65 = vector.load %arg15[%64, %c0_35, %c0_36] : memref<2x1x64xf32, #tpu.memory_space<vmem>>, vector<1x1x64xf32>
    %66 = vector.shape_cast %65 : vector<1x1x64xf32> to vector<1x64xf32>
    %cst_37 = arith.constant dense<0.000000e+00> : vector<8xf32>
    %67 = vector.multi_reduction <add>, %60, %cst_37 [1] : vector<8x64xf32> to vector<8xf32>
    %68 = vector.shape_cast %67 : vector<8xf32> to vector<8x1xf32>
    %cst_38 = arith.constant 6.400000e+01 : f32
    %69 = vector.broadcast %cst_38 : f32 to vector<8x1xf32>
    %70 = arith.divf %68, %69 : vector<8x1xf32>
    %71 = vector.broadcast %70 : vector<8x1xf32> to vector<8x64xf32>
    %72 = arith.subf %60, %71 : vector<8x64xf32>
    %73 = arith.mulf %72, %72 : vector<8x64xf32>
    %cst_39 = arith.constant dense<0.000000e+00> : vector<8xf32>
    %74 = vector.multi_reduction <add>, %73, %cst_39 [1] : vector<8x64xf32> to vector<8xf32>
    %75 = vector.shape_cast %74 : vector<8xf32> to vector<8x1xf32>
    %cst_40 = arith.constant 6.400000e+01 : f32
    %76 = vector.broadcast %cst_40 : f32 to vector<8x1xf32>
    %77 = arith.divf %75, %76 : vector<8x1xf32>
    %78 = vector.broadcast %70 : vector<8x1xf32> to vector<8x64xf32>
    %79 = arith.subf %60, %78 : vector<8x64xf32>
    %cst_41 = arith.constant 9.99999974E-6 : f32
    %80 = vector.broadcast %cst_41 : f32 to vector<8x1xf32>
    %81 = arith.addf %77, %80 : vector<8x1xf32>
    %82 = math.rsqrt %81 : vector<8x1xf32>
    %83 = vector.broadcast %82 : vector<8x1xf32> to vector<8x64xf32>
    %84 = arith.mulf %79, %83 : vector<8x64xf32>
    %85 = vector.broadcast %63 : vector<1x64xf32> to vector<8x64xf32>
    %86 = arith.mulf %84, %85 : vector<8x64xf32>
    %87 = vector.broadcast %66 : vector<1x64xf32> to vector<8x64xf32>
    %88 = arith.addf %86, %87 : vector<8x64xf32>
    %89 = arith.truncf %88 : vector<8x64xf32> to vector<8x64xbf16>
    %90 = arith.index_cast %c0_i32 : i32 to index
    %c0_42 = arith.constant 0 : index
    %c0_43 = arith.constant 0 : index
    %91 = vector.load %arg10[%90, %c0_42, %c0_43] : memref<2x64x512xbf16, #tpu.memory_space<vmem>>, vector<1x64x512xbf16>
    %92 = vector.shape_cast %91 : vector<1x64x512xbf16> to vector<64x512xbf16>
    %cst_44 = arith.constant dense<0.000000e+00> : vector<8x512xf32>
    %93 = tpu.matmul %89, %92, %cst_44 {dimension_numbers = #tpu.dot_dimension_numbers<[1], [0], [0], [1], [0, 0, 1, 1], [], []>} : vector<8x64xbf16>, vector<64x512xbf16>, vector<8x512xf32> -> vector<8x512xf32>
    %94 = arith.index_cast %c0_i32 : i32 to index
    %c0_45 = arith.constant 0 : index
    %c0_46 = arith.constant 0 : index
    %95 = vector.load %arg11[%94, %c0_45, %c0_46] : memref<2x1x512xf32, #tpu.memory_space<vmem>>, vector<1x1x512xf32>
    %96 = vector.shape_cast %95 : vector<1x1x512xf32> to vector<1x512xf32>
    %97 = vector.broadcast %96 : vector<1x512xf32> to vector<8x512xf32>
    %98 = arith.addf %93, %97 : vector<8x512xf32>
    %cst_47 = arith.constant 0.000000e+00 : f32
    %99 = vector.broadcast %cst_47 : f32 to vector<8x512xf32>
    %100 = arith.maximumf %98, %99 : vector<8x512xf32>
    %101 = arith.truncf %100 : vector<8x512xf32> to vector<8x512xbf16>
    %102 = arith.index_cast %c0_i32 : i32 to index
    %c0_48 = arith.constant 0 : index
    %c0_49 = arith.constant 0 : index
    %103 = vector.load %arg12[%102, %c0_48, %c0_49] : memref<2x512x64xbf16, #tpu.memory_space<vmem>>, vector<1x512x64xbf16>
    %104 = vector.shape_cast %103 : vector<1x512x64xbf16> to vector<512x64xbf16>
    %cst_50 = arith.constant dense<0.000000e+00> : vector<8x64xf32>
    %105 = tpu.matmul %101, %104, %cst_50 {dimension_numbers = #tpu.dot_dimension_numbers<[1], [0], [0], [1], [0, 0, 1, 1], [], []>} : vector<8x512xbf16>, vector<512x64xbf16>, vector<8x64xf32> -> vector<8x64xf32>
    %106 = arith.index_cast %c0_i32 : i32 to index
    %c0_51 = arith.constant 0 : index
    %c0_52 = arith.constant 0 : index
    %107 = vector.load %arg13[%106, %c0_51, %c0_52] : memref<2x1x64xf32, #tpu.memory_space<vmem>>, vector<1x1x64xf32>
    %108 = vector.shape_cast %107 : vector<1x1x64xf32> to vector<1x64xf32>
    %109 = vector.broadcast %108 : vector<1x64xf32> to vector<8x64xf32>
    %110 = arith.addf %105, %109 : vector<8x64xf32>
    %111 = arith.addf %88, %110 : vector<8x64xf32>
    %112 = arith.index_cast %c0_i32 : i32 to index
    %c0_53 = arith.constant 0 : index
    %c0_54 = arith.constant 0 : index
    %113 = vector.load %arg16[%112, %c0_53, %c0_54] : memref<2x1x64xf32, #tpu.memory_space<vmem>>, vector<1x1x64xf32>
    %114 = vector.shape_cast %113 : vector<1x1x64xf32> to vector<1x64xf32>
    %115 = arith.index_cast %c0_i32 : i32 to index
    %c0_55 = arith.constant 0 : index
    %c0_56 = arith.constant 0 : index
    %116 = vector.load %arg17[%115, %c0_55, %c0_56] : memref<2x1x64xf32, #tpu.memory_space<vmem>>, vector<1x1x64xf32>
    %117 = vector.shape_cast %116 : vector<1x1x64xf32> to vector<1x64xf32>
    %cst_57 = arith.constant dense<0.000000e+00> : vector<8xf32>
    %118 = vector.multi_reduction <add>, %111, %cst_57 [1] : vector<8x64xf32> to vector<8xf32>
    %119 = vector.shape_cast %118 : vector<8xf32> to vector<8x1xf32>
    %cst_58 = arith.constant 6.400000e+01 : f32
    %120 = vector.broadcast %cst_58 : f32 to vector<8x1xf32>
    %121 = arith.divf %119, %120 : vector<8x1xf32>
    %122 = vector.broadcast %121 : vector<8x1xf32> to vector<8x64xf32>
    %123 = arith.subf %111, %122 : vector<8x64xf32>
    %124 = arith.mulf %123, %123 : vector<8x64xf32>
    %cst_59 = arith.constant dense<0.000000e+00> : vector<8xf32>
    %125 = vector.multi_reduction <add>, %124, %cst_59 [1] : vector<8x64xf32> to vector<8xf32>
    %126 = vector.shape_cast %125 : vector<8xf32> to vector<8x1xf32>
    %cst_60 = arith.constant 6.400000e+01 : f32
    %127 = vector.broadcast %cst_60 : f32 to vector<8x1xf32>
    %128 = arith.divf %126, %127 : vector<8x1xf32>
    %129 = vector.broadcast %121 : vector<8x1xf32> to vector<8x64xf32>
    %130 = arith.subf %111, %129 : vector<8x64xf32>
    %cst_61 = arith.constant 9.99999974E-6 : f32
    %131 = vector.broadcast %cst_61 : f32 to vector<8x1xf32>
    %132 = arith.addf %128, %131 : vector<8x1xf32>
    %133 = math.rsqrt %132 : vector<8x1xf32>
    %134 = vector.broadcast %133 : vector<8x1xf32> to vector<8x64xf32>
    %135 = arith.mulf %130, %134 : vector<8x64xf32>
    %136 = vector.broadcast %114 : vector<1x64xf32> to vector<8x64xf32>
    %137 = arith.mulf %135, %136 : vector<8x64xf32>
    %138 = vector.broadcast %117 : vector<1x64xf32> to vector<8x64xf32>
    %139 = arith.addf %137, %138 : vector<8x64xf32>
    %c1_i32 = arith.constant 1 : i32
    %140 = arith.truncf %139 : vector<8x64xf32> to vector<8x64xbf16>
    %141 = vector.shape_cast %140 : vector<8x64xbf16> to vector<1x8x64xbf16>
    %142 = vector.shape_cast %141 : vector<1x8x64xbf16> to vector<1x8x64xbf16>
    %143 = vector.broadcast %142 : vector<1x8x64xbf16> to vector<4x8x64xbf16>
    %144 = arith.index_cast %c1_i32 : i32 to index
    %c0_62 = arith.constant 0 : index
    %c0_63 = arith.constant 0 : index
    %c0_64 = arith.constant 0 : index
    %145 = vector.load %arg2[%144, %c0_62, %c0_63, %c0_64] : memref<2x4x16x64xbf16, #tpu.memory_space<vmem>>, vector<1x4x16x64xbf16>
    %146 = vector.shape_cast %145 : vector<1x4x16x64xbf16> to vector<4x16x64xbf16>
    "tpu.trace_start"() <{level = 10 : i32, message = "hte,hde->htd"}> : () -> ()
    %cst_65 = arith.constant dense<0.000000e+00> : vector<4x8x16xf32>
    %147 = tpu.matmul %143, %146, %cst_65 {dimension_numbers = #tpu.dot_dimension_numbers<[2], [2], [1], [1], [0, 0, 0, 1, 1, 1], [0], [0]>} : vector<4x8x64xbf16>, vector<4x16x64xbf16>, vector<4x8x16xf32> -> vector<4x8x16xf32>
    "tpu.trace_stop"() : () -> ()
    %148 = arith.index_cast %c1_i32 : i32 to index
    %c0_66 = arith.constant 0 : index
    %c0_67 = arith.constant 0 : index
    %c0_68 = arith.constant 0 : index
    %149 = vector.load %arg5[%148, %c0_66, %c0_67, %c0_68] : memref<2x4x1x16xf32, #tpu.memory_space<vmem>>, vector<1x4x1x16xf32>
    %150 = vector.shape_cast %149 : vector<1x4x1x16xf32> to vector<4x1x16xf32>
    %151 = vector.broadcast %150 : vector<4x1x16xf32> to vector<4x8x16xf32>
    %152 = arith.addf %147, %151 : vector<4x8x16xf32>
    %153 = arith.index_cast %c1_i32 : i32 to index
    %c0_69 = arith.constant 0 : index
    %c0_70 = arith.constant 0 : index
    %c0_71 = arith.constant 0 : index
    %154 = vector.load %arg3[%153, %c0_69, %c0_70, %c0_71] : memref<2x4x16x64xbf16, #tpu.memory_space<vmem>>, vector<1x4x16x64xbf16>
    %155 = vector.shape_cast %154 : vector<1x4x16x64xbf16> to vector<4x16x64xbf16>
    "tpu.trace_start"() <{level = 10 : i32, message = "hte,hde->htd"}> : () -> ()
    %cst_72 = arith.constant dense<0.000000e+00> : vector<4x8x16xf32>
    %156 = tpu.matmul %143, %155, %cst_72 {dimension_numbers = #tpu.dot_dimension_numbers<[2], [2], [1], [1], [0, 0, 0, 1, 1, 1], [0], [0]>} : vector<4x8x64xbf16>, vector<4x16x64xbf16>, vector<4x8x16xf32> -> vector<4x8x16xf32>
    "tpu.trace_stop"() : () -> ()
    %157 = arith.index_cast %c1_i32 : i32 to index
    %c0_73 = arith.constant 0 : index
    %c0_74 = arith.constant 0 : index
    %c0_75 = arith.constant 0 : index
    %158 = vector.load %arg6[%157, %c0_73, %c0_74, %c0_75] : memref<2x4x1x16xf32, #tpu.memory_space<vmem>>, vector<1x4x1x16xf32>
    %159 = vector.shape_cast %158 : vector<1x4x1x16xf32> to vector<4x1x16xf32>
    %160 = vector.broadcast %159 : vector<4x1x16xf32> to vector<4x8x16xf32>
    %161 = arith.addf %156, %160 : vector<4x8x16xf32>
    %162 = arith.index_cast %c1_i32 : i32 to index
    %c0_76 = arith.constant 0 : index
    %c0_77 = arith.constant 0 : index
    %c0_78 = arith.constant 0 : index
    %163 = vector.load %arg4[%162, %c0_76, %c0_77, %c0_78] : memref<2x4x16x64xbf16, #tpu.memory_space<vmem>>, vector<1x4x16x64xbf16>
    %164 = vector.shape_cast %163 : vector<1x4x16x64xbf16> to vector<4x16x64xbf16>
    "tpu.trace_start"() <{level = 10 : i32, message = "hte,hde->htd"}> : () -> ()
    %cst_79 = arith.constant dense<0.000000e+00> : vector<4x8x16xf32>
    %165 = tpu.matmul %143, %164, %cst_79 {dimension_numbers = #tpu.dot_dimension_numbers<[2], [2], [1], [1], [0, 0, 0, 1, 1, 1], [0], [0]>} : vector<4x8x64xbf16>, vector<4x16x64xbf16>, vector<4x8x16xf32> -> vector<4x8x16xf32>
    "tpu.trace_stop"() : () -> ()
    %166 = arith.index_cast %c1_i32 : i32 to index
    %c0_80 = arith.constant 0 : index
    %c0_81 = arith.constant 0 : index
    %c0_82 = arith.constant 0 : index
    %167 = vector.load %arg7[%166, %c0_80, %c0_81, %c0_82] : memref<2x4x1x16xf32, #tpu.memory_space<vmem>>, vector<1x4x1x16xf32>
    %168 = vector.shape_cast %167 : vector<1x4x1x16xf32> to vector<4x1x16xf32>
    %169 = vector.broadcast %168 : vector<4x1x16xf32> to vector<4x8x16xf32>
    %170 = arith.addf %165, %169 : vector<4x8x16xf32>
    %171 = arith.truncf %152 : vector<4x8x16xf32> to vector<4x8x16xbf16>
    %172 = arith.truncf %161 : vector<4x8x16xf32> to vector<4x8x16xbf16>
    "tpu.trace_start"() <{level = 10 : i32, message = "hqd,hkd->hqk"}> : () -> ()
    %cst_83 = arith.constant dense<0.000000e+00> : vector<4x8x8xf32>
    %173 = tpu.matmul %171, %172, %cst_83 {dimension_numbers = #tpu.dot_dimension_numbers<[2], [2], [1], [1], [0, 0, 0, 1, 1, 1], [0], [0]>} : vector<4x8x16xbf16>, vector<4x8x16xbf16>, vector<4x8x8xf32> -> vector<4x8x8xf32>
    "tpu.trace_stop"() : () -> ()
    %cst_84 = arith.constant dense<0xFF800000> : vector<4x8xf32>
    %174 = vector.multi_reduction <maximumf>, %173, %cst_84 [2] : vector<4x8x8xf32> to vector<4x8xf32>
    %175 = vector.shape_cast %174 : vector<4x8xf32> to vector<4x8x1xf32>
    %176 = vector.broadcast %175 : vector<4x8x1xf32> to vector<4x8x8xf32>
    %177 = arith.subf %173, %176 : vector<4x8x8xf32>
    %178 = math.exp %177 : vector<4x8x8xf32>
    %cst_85 = arith.constant dense<0.000000e+00> : vector<4x8xf32>
    %179 = vector.multi_reduction <add>, %178, %cst_85 [2] : vector<4x8x8xf32> to vector<4x8xf32>
    %180 = vector.shape_cast %179 : vector<4x8xf32> to vector<4x8x1xf32>
    %181 = tpu.reciprocal %180 {approx = true} : vector<4x8x1xf32> -> vector<4x8x1xf32>
    %182 = vector.broadcast %181 : vector<4x8x1xf32> to vector<4x8x8xf32>
    %183 = arith.mulf %178, %182 : vector<4x8x8xf32>
    %184 = arith.truncf %183 : vector<4x8x8xf32> to vector<4x8x8xbf16>
    %185 = arith.truncf %170 : vector<4x8x16xf32> to vector<4x8x16xbf16>
    "tpu.trace_start"() <{level = 10 : i32, message = "hqk,hkd->hqd"}> : () -> ()
    %cst_86 = arith.constant dense<0.000000e+00> : vector<4x8x16xf32>
    %186 = tpu.matmul %184, %185, %cst_86 {dimension_numbers = #tpu.dot_dimension_numbers<[2], [1], [1], [2], [0, 0, 0, 1, 1, 2], [0], [0]>} : vector<4x8x8xbf16>, vector<4x8x16xbf16>, vector<4x8x16xf32> -> vector<4x8x16xf32>
    "tpu.trace_stop"() : () -> ()
    %187 = arith.truncf %186 : vector<4x8x16xf32> to vector<4x8x16xbf16>
    %188 = arith.index_cast %c1_i32 : i32 to index
    %c0_87 = arith.constant 0 : index
    %c0_88 = arith.constant 0 : index
    %c0_89 = arith.constant 0 : index
    %189 = vector.load %arg8[%188, %c0_87, %c0_88, %c0_89] : memref<2x4x64x16xbf16, #tpu.memory_space<vmem>>, vector<1x4x64x16xbf16>
    %190 = vector.shape_cast %189 : vector<1x4x64x16xbf16> to vector<4x64x16xbf16>
    "tpu.trace_start"() <{level = 10 : i32, message = "hqd,hed->hqe"}> : () -> ()
    %cst_90 = arith.constant dense<0.000000e+00> : vector<4x8x64xf32>
    %191 = tpu.matmul %187, %190, %cst_90 {dimension_numbers = #tpu.dot_dimension_numbers<[2], [2], [1], [1], [0, 0, 0, 1, 1, 1], [0], [0]>} : vector<4x8x16xbf16>, vector<4x64x16xbf16>, vector<4x8x64xf32> -> vector<4x8x64xf32>
    "tpu.trace_stop"() : () -> ()
    %cst_91 = arith.constant dense<0.000000e+00> : vector<8x64xf32>
    %192 = vector.multi_reduction <add>, %191, %cst_91 [0] : vector<4x8x64xf32> to vector<8x64xf32>
    %193 = arith.index_cast %c1_i32 : i32 to index
    %c0_92 = arith.constant 0 : index
    %c0_93 = arith.constant 0 : index
    %194 = vector.load %arg9[%193, %c0_92, %c0_93] : memref<2x1x64xf32, #tpu.memory_space<vmem>>, vector<1x1x64xf32>
    %195 = vector.shape_cast %194 : vector<1x1x64xf32> to vector<1x64xf32>
    %196 = vector.broadcast %195 : vector<1x64xf32> to vector<8x64xf32>
    %197 = arith.addf %192, %196 : vector<8x64xf32>
    %198 = arith.addf %139, %197 : vector<8x64xf32>
    %199 = arith.index_cast %c1_i32 : i32 to index
    %c0_94 = arith.constant 0 : index
    %c0_95 = arith.constant 0 : index
    %200 = vector.load %arg14[%199, %c0_94, %c0_95] : memref<2x1x64xf32, #tpu.memory_space<vmem>>, vector<1x1x64xf32>
    %201 = vector.shape_cast %200 : vector<1x1x64xf32> to vector<1x64xf32>
    %202 = arith.index_cast %c1_i32 : i32 to index
    %c0_96 = arith.constant 0 : index
    %c0_97 = arith.constant 0 : index
    %203 = vector.load %arg15[%202, %c0_96, %c0_97] : memref<2x1x64xf32, #tpu.memory_space<vmem>>, vector<1x1x64xf32>
    %204 = vector.shape_cast %203 : vector<1x1x64xf32> to vector<1x64xf32>
    %cst_98 = arith.constant dense<0.000000e+00> : vector<8xf32>
    %205 = vector.multi_reduction <add>, %198, %cst_98 [1] : vector<8x64xf32> to vector<8xf32>
    %206 = vector.shape_cast %205 : vector<8xf32> to vector<8x1xf32>
    %cst_99 = arith.constant 6.400000e+01 : f32
    %207 = vector.broadcast %cst_99 : f32 to vector<8x1xf32>
    %208 = arith.divf %206, %207 : vector<8x1xf32>
    %209 = vector.broadcast %208 : vector<8x1xf32> to vector<8x64xf32>
    %210 = arith.subf %198, %209 : vector<8x64xf32>
    %211 = arith.mulf %210, %210 : vector<8x64xf32>
    %cst_100 = arith.constant dense<0.000000e+00> : vector<8xf32>
    %212 = vector.multi_reduction <add>, %211, %cst_100 [1] : vector<8x64xf32> to vector<8xf32>
    %213 = vector.shape_cast %212 : vector<8xf32> to vector<8x1xf32>
    %cst_101 = arith.constant 6.400000e+01 : f32
    %214 = vector.broadcast %cst_101 : f32 to vector<8x1xf32>
    %215 = arith.divf %213, %214 : vector<8x1xf32>
    %216 = vector.broadcast %208 : vector<8x1xf32> to vector<8x64xf32>
    %217 = arith.subf %198, %216 : vector<8x64xf32>
    %cst_102 = arith.constant 9.99999974E-6 : f32
    %218 = vector.broadcast %cst_102 : f32 to vector<8x1xf32>
    %219 = arith.addf %215, %218 : vector<8x1xf32>
    %220 = math.rsqrt %219 : vector<8x1xf32>
    %221 = vector.broadcast %220 : vector<8x1xf32> to vector<8x64xf32>
    %222 = arith.mulf %217, %221 : vector<8x64xf32>
    %223 = vector.broadcast %201 : vector<1x64xf32> to vector<8x64xf32>
    %224 = arith.mulf %222, %223 : vector<8x64xf32>
    %225 = vector.broadcast %204 : vector<1x64xf32> to vector<8x64xf32>
    %226 = arith.addf %224, %225 : vector<8x64xf32>
    %227 = arith.truncf %226 : vector<8x64xf32> to vector<8x64xbf16>
    %228 = arith.index_cast %c1_i32 : i32 to index
    %c0_103 = arith.constant 0 : index
    %c0_104 = arith.constant 0 : index
    %229 = vector.load %arg10[%228, %c0_103, %c0_104] : memref<2x64x512xbf16, #tpu.memory_space<vmem>>, vector<1x64x512xbf16>
    %230 = vector.shape_cast %229 : vector<1x64x512xbf16> to vector<64x512xbf16>
    %cst_105 = arith.constant dense<0.000000e+00> : vector<8x512xf32>
    %231 = tpu.matmul %227, %230, %cst_105 {dimension_numbers = #tpu.dot_dimension_numbers<[1], [0], [0], [1], [0, 0, 1, 1], [], []>} : vector<8x64xbf16>, vector<64x512xbf16>, vector<8x512xf32> -> vector<8x512xf32>
    %232 = arith.index_cast %c1_i32 : i32 to index
    %c0_106 = arith.constant 0 : index
    %c0_107 = arith.constant 0 : index
    %233 = vector.load %arg11[%232, %c0_106, %c0_107] : memref<2x1x512xf32, #tpu.memory_space<vmem>>, vector<1x1x512xf32>
    %234 = vector.shape_cast %233 : vector<1x1x512xf32> to vector<1x512xf32>
    %235 = vector.broadcast %234 : vector<1x512xf32> to vector<8x512xf32>
    %236 = arith.addf %231, %235 : vector<8x512xf32>
    %cst_108 = arith.constant 0.000000e+00 : f32
    %237 = vector.broadcast %cst_108 : f32 to vector<8x512xf32>
    %238 = arith.maximumf %236, %237 : vector<8x512xf32>
    %239 = arith.truncf %238 : vector<8x512xf32> to vector<8x512xbf16>
    %240 = arith.index_cast %c1_i32 : i32 to index
    %c0_109 = arith.constant 0 : index
    %c0_110 = arith.constant 0 : index
    %241 = vector.load %arg12[%240, %c0_109, %c0_110] : memref<2x512x64xbf16, #tpu.memory_space<vmem>>, vector<1x512x64xbf16>
    %242 = vector.shape_cast %241 : vector<1x512x64xbf16> to vector<512x64xbf16>
    %cst_111 = arith.constant dense<0.000000e+00> : vector<8x64xf32>
    %243 = tpu.matmul %239, %242, %cst_111 {dimension_numbers = #tpu.dot_dimension_numbers<[1], [0], [0], [1], [0, 0, 1, 1], [], []>} : vector<8x512xbf16>, vector<512x64xbf16>, vector<8x64xf32> -> vector<8x64xf32>
    %244 = arith.index_cast %c1_i32 : i32 to index
    %c0_112 = arith.constant 0 : index
    %c0_113 = arith.constant 0 : index
    %245 = vector.load %arg13[%244, %c0_112, %c0_113] : memref<2x1x64xf32, #tpu.memory_space<vmem>>, vector<1x1x64xf32>
    %246 = vector.shape_cast %245 : vector<1x1x64xf32> to vector<1x64xf32>
    %247 = vector.broadcast %246 : vector<1x64xf32> to vector<8x64xf32>
    %248 = arith.addf %243, %247 : vector<8x64xf32>
    %249 = arith.addf %226, %248 : vector<8x64xf32>
    %250 = arith.index_cast %c1_i32 : i32 to index
    %c0_114 = arith.constant 0 : index
    %c0_115 = arith.constant 0 : index
    %251 = vector.load %arg16[%250, %c0_114, %c0_115] : memref<2x1x64xf32, #tpu.memory_space<vmem>>, vector<1x1x64xf32>
    %252 = vector.shape_cast %251 : vector<1x1x64xf32> to vector<1x64xf32>
    %253 = arith.index_cast %c1_i32 : i32 to index
    %c0_116 = arith.constant 0 : index
    %c0_117 = arith.constant 0 : index
    %254 = vector.load %arg17[%253, %c0_116, %c0_117] : memref<2x1x64xf32, #tpu.memory_space<vmem>>, vector<1x1x64xf32>
    %255 = vector.shape_cast %254 : vector<1x1x64xf32> to vector<1x64xf32>
    %cst_118 = arith.constant dense<0.000000e+00> : vector<8xf32>
    %256 = vector.multi_reduction <add>, %249, %cst_118 [1] : vector<8x64xf32> to vector<8xf32>
    %257 = vector.shape_cast %256 : vector<8xf32> to vector<8x1xf32>
    %cst_119 = arith.constant 6.400000e+01 : f32
    %258 = vector.broadcast %cst_119 : f32 to vector<8x1xf32>
    %259 = arith.divf %257, %258 : vector<8x1xf32>
    %260 = vector.broadcast %259 : vector<8x1xf32> to vector<8x64xf32>
    %261 = arith.subf %249, %260 : vector<8x64xf32>
    %262 = arith.mulf %261, %261 : vector<8x64xf32>
    %cst_120 = arith.constant dense<0.000000e+00> : vector<8xf32>
    %263 = vector.multi_reduction <add>, %262, %cst_120 [1] : vector<8x64xf32> to vector<8xf32>
    %264 = vector.shape_cast %263 : vector<8xf32> to vector<8x1xf32>
    %cst_121 = arith.constant 6.400000e+01 : f32
    %265 = vector.broadcast %cst_121 : f32 to vector<8x1xf32>
    %266 = arith.divf %264, %265 : vector<8x1xf32>
    %267 = vector.broadcast %259 : vector<8x1xf32> to vector<8x64xf32>
    %268 = arith.subf %249, %267 : vector<8x64xf32>
    %cst_122 = arith.constant 9.99999974E-6 : f32
    %269 = vector.broadcast %cst_122 : f32 to vector<8x1xf32>
    %270 = arith.addf %266, %269 : vector<8x1xf32>
    %271 = math.rsqrt %270 : vector<8x1xf32>
    %272 = vector.broadcast %271 : vector<8x1xf32> to vector<8x64xf32>
    %273 = arith.mulf %268, %272 : vector<8x64xf32>
    %274 = vector.broadcast %252 : vector<1x64xf32> to vector<8x64xf32>
    %275 = arith.mulf %273, %274 : vector<8x64xf32>
    %276 = vector.broadcast %255 : vector<1x64xf32> to vector<8x64xf32>
    %277 = arith.addf %275, %276 : vector<8x64xf32>
    %c2_i32 = arith.constant 2 : i32
    %278 = arith.truncf %277 : vector<8x64xf32> to vector<8x64xbf16>
    %c0_123 = arith.constant 0 : index
    %c0_124 = arith.constant 0 : index
    %279 = vector.load %arg18[%c0_123, %c0_124] : memref<64x128xbf16, #tpu.memory_space<vmem>>, vector<64x128xbf16>
    %cst_125 = arith.constant dense<0.000000e+00> : vector<8x128xf32>
    %280 = tpu.matmul %278, %279, %cst_125 {dimension_numbers = #tpu.dot_dimension_numbers<[1], [0], [0], [1], [0, 0, 1, 1], [], []>} : vector<8x64xbf16>, vector<64x128xbf16>, vector<8x128xf32> -> vector<8x128xf32>
    %c0_126 = arith.constant 0 : index
    %c0_127 = arith.constant 0 : index
    %281 = vector.load %arg19[%c0_126, %c0_127] : memref<1x128xf32, #tpu.memory_space<vmem>>, vector<1x128xf32>
    %282 = vector.broadcast %281 : vector<1x128xf32> to vector<8x128xf32>
    %283 = arith.addf %280, %282 : vector<8x128xf32>
    %c0_128 = arith.constant 0 : index
    %c0_129 = arith.constant 0 : index
    %c0_130 = arith.constant 0 : index
    %284 = vector.load %arg20[%c0_128, %c0_129, %c0_130] : memref<1x8x128xf32, #tpu.memory_space<vmem>>, vector<1x8x128xf32>
    %285 = vector.shape_cast %284 : vector<1x8x128xf32> to vector<8x128xf32>
    %286 = vector.shape_cast %283 : vector<8x128xf32> to vector<1x8x128xf32>
    tpu.vector_store %arg20[%c0_128, %c0_129, %c0_130], %286 {strides = array<i32>} : memref<1x8x128xf32, #tpu.memory_space<vmem>>, vector<1x8x128xf32>,
    return
  }
  func.func @transform_0(%arg0: i32) -> (i32, i32, i32) {
    %c0_i32 = arith.constant 0 : i32
    %c0_i32_0 = arith.constant 0 : i32
    %c0_i32_1 = arith.constant 0 : i32
    return %arg0, %c0_i32, %c0_i32_0 : i32, i32, i32
  }
  func.func @transform_1(%arg0: i32) -> (i32, i32, i32, i32) {
    %c0_i32 = arith.constant 0 : i32
    %c0_i32_0 = arith.constant 0 : i32
    %c0_i32_1 = arith.constant 0 : i32
    %c0_i32_2 = arith.constant 0 : i32
    %c0_i32_3 = arith.constant 0 : i32
    return %c0_i32, %c0_i32_0, %c0_i32_1, %c0_i32_2 : i32, i32, i32, i32
  }
  func.func @transform_2(%arg0: i32) -> (i32, i32, i32, i32) {
    %c0_i32 = arith.constant 0 : i32
    %c0_i32_0 = arith.constant 0 : i32
    %c0_i32_1 = arith.constant 0 : i32
    %c0_i32_2 = arith.constant 0 : i32
    %c0_i32_3 = arith.constant 0 : i32
    return %c0_i32, %c0_i32_0, %c0_i32_1, %c0_i32_2 : i32, i32, i32, i32
  }
  func.func @transform_3(%arg0: i32) -> (i32, i32, i32, i32) {
    %c0_i32 = arith.constant 0 : i32
    %c0_i32_0 = arith.constant 0 : i32
    %c0_i32_1 = arith.constant 0 : i32
    %c0_i32_2 = arith.constant 0 : i32
    %c0_i32_3 = arith.constant 0 : i32
    return %c0_i32, %c0_i32_0, %c0_i32_1, %c0_i32_2 : i32, i32, i32, i32
  }
  func.func @transform_4(%arg0: i32) -> (i32, i32, i32, i32) {
    %c0_i32 = arith.constant 0 : i32
    %c0_i32_0 = arith.constant 0 : i32
    %c0_i32_1 = arith.constant 0 : i32
    %c0_i32_2 = arith.constant 0 : i32
    %c0_i32_3 = arith.constant 0 : i32
    return %c0_i32, %c0_i32_0, %c0_i32_1, %c0_i32_2 : i32, i32, i32, i32
  }
  func.func @transform_5(%arg0: i32) -> (i32, i32, i32, i32) {
    %c0_i32 = arith.constant 0 : i32
    %c0_i32_0 = arith.constant 0 : i32
    %c0_i32_1 = arith.constant 0 : i32
    %c0_i32_2 = arith.constant 0 : i32
    %c0_i32_3 = arith.constant 0 : i32
    return %c0_i32, %c0_i32_0, %c0_i32_1, %c0_i32_2 : i32, i32, i32, i32
  }
  func.func @transform_6(%arg0: i32) -> (i32, i32, i32, i32) {
    %c0_i32 = arith.constant 0 : i32
    %c0_i32_0 = arith.constant 0 : i32
    %c0_i32_1 = arith.constant 0 : i32
    %c0_i32_2 = arith.constant 0 : i32
    %c0_i32_3 = arith.constant 0 : i32
    return %c0_i32, %c0_i32_0, %c0_i32_1, %c0_i32_2 : i32, i32, i32, i32
  }
  func.func @transform_7(%arg0: i32) -> (i32, i32, i32, i32) {
    %c0_i32 = arith.constant 0 : i32
    %c0_i32_0 = arith.constant 0 : i32
    %c0_i32_1 = arith.constant 0 : i32
    %c0_i32_2 = arith.constant 0 : i32
    %c0_i32_3 = arith.constant 0 : i32
    return %c0_i32, %c0_i32_0, %c0_i32_1, %c0_i32_2 : i32, i32, i32, i32
  }
  func.func @transform_8(%arg0: i32) -> (i32, i32, i32) {
    %c0_i32 = arith.constant 0 : i32
    %c0_i32_0 = arith.constant 0 : i32
    %c0_i32_1 = arith.constant 0 : i32
    %c0_i32_2 = arith.constant 0 : i32
    return %c0_i32, %c0_i32_0, %c0_i32_1 : i32, i32, i32
  }
  func.func @transform_9(%arg0: i32) -> (i32, i32, i32) {
    %c0_i32 = arith.constant 0 : i32
    %c0_i32_0 = arith.constant 0 : i32
    %c0_i32_1 = arith.constant 0 : i32
    %c0_i32_2 = arith.constant 0 : i32
    return %c0_i32, %c0_i32_0, %c0_i32_1 : i32, i32, i32
  }
  func.func @transform_10(%arg0: i32) -> (i32, i32, i32) {
    %c0_i32 = arith.constant 0 : i32
    %c0_i32_0 = arith.constant 0 : i32
    %c0_i32_1 = arith.constant 0 : i32
    %c0_i32_2 = arith.constant 0 : i32
    return %c0_i32, %c0_i32_0, %c0_i32_1 : i32, i32, i32
  }
  func.func @transform_11(%arg0: i32) -> (i32, i32, i32) {
    %c0_i32 = arith.constant 0 : i32
    %c0_i32_0 = arith.constant 0 : i32
    %c0_i32_1 = arith.constant 0 : i32
    %c0_i32_2 = arith.constant 0 : i32
    return %c0_i32, %c0_i32_0, %c0_i32_1 : i32, i32, i32
  }
  func.func @transform_12(%arg0: i32) -> (i32, i32, i32) {
    %c0_i32 = arith.constant 0 : i32
    %c0_i32_0 = arith.constant 0 : i32
    %c0_i32_1 = arith.constant 0 : i32
    %c0_i32_2 = arith.constant 0 : i32
    return %c0_i32, %c0_i32_0, %c0_i32_1 : i32, i32, i32
  }
  func.func @transform_13(%arg0: i32) -> (i32, i32, i32) {
    %c0_i32 = arith.constant 0 : i32
    %c0_i32_0 = arith.constant 0 : i32
    %c0_i32_1 = arith.constant 0 : i32
    %c0_i32_2 = arith.constant 0 : i32
    return %c0_i32, %c0_i32_0, %c0_i32_1 : i32, i32, i32
  }
  func.func @transform_14(%arg0: i32) -> (i32, i32, i32) {
    %c0_i32 = arith.constant 0 : i32
    %c0_i32_0 = arith.constant 0 : i32
    %c0_i32_1 = arith.constant 0 : i32
    %c0_i32_2 = arith.constant 0 : i32
    return %c0_i32, %c0_i32_0, %c0_i32_1 : i32, i32, i32
  }
  func.func @transform_15(%arg0: i32) -> (i32, i32, i32) {
    %c0_i32 = arith.constant 0 : i32
    %c0_i32_0 = arith.constant 0 : i32
    %c0_i32_1 = arith.constant 0 : i32
    %c0_i32_2 = arith.constant 0 : i32
    return %c0_i32, %c0_i32_0, %c0_i32_1 : i32, i32, i32
  }
  func.func @transform_16(%arg0: i32) -> (i32, i32, i32) {
    %c0_i32 = arith.constant 0 : i32
    %c0_i32_0 = arith.constant 0 : i32
    %c0_i32_1 = arith.constant 0 : i32
    %c0_i32_2 = arith.constant 0 : i32
    return %c0_i32, %c0_i32_0, %c0_i32_1 : i32, i32, i32
  }
  func.func @transform_17(%arg0: i32) -> (i32, i32) {
    %c0_i32 = arith.constant 0 : i32
    %c0_i32_0 = arith.constant 0 : i32
    %c0_i32_1 = arith.constant 0 : i32
    return %c0_i32, %c0_i32_0 : i32, i32
  }
  func.func @transform_18(%arg0: i32) -> (i32, i32) {
    %c0_i32 = arith.constant 0 : i32
    %c0_i32_0 = arith.constant 0 : i32
    %c0_i32_1 = arith.constant 0 : i32
    return %c0_i32, %c0_i32_0 : i32, i32
  }
  func.func @transform_19(%arg0: i32) -> (i32, i32, i32) {
    %c0_i32 = arith.constant 0 : i32
    %c0_i32_0 = arith.constant 0 : i32
    %c0_i32_1 = arith.constant 0 : i32
    return %arg0, %c0_i32, %c0_i32_0 : i32, i32, i32
  }
}

</mosaic_0001>

<llo_original>
// kernel: ecg_bert_forward.1
$region0: #{ecg_bert_forward.1}
  #allocation0 [shape = 'u32[]', space=smem, size = 0x4, offset = 0x4, fixed_abs, tag = 'smem constant byte address 0x4 - core index']
  #allocation1 [shape = 'u32[144,128]{1,0:T(1,128)}', space=vmem, size = 0x12000, scoped, tag = 'internal scratch']
  %s0 = inlined_call_operand.vmem [shape: f32[2,8,64], index: 0, kind: input, shape index: {}]
  %s1 = inlined_call_operand.vmem [shape: bf16[2,4,16,64], index: 1, kind: input, shape index: {}]
  %s2 = inlined_call_operand.vmem [shape: bf16[2,4,16,64], index: 2, kind: input, shape index: {}]
  %s3 = inlined_call_operand.vmem [shape: bf16[2,4,16,64], index: 3, kind: input, shape index: {}]
  %s4 = inlined_call_operand.vmem [shape: f32[2,4,1,16], index: 4, kind: input, shape index: {}]
  %s5 = inlined_call_operand.vmem [shape: f32[2,4,1,16], index: 5, kind: input, shape index: {}]
  %s6 = inlined_call_operand.vmem [shape: f32[2,4,1,16], index: 6, kind: input, shape index: {}]
  %s7 = inlined_call_operand.vmem [shape: bf16[2,4,64,16], index: 7, kind: input, shape index: {}]
  %s8 = inlined_call_operand.vmem [shape: f32[2,1,64], index: 8, kind: input, shape index: {}]
  %s9 = inlined_call_operand.vmem [shape: bf16[2,64,512], index: 9, kind: input, shape index: {}]
  %s10 = inlined_call_operand.vmem [shape: f32[2,1,512], index: 10, kind: input, shape index: {}]
  %s11 = inlined_call_operand.vmem [shape: bf16[2,512,64], index: 11, kind: input, shape index: {}]
  %s12 = inlined_call_operand.vmem [shape: f32[2,1,64], index: 12, kind: input, shape index: {}]
  %s13 = inlined_call_operand.vmem [shape: f32[2,1,64], index: 13, kind: input, shape index: {}]
  %s14 = inlined_call_operand.vmem [shape: f32[2,1,64], index: 14, kind: input, shape index: {}]
  %s15 = inlined_call_operand.vmem [shape: f32[2,1,64], index: 15, kind: input, shape index: {}]
  %s16 = inlined_call_operand.vmem [shape: f32[2,1,64], index: 16, kind: input, shape index: {}]
  %s17 = inlined_call_operand.vmem [shape: bf16[64,128], index: 17, kind: input, shape index: {}]
  %s18 = inlined_call_operand.vmem [shape: f32[1,128], index: 18, kind: input, shape index: {}]
  %s19 = inlined_call_operand.vmem [shape: f32[2,8,128], index: 19, kind: output, shape index: {}]
  %s20 = sld [smem:[#allocation0]]
  $region109: #{ecg_bert_forward.1} parent=0
    _
  %s22 = ssub.s32 1, %s20
  %s23 = scalar_select 0, %s22, %s20
  loop: start=0, step=1, limit=4
  $region2: #{ecg_bert_forward.1} parent=0 // loop_pre_header
    _
  $region3: #{ecg_bert_forward.1} parent=0 // loop_header
    %s25 = sphi 0, %s29
    %p26 = scmp.ge.s32.totalorder %s25, 4
    %s35 = sphi 0, %s37
    %s38 = sphi 0, %s35
    %s39 = sphi 0, %s38
    %s55 = sphi 0, %s39
    %s59 = sphi 0, %s59
    %s61 = sphi 0, %s59
    %s62 = sphi 0, %s61
    %s76 = sphi 0, %s62
    %s80 = sphi 0, %s80
    %s82 = sphi 0, %s80
    %s83 = sphi 0, %s82
    %s97 = sphi 0, %s83
    %s101 = sphi 0, %s101
    %s103 = sphi 0, %s101
    %s104 = sphi 0, %s103
    %s118 = sphi 0, %s104
    %s122 = sphi 0, %s122
    %s124 = sphi 0, %s122
    %s125 = sphi 0, %s124
    %s139 = sphi 0, %s125
    %s143 = sphi 0, %s143
    %s145 = sphi 0, %s143
    %s146 = sphi 0, %s145
    %s160 = sphi 0, %s146
    %s164 = sphi 0, %s164
    %s166 = sphi 0, %s164
    %s167 = sphi 0, %s166
    %s181 = sphi 0, %s167
    %s185 = sphi 0, %s185
    %s187 = sphi 0, %s185
    %s188 = sphi 0, %s187
    %s202 = sphi 0, %s188
    %s206 = sphi 0, %s206
    %s208 = sphi 0, %s206
    %s209 = sphi 0, %s208
    %s223 = sphi 0, %s209
    %s227 = sphi 0, %s227
    %s229 = sphi 0, %s227
    %s230 = sphi 0, %s229
    %s244 = sphi 0, %s230
    %s248 = sphi 0, %s248
    %s250 = sphi 0, %s248
    %s251 = sphi 0, %s250
    %s265 = sphi 0, %s251
    %s269 = sphi 0, %s269
    %s271 = sphi 0, %s269
    %s272 = sphi 0, %s271
    %s286 = sphi 0, %s272
    %s290 = sphi 0, %s290
    %s292 = sphi 0, %s290
    %s293 = sphi 0, %s292
    %s307 = sphi 0, %s293
    %s311 = sphi 0, %s311
    %s313 = sphi 0, %s311
    %s314 = sphi 0, %s313
    %s328 = sphi 0, %s314
    %s332 = sphi 0, %s332
    %s334 = sphi 0, %s332
    %s335 = sphi 0, %s334
    %s349 = sphi 0, %s335
    %s353 = sphi 0, %s353
    %s355 = sphi 0, %s353
    %s356 = sphi 0, %s355
    %s370 = sphi 0, %s356
    %s374 = sphi 0, %s374
    %s376 = sphi 0, %s374
    %s377 = sphi 0, %s376
    %s391 = sphi 0, %s377
    %s395 = sphi 0, %s395
    %s397 = sphi 0, %s395
    %s398 = sphi 0, %s397
    %s412 = sphi 0, %s398
    %s416 = sphi 0, %s416
    %s418 = sphi 0, %s416
    %s419 = sphi 0, %s418
    %s433 = sphi 0, %s419
    %s439 = sphi 0, %s441
    %s442 = sphi 0, %s439
    %s443 = sphi 0, %s442
    %s459 = sphi 0, %s443
  $region4: #{ecg_bert_forward.1} parent=0 // loop_header_branch
    %28 = sbr.rel (%p26) target = $region8
  $region5: #{ecg_bert_forward.1} parent=0 // loop_body
    %s30 = ssub.s32 %s25, 1
    %s31 = ssub.s32 %s25, 2
    %s32 = sadd.s32 %s25, 1
    %s33 = ssub.s32 %s25, %s32
    %p34 = scmp.eq.s32.totalorder %s33, 0
    %s36 = sadd.s32 %s35, 1
    %s37 = scalar_select %p34, %s35, %s36
    %p40 = pneg %p34
    %p41 = scmp.eq.s32.totalorder %s25, 1
    %p42 = por %p40, %p41
    %p43 = scmp.ne.s32.totalorder %s35, %s38
    %p44 = scmp.eq.s32.totalorder %s25, 0
    %p45 = por %p43, %p44
    %p46 = scmp.ne.s32.totalorder %s35, %s38
    %p47 = scmp.eq.s32.totalorder %s30, 1
    %p48 = por %p46, %p47
    %p49 = scmp.ne.s32.totalorder %s38, %s39
    %p50 = scmp.eq.s32.totalorder %s30, 0
    %p51 = por %p49, %p50
    %p52 = scmp.ne.s32.totalorder %s38, %s39
    %p53 = scmp.eq.s32.totalorder %s31, 1
    %p54 = por %p52, %p53
    %p56 = scmp.ne.s32.totalorder %s39, %s55
    %p57 = scmp.eq.s32.totalorder %s31, 0
    %p58 = por %p56, %p57
    %s60 = sadd.s32 %s59, 1
    %p63 = scmp.eq.s32.totalorder %s25, 1
    %p64 = scmp.ne.s32.totalorder %s59, %s61
    %p65 = scmp.eq.s32.totalorder %s25, 0
    %p66 = por %p64, %p65
    %p67 = scmp.ne.s32.totalorder %s59, %s61
    %p68 = scmp.eq.s32.totalorder %s30, 1
    %p69 = por %p67, %p68
    %p70 = scmp.ne.s32.totalorder %s61, %s62
    %p71 = scmp.eq.s32.totalorder %s30, 0
    %p72 = por %p70, %p71
    %p73 = scmp.ne.s32.totalorder %s61, %s62
    %p74 = scmp.eq.s32.totalorder %s31, 1
    %p75 = por %p73, %p74
    %p77 = scmp.ne.s32.totalorder %s62, %s76
    %p78 = scmp.eq.s32.totalorder %s31, 0
    %p79 = por %p77, %p78
    %s81 = sadd.s32 %s80, 1
    %p84 = scmp.eq.s32.totalorder %s25, 1
    %p85 = scmp.ne.s32.totalorder %s80, %s82
    %p86 = scmp.eq.s32.totalorder %s25, 0
    %p87 = por %p85, %p86
    %p88 = scmp.ne.s32.totalorder %s80, %s82
    %p89 = scmp.eq.s32.totalorder %s30, 1
    %p90 = por %p88, %p89
    %p91 = scmp.ne.s32.totalorder %s82, %s83
    %p92 = scmp.eq.s32.totalorder %s30, 0
    %p93 = por %p91, %p92
    %p94 = scmp.ne.s32.totalorder %s82, %s83
    %p95 = scmp.eq.s32.totalorder %s31, 1
    %p96 = por %p94, %p95
    %p98 = scmp.ne.s32.totalorder %s83, %s97
    %p99 = scmp.eq.s32.totalorder %s31, 0
    %p100 = por %p98, %p99
    %s102 = sadd.s32 %s101, 1
    %p105 = scmp.eq.s32.totalorder %s25, 1
    %p106 = scmp.ne.s32.totalorder %s101, %s103
    %p107 = scmp.eq.s32.totalorder %s25, 0
    %p108 = por %p106, %p107
    %p109 = scmp.ne.s32.totalorder %s101, %s103
    %p110 = scmp.eq.s32.totalorder %s30, 1
    %p111 = por %p109, %p110
    %p112 = scmp.ne.s32.totalorder %s103, %s104
    %p113 = scmp.eq.s32.totalorder %s30, 0
    %p114 = por %p112, %p113
    %p115 = scmp.ne.s32.totalorder %s103, %s104
    %p116 = scmp.eq.s32.totalorder %s31, 1
    %p117 = por %p115, %p116
    %p119 = scmp.ne.s32.totalorder %s104, %s118
    %p120 = scmp.eq.s32.totalorder %s31, 0
    %p121 = por %p119, %p120
    %s123 = sadd.s32 %s122, 1
    %p126 = scmp.eq.s32.totalorder %s25, 1
    %p127 = scmp.ne.s32.totalorder %s122, %s124
    %p128 = scmp.eq.s32.totalorder %s25, 0
    %p129 = por %p127, %p128
    %p130 = scmp.ne.s32.totalorder %s122, %s124
    %p131 = scmp.eq.s32.totalorder %s30, 1
    %p132 = por %p130, %p131
    %p133 = scmp.ne.s32.totalorder %s124, %s125
    %p134 = scmp.eq.s32.totalorder %s30, 0
    %p135 = por %p133, %p134
    %p136 = scmp.ne.s32.totalorder %s124, %s125
    %p137 = scmp.eq.s32.totalorder %s31, 1
    %p138 = por %p136, %p137
    %p140 = scmp.ne.s32.totalorder %s125, %s139
    %p141 = scmp.eq.s32.totalorder %s31, 0
    %p142 = por %p140, %p141
    %s144 = sadd.s32 %s143, 1
    %p147 = scmp.eq.s32.totalorder %s25, 1
    %p148 = scmp.ne.s32.totalorder %s143, %s145
    %p149 = scmp.eq.s32.totalorder %s25, 0
    %p150 = por %p148, %p149
    %p151 = scmp.ne.s32.totalorder %s143, %s145
    %p152 = scmp.eq.s32.totalorder %s30, 1
    %p153 = por %p151, %p152
    %p154 = scmp.ne.s32.totalorder %s145, %s146
    %p155 = scmp.eq.s32.totalorder %s30, 0
    %p156 = por %p154, %p155
    %p157 = scmp.ne.s32.totalorder %s145, %s146
    %p158 = scmp.eq.s32.totalorder %s31, 1
    %p159 = por %p157, %p158
    %p161 = scmp.ne.s32.totalorder %s146, %s160
    %p162 = scmp.eq.s32.totalorder %s31, 0
    %p163 = por %p161, %p162
    %s165 = sadd.s32 %s164, 1
    %p168 = scmp.eq.s32.totalorder %s25, 1
    %p169 = scmp.ne.s32.totalorder %s164, %s166
    %p170 = scmp.eq.s32.totalorder %s25, 0
    %p171 = por %p169, %p170
    %p172 = scmp.ne.s32.totalorder %s164, %s166
    %p173 = scmp.eq.s32.totalorder %s30, 1
    %p174 = por %p172, %p173
    %p175 = scmp.ne.s32.totalorder %s166, %s167
    %p176 = scmp.eq.s32.totalorder %s30, 0
    %p177 = por %p175, %p176
    %p178 = scmp.ne.s32.totalorder %s166, %s167
    %p179 = scmp.eq.s32.totalorder %s31, 1
    %p180 = por %p178, %p179
    %p182 = scmp.ne.s32.totalorder %s167, %s181
    %p183 = scmp.eq.s32.totalorder %s31, 0
    %p184 = por %p182, %p183
    %s186 = sadd.s32 %s185, 1
    %p189 = scmp.eq.s32.totalorder %s25, 1
    %p190 = scmp.ne.s32.totalorder %s185, %s187
    %p191 = scmp.eq.s32.totalorder %s25, 0
    %p192 = por %p190, %p191
    %p193 = scmp.ne.s32.totalorder %s185, %s187
    %p194 = scmp.eq.s32.totalorder %s30, 1
    %p195 = por %p193, %p194
    %p196 = scmp.ne.s32.totalorder %s187, %s188
    %p197 = scmp.eq.s32.totalorder %s30, 0
    %p198 = por %p196, %p197
    %p199 = scmp.ne.s32.totalorder %s187, %s188
    %p200 = scmp.eq.s32.totalorder %s31, 1
    %p201 = por %p199, %p200
    %p203 = scmp.ne.s32.totalorder %s188, %s202
    %p204 = scmp.eq.s32.totalorder %s31, 0
    %p205 = por %p203, %p204
    %s207 = sadd.s32 %s206, 1
    %p210 = scmp.eq.s32.totalorder %s25, 1
    %p211 = scmp.ne.s32.totalorder %s206, %s208
    %p212 = scmp.eq.s32.totalorder %s25, 0
    %p213 = por %p211, %p212
    %p214 = scmp.ne.s32.totalorder %s206, %s208
    %p215 = scmp.eq.s32.totalorder %s30, 1
    %p216 = por %p214, %p215
    %p217 = scmp.ne.s32.totalorder %s208, %s209
    %p218 = scmp.eq.s32.totalorder %s30, 0
    %p219 = por %p217, %p218
    %p220 = scmp.ne.s32.totalorder %s208, %s209
    %p221 = scmp.eq.s32.totalorder %s31, 1
    %p222 = por %p220, %p221
    %p224 = scmp.ne.s32.totalorder %s209, %s223
    %p225 = scmp.eq.s32.totalorder %s31, 0
    %p226 = por %p224, %p225
    %s228 = sadd.s32 %s227, 1
    %p231 = scmp.eq.s32.totalorder %s25, 1
    %p232 = scmp.ne.s32.totalorder %s227, %s229
    %p233 = scmp.eq.s32.totalorder %s25, 0
    %p234 = por %p232, %p233
    %p235 = scmp.ne.s32.totalorder %s227, %s229
    %p236 = scmp.eq.s32.totalorder %s30, 1
    %p237 = por %p235, %p236
    %p238 = scmp.ne.s32.totalorder %s229, %s230
    %p239 = scmp.eq.s32.totalorder %s30, 0
    %p240 = por %p238, %p239
    %p241 = scmp.ne.s32.totalorder %s229, %s230
    %p242 = scmp.eq.s32.totalorder %s31, 1
    %p243 = por %p241, %p242
    %p245 = scmp.ne.s32.totalorder %s230, %s244
    %p246 = scmp.eq.s32.totalorder %s31, 0
    %p247 = por %p245, %p246
    %s249 = sadd.s32 %s248, 1
    %p252 = scmp.eq.s32.totalorder %s25, 1
    %p253 = scmp.ne.s32.totalorder %s248, %s250
    %p254 = scmp.eq.s32.totalorder %s25, 0
    %p255 = por %p253, %p254
    %p256 = scmp.ne.s32.totalorder %s248, %s250
    %p257 = scmp.eq.s32.totalorder %s30, 1
    %p258 = por %p256, %p257
    %p259 = scmp.ne.s32.totalorder %s250, %s251
    %p260 = scmp.eq.s32.totalorder %s30, 0
    %p261 = por %p259, %p260
    %p262 = scmp.ne.s32.totalorder %s250, %s251
    %p263 = scmp.eq.s32.totalorder %s31, 1
    %p264 = por %p262, %p263
    %p266 = scmp.ne.s32.totalorder %s251, %s265
    %p267 = scmp.eq.s32.totalorder %s31, 0
    %p268 = por %p266, %p267
    %s270 = sadd.s32 %s269, 1
    %p273 = scmp.eq.s32.totalorder %s25, 1
    %p274 = scmp.ne.s32.totalorder %s269, %s271
    %p275 = scmp.eq.s32.totalorder %s25, 0
    %p276 = por %p274, %p275
    %p277 = scmp.ne.s32.totalorder %s269, %s271
    %p278 = scmp.eq.s32.totalorder %s30, 1
    %p279 = por %p277, %p278
    %p280 = scmp.ne.s32.totalorder %s271, %s272
    %p281 = scmp.eq.s32.totalorder %s30, 0
    %p282 = por %p280, %p281
    %p283 = scmp.ne.s32.totalorder %s271, %s272
    %p284 = scmp.eq.s32.totalorder %s31, 1
    %p285 = por %p283, %p284
    %p287 = scmp.ne.s32.totalorder %s272, %s286
    %p288 = scmp.eq.s32.totalorder %s31, 0
    %p289 = por %p287, %p288
    %s291 = sadd.s32 %s290, 1
    %p294 = scmp.eq.s32.totalorder %s25, 1
    %p295 = scmp.ne.s32.totalorder %s290, %s292
    %p296 = scmp.eq.s32.totalorder %s25, 0
    %p297 = por %p295, %p296
    %p298 = scmp.ne.s32.totalorder %s290, %s292
    %p299 = scmp.eq.s32.totalorder %s30, 1
    %p300 = por %p298, %p299
    %p301 = scmp.ne.s32.totalorder %s292, %s293
    %p302 = scmp.eq.s32.totalorder %s30, 0
    %p303 = por %p301, %p302
    %p304 = scmp.ne.s32.totalorder %s292, %s293
    %p305 = scmp.eq.s32.totalorder %s31, 1
    %p306 = por %p304, %p305
    %p308 = scmp.ne.s32.totalorder %s293, %s307
    %p309 = scmp.eq.s32.totalorder %s31, 0
    %p310 = por %p308, %p309
    %s312 = sadd.s32 %s311, 1
    %p315 = scmp.eq.s32.totalorder %s25, 1
    %p316 = scmp.ne.s32.totalorder %s311, %s313
    %p317 = scmp.eq.s32.totalorder %s25, 0
    %p318 = por %p316, %p317
    %p319 = scmp.ne.s32.totalorder %s311, %s313
    %p320 = scmp.eq.s32.totalorder %s30, 1
    %p321 = por %p319, %p320
    %p322 = scmp.ne.s32.totalorder %s313, %s314
    %p323 = scmp.eq.s32.totalorder %s30, 0
    %p324 = por %p322, %p323
    %p325 = scmp.ne.s32.totalorder %s313, %s314
    %p326 = scmp.eq.s32.totalorder %s31, 1
    %p327 = por %p325, %p326
    %p329 = scmp.ne.s32.totalorder %s314, %s328
    %p330 = scmp.eq.s32.totalorder %s31, 0
    %p331 = por %p329, %p330
    %s333 = sadd.s32 %s332, 1
    %p336 = scmp.eq.s32.totalorder %s25, 1
    %p337 = scmp.ne.s32.totalorder %s332, %s334
    %p338 = scmp.eq.s32.totalorder %s25, 0
    %p339 = por %p337, %p338
    %p340 = scmp.ne.s32.totalorder %s332, %s334
    %p341 = scmp.eq.s32.totalorder %s30, 1
    %p342 = por %p340, %p341
    %p343 = scmp.ne.s32.totalorder %s334, %s335
    %p344 = scmp.eq.s32.totalorder %s30, 0
    %p345 = por %p343, %p344
    %p346 = scmp.ne.s32.totalorder %s334, %s335
    %p347 = scmp.eq.s32.totalorder %s31, 1
    %p348 = por %p346, %p347
    %p350 = scmp.ne.s32.totalorder %s335, %s349
    %p351 = scmp.eq.s32.totalorder %s31, 0
    %p352 = por %p350, %p351
    %s354 = sadd.s32 %s353, 1
    %p357 = scmp.eq.s32.totalorder %s25, 1
    %p358 = scmp.ne.s32.totalorder %s353, %s355
    %p359 = scmp.eq.s32.totalorder %s25, 0
    %p360 = por %p358, %p359
    %p361 = scmp.ne.s32.totalorder %s353, %s355
    %p362 = scmp.eq.s32.totalorder %s30, 1
    %p363 = por %p361, %p362
    %p364 = scmp.ne.s32.totalorder %s355, %s356
    %p365 = scmp.eq.s32.totalorder %s30, 0
    %p366 = por %p364, %p365
    %p367 = scmp.ne.s32.totalorder %s355, %s356
    %p368 = scmp.eq.s32.totalorder %s31, 1
    %p369 = por %p367, %p368
    %p371 = scmp.ne.s32.totalorder %s356, %s370
    %p372 = scmp.eq.s32.totalorder %s31, 0
    %p373 = por %p371, %p372
    %s375 = sadd.s32 %s374, 1
    %p378 = scmp.eq.s32.totalorder %s25, 1
    %p379 = scmp.ne.s32.totalorder %s374, %s376
    %p380 = scmp.eq.s32.totalorder %s25, 0
    %p381 = por %p379, %p380
    %p382 = scmp.ne.s32.totalorder %s374, %s376
    %p383 = scmp.eq.s32.totalorder %s30, 1
    %p384 = por %p382, %p383
    %p385 = scmp.ne.s32.totalorder %s376, %s377
    %p386 = scmp.eq.s32.totalorder %s30, 0
    %p387 = por %p385, %p386
    %p388 = scmp.ne.s32.totalorder %s376, %s377
    %p389 = scmp.eq.s32.totalorder %s31, 1
    %p390 = por %p388, %p389
    %p392 = scmp.ne.s32.totalorder %s377, %s391
    %p393 = scmp.eq.s32.totalorder %s31, 0
    %p394 = por %p392, %p393
    %s396 = sadd.s32 %s395, 1
    %p399 = scmp.eq.s32.totalorder %s25, 1
    %p400 = scmp.ne.s32.totalorder %s395, %s397
    %p401 = scmp.eq.s32.totalorder %s25, 0
    %p402 = por %p400, %p401
    %p403 = scmp.ne.s32.totalorder %s395, %s397
    %p404 = scmp.eq.s32.totalorder %s30, 1
    %p405 = por %p403, %p404
    %p406 = scmp.ne.s32.totalorder %s397, %s398
    %p407 = scmp.eq.s32.totalorder %s30, 0
    %p408 = por %p406, %p407
    %p409 = scmp.ne.s32.totalorder %s397, %s398
    %p410 = scmp.eq.s32.totalorder %s31, 1
    %p411 = por %p409, %p410
    %p413 = scmp.ne.s32.totalorder %s398, %s412
    %p414 = scmp.eq.s32.totalorder %s31, 0
    %p415 = por %p413, %p414
    %s417 = sadd.s32 %s416, 1
    %p420 = scmp.eq.s32.totalorder %s25, 1
    %p421 = scmp.ne.s32.totalorder %s416, %s418
    %p422 = scmp.eq.s32.totalorder %s25, 0
    %p423 = por %p421, %p422
    %p424 = scmp.ne.s32.totalorder %s416, %s418
    %p425 = scmp.eq.s32.totalorder %s30, 1
    %p426 = por %p424, %p425
    %p427 = scmp.ne.s32.totalorder %s418, %s419
    %p428 = scmp.eq.s32.totalorder %s30, 0
    %p429 = por %p427, %p428
    %p430 = scmp.ne.s32.totalorder %s418, %s419
    %p431 = scmp.eq.s32.totalorder %s31, 1
    %p432 = por %p430, %p431
    %p434 = scmp.ne.s32.totalorder %s419, %s433
    %p435 = scmp.eq.s32.totalorder %s31, 0
    %p436 = por %p434, %p435
    %s437 = ssub.s32 %s25, %s32
    %p438 = scmp.eq.s32.totalorder %s437, 0
    %s440 = sadd.s32 %s439, 1
    %s441 = scalar_select %p438, %s439, %s440
    %p444 = pneg %p438
    %p445 = scmp.eq.s32.totalorder %s25, 1
    %p446 = por %p444, %p445
    %p447 = scmp.ne.s32.totalorder %s439, %s442
    %p448 = scmp.eq.s32.totalorder %s25, 0
    %p449 = por %p447, %p448
    %p450 = scmp.ne.s32.totalorder %s439, %s442
    %p451 = scmp.eq.s32.totalorder %s30, 1
    %p452 = por %p450, %p451
    %p453 = scmp.ne.s32.totalorder %s442, %s443
    %p454 = scmp.eq.s32.totalorder %s30, 0
    %p455 = por %p453, %p454
    %p456 = scmp.ne.s32.totalorder %s442, %s443
    %p457 = scmp.eq.s32.totalorder %s31, 1
    %p458 = por %p456, %p457
    %p460 = scmp.ne.s32.totalorder %s443, %s459
    %p461 = scmp.eq.s32.totalorder %s31, 0
    %p462 = por %p460, %p461
    %p463 = scmp.le.s32.totalorder 1, %s25
    %p464 = scmp.lt.s32.totalorder %s25, 3
    %p465 = pnand %p463, %p464
    %p466 = pneg %p465
    // Predicated region
    $region9: #{ecg_bert_forward.1} parent=5 // pred_check
      _
    $region10: #{ecg_bert_forward.1} parent=5 // pred_check_branch
      %468 = sbr.rel (%p465) target = $region12
    $region11: #{ecg_bert_forward.1} parent=5 // pred_region
      %s469 = ssub.s32 %s25, 1
      // Predicated region
      $region13: #{ecg_bert_forward.1} parent=11 // pred_check
        %p470 = pneg %p72
      $region14: #{ecg_bert_forward.1} parent=11 // pred_check_branch
        %472 = sbr.rel (%p470) target = $region16
      $region15: #{ecg_bert_forward.1} parent=11 // pred_region
        _
      $region16: #{ecg_bert_forward.1} parent=11 // pred_fallthru
        _
      // Predicated region
      $region17: #{ecg_bert_forward.1} parent=11 // pred_check
        %p473 = pneg %p93
      $region18: #{ecg_bert_forward.1} parent=11 // pred_check_branch
        %475 = sbr.rel (%p473) target = $region20
      $region19: #{ecg_bert_forward.1} parent=11 // pred_region
        _
      $region20: #{ecg_bert_forward.1} parent=11 // pred_fallthru
        _
      // Predicated region
      $region21: #{ecg_bert_forward.1} parent=11 // pred_check
        %p476 = pneg %p114
      $region22: #{ecg_bert_forward.1} parent=11 // pred_check_branch
        %478 = sbr.rel (%p476) target = $region24
      $region23: #{ecg_bert_forward.1} parent=11 // pred_region
        _
      $region24: #{ecg_bert_forward.1} parent=11 // pred_fallthru
        _
      // Predicated region
      $region25: #{ecg_bert_forward.1} parent=11 // pred_check
        %p479 = pneg %p135
      $region26: #{ecg_bert_forward.1} parent=11 // pred_check_branch
        %481 = sbr.rel (%p479) target = $region28
      $region27: #{ecg_bert_forward.1} parent=11 // pred_region
        _
      $region28: #{ecg_bert_forward.1} parent=11 // pred_fallthru
        _
      // Predicated region
      $region29: #{ecg_bert_forward.1} parent=11 // pred_check
        %p482 = pneg %p156
      $region30: #{ecg_bert_forward.1} parent=11 // pred_check_branch
        %484 = sbr.rel (%p482) target = $region32
      $region31: #{ecg_bert_forward.1} parent=11 // pred_region
        _
      $region32: #{ecg_bert_forward.1} parent=11 // pred_fallthru
        _
      // Predicated region
      $region33: #{ecg_bert_forward.1} parent=11 // pred_check
        %p485 = pneg %p177
      $region34: #{ecg_bert_forward.1} parent=11 // pred_check_branch
        %487 = sbr.rel (%p485) target = $region36
      $region35: #{ecg_bert_forward.1} parent=11 // pred_region
        _
      $region36: #{ecg_bert_forward.1} parent=11 // pred_fallthru
        _
      // Predicated region
      $region37: #{ecg_bert_forward.1} parent=11 // pred_check
        %p488 = pneg %p198
      $region38: #{ecg_bert_forward.1} parent=11 // pred_check_branch
        %490 = sbr.rel (%p488) target = $region40
      $region39: #{ecg_bert_forward.1} parent=11 // pred_region
        _
      $region40: #{ecg_bert_forward.1} parent=11 // pred_fallthru
        _
      // Predicated region
      $region41: #{ecg_bert_forward.1} parent=11 // pred_check
        %p491 = pneg %p219
      $region42: #{ecg_bert_forward.1} parent=11 // pred_check_branch
        %493 = sbr.rel (%p491) target = $region44
      $region43: #{ecg_bert_forward.1} parent=11 // pred_region
        _
      $region44: #{ecg_bert_forward.1} parent=11 // pred_fallthru
        _
      // Predicated region
      $region45: #{ecg_bert_forward.1} parent=11 // pred_check
        %p494 = pneg %p240
      $region46: #{ecg_bert_forward.1} parent=11 // pred_check_branch
        %496 = sbr.rel (%p494) target = $region48
      $region47: #{ecg_bert_forward.1} parent=11 // pred_region
        _
      $region48: #{ecg_bert_forward.1} parent=11 // pred_fallthru
        _
      // Predicated region
      $region49: #{ecg_bert_forward.1} parent=11 // pred_check
        %p497 = pneg %p261
      $region50: #{ecg_bert_forward.1} parent=11 // pred_check_branch
        %499 = sbr.rel (%p497) target = $region52
      $region51: #{ecg_bert_forward.1} parent=11 // pred_region
        _
      $region52: #{ecg_bert_forward.1} parent=11 // pred_fallthru
        _
      // Predicated region
      $region53: #{ecg_bert_forward.1} parent=11 // pred_check
        %p500 = pneg %p282
      $region54: #{ecg_bert_forward.1} parent=11 // pred_check_branch
        %502 = sbr.rel (%p500) target = $region56
      $region55: #{ecg_bert_forward.1} parent=11 // pred_region
        _
      $region56: #{ecg_bert_forward.1} parent=11 // pred_fallthru
        _
      // Predicated region
      $region57: #{ecg_bert_forward.1} parent=11 // pred_check
        %p503 = pneg %p303
      $region58: #{ecg_bert_forward.1} parent=11 // pred_check_branch
        %505 = sbr.rel (%p503) target = $region60
      $region59: #{ecg_bert_forward.1} parent=11 // pred_region
        _
      $region60: #{ecg_bert_forward.1} parent=11 // pred_fallthru
        _
      // Predicated region
      $region61: #{ecg_bert_forward.1} parent=11 // pred_check
        %p506 = pneg %p324
      $region62: #{ecg_bert_forward.1} parent=11 // pred_check_branch
        %508 = sbr.rel (%p506) target = $region64
      $region63: #{ecg_bert_forward.1} parent=11 // pred_region
        _
      $region64: #{ecg_bert_forward.1} parent=11 // pred_fallthru
        _
      // Predicated region
      $region65: #{ecg_bert_forward.1} parent=11 // pred_check
        %p509 = pneg %p345
      $region66: #{ecg_bert_forward.1} parent=11 // pred_check_branch
        %511 = sbr.rel (%p509) target = $region68
      $region67: #{ecg_bert_forward.1} parent=11 // pred_region
        _
      $region68: #{ecg_bert_forward.1} parent=11 // pred_fallthru
        _
      // Predicated region
      $region69: #{ecg_bert_forward.1} parent=11 // pred_check
        %p512 = pneg %p366
      $region70: #{ecg_bert_forward.1} parent=11 // pred_check_branch
        %514 = sbr.rel (%p512) target = $region72
      $region71: #{ecg_bert_forward.1} parent=11 // pred_region
        _
      $region72: #{ecg_bert_forward.1} parent=11 // pred_fallthru
        _
      // Predicated region
      $region73: #{ecg_bert_forward.1} parent=11 // pred_check
        %p515 = pneg %p387
      $region74: #{ecg_bert_forward.1} parent=11 // pred_check_branch
        %517 = sbr.rel (%p515) target = $region76
      $region75: #{ecg_bert_forward.1} parent=11 // pred_region
        _
      $region76: #{ecg_bert_forward.1} parent=11 // pred_fallthru
        _
      // Predicated region
      $region77: #{ecg_bert_forward.1} parent=11 // pred_check
        %p518 = pneg %p408
      $region78: #{ecg_bert_forward.1} parent=11 // pred_check_branch
        %520 = sbr.rel (%p518) target = $region80
      $region79: #{ecg_bert_forward.1} parent=11 // pred_region
        _
      $region80: #{ecg_bert_forward.1} parent=11 // pred_fallthru
        _
      // Predicated region
      $region81: #{ecg_bert_forward.1} parent=11 // pred_check
        %p521 = pneg %p429
      $region82: #{ecg_bert_forward.1} parent=11 // pred_check_branch
        %523 = sbr.rel (%p521) target = $region84
      $region83: #{ecg_bert_forward.1} parent=11 // pred_region
        _
      $region84: #{ecg_bert_forward.1} parent=11 // pred_fallthru
        _
    $region12: #{ecg_bert_forward.1} parent=5 // pred_fallthru
      _
    %p524 = scmp.lt.s32.totalorder %s25, 2
    // Predicated region
    $region85: #{ecg_bert_forward.1} parent=5 // pred_check
      %p525 = pneg %p524
    $region86: #{ecg_bert_forward.1} parent=5 // pred_check_branch
      %527 = sbr.rel (%p525) target = $region88
    $region87: #{ecg_bert_forward.1} parent=5 // pred_region
      // Predicated region
      $region89: #{ecg_bert_forward.1} parent=87 // pred_check
        %p528 = pneg %p45
      $region90: #{ecg_bert_forward.1} parent=87 // pred_check_branch
        %530 = sbr.rel (%p528) target = $region92
      $region91: #{ecg_bert_forward.1} parent=87 // pred_region
        %p531 = scmp.lt.s32.totalorder %s25, 1
        %s532 = scalar_select %p531, %s25, 1
        %s533 = smul.addr %s532, 8
        %s534 = scalar_lea.vmem %s0, %s533
      $region92: #{ecg_bert_forward.1} parent=87 // pred_fallthru
        _
    $region88: #{ecg_bert_forward.1} parent=5 // pred_fallthru
      _
    %p535 = scmp.le.s32.totalorder 1, %s25
    %p536 = scmp.lt.s32.totalorder %s25, 3
    %p537 = pnand %p535, %p536
    %p538 = pneg %p537
    // Predicated region
    $region93: #{ecg_bert_forward.1} parent=5 // pred_check
      _
    $region94: #{ecg_bert_forward.1} parent=5 // pred_check_branch
      %540 = sbr.rel (%p537) target = $region96
    $region95: #{ecg_bert_forward.1} parent=5 // pred_region
      %s541 = ssub.s32 %s25, 1
      %p542 = scmp.lt.s32.totalorder %s30, 1
      %s543 = scalar_select %p542, %s30, 1
      %s544 = smul.addr %s543, 8
      %s545 = scalar_lea.vmem %s0, %s544
      %p546 = pneg %p51
      %p547 = pneg %p48
      %p548 = pneg %p72
      %p549 = pneg %p69
      %p550 = pneg %p93
      %p551 = pneg %p90
      %p552 = pneg %p114
      %p553 = pneg %p111
      %p554 = pneg %p135
      %p555 = pneg %p132
      %p556 = pneg %p156
      %p557 = pneg %p153
      %p558 = pneg %p177
      %p559 = pneg %p174
      %p560 = pneg %p198
      %p561 = pneg %p195
      %p562 = pneg %p219
      %p563 = pneg %p216
      %p564 = pneg %p240
      %p565 = pneg %p237
      %p566 = pneg %p261
      %p567 = pneg %p258
      %p568 = pneg %p282
      %p569 = pneg %p279
      %p570 = pneg %p303
      %p571 = pneg %p300
      %p572 = pneg %p324
      %p573 = pneg %p321
      %p574 = pneg %p345
      %p575 = pneg %p342
      %p576 = pneg %p366
      %p577 = pneg %p363
      %p578 = pneg %p387
      %p579 = pneg %p384
      %p580 = pneg %p408
      %p581 = pneg %p405
      %p582 = pneg %p429
      %p583 = pneg %p426
      %p584 = pneg %p455
      %p585 = pneg %p452
      %p586 = scmp.lt.s32.totalorder %s30, 1
      %s587 = scalar_select %p586, %s30, 1
      %s588 = smul.addr %s587, 8
      %s589 = scalar_lea.vmem %s19, %s588
      %p590 = scmp.lt.s32.totalorder %s30, 1
      %s591 = scalar_select %p590, %s30, 1
      %s592 = smul.addr %s591, 8
      %s593 = scalar_lea.vmem %s0, %s592
      %p594 = scmp.lt.s32.totalorder %s30, 1
      %s595 = scalar_select %p594, %s30, 1
      %s596 = smul.addr %s595, 8
      %s597 = scalar_lea.vmem %s19, %s596
      %v599 = vld [vmem:[%s593] sm:$0xff]
      %v600 = vpack.c.bf16 %v599, %v599
      %v601 = vld [vmem:[%s1] sm:$0xf]
      %v602 = vld [vmem:[%s1 + $0x4] sm:$0xf]
      %v603 = vld [vmem:[%s1 + $0x8] sm:$0xf]
      %v604 = vld [vmem:[%s1 + $0xc] sm:$0xf]
      %v605 = vld [vmem:[%s1 + $0x10] sm:$0xf]
      %v606 = vld [vmem:[%s1 + $0x14] sm:$0xf]
      %v607 = vld [vmem:[%s1 + $0x18] sm:$0xf]
      %v608 = vld [vmem:[%s1 + $0x1c] sm:$0xf]
      %v609 = vld [vmem:[%s4] sm:$0x1]
      %v610 = vld [vmem:[%s4 + $0x1] sm:$0x1]
      %v611 = vld [vmem:[%s4 + $0x2] sm:$0x1]
      %v612 = vld [vmem:[%s4 + $0x3] sm:$0x1]
      %v617 = vlaneseq
      %v618 = vshrl.u32 %v617, 7
      %v619 = vsub.s32 0, %v618
      %v620 = vrot.slane %v609, %v619
      %v621 = vlaneseq
      %v622 = vshrl.u32 %v621, 7
      %v623 = vsub.s32 0, %v622
      %v624 = vrot.slane %v610, %v623
      %v625 = vlaneseq
      %v626 = vshrl.u32 %v625, 7
      %v627 = vsub.s32 0, %v626
      %v628 = vrot.slane %v611, %v627
      %v629 = vlaneseq
      %v630 = vshrl.u32 %v629, 7
      %v631 = vsub.s32 0, %v630
      %v632 = vrot.slane %v612, %v631
      %v639 = vunpack.c.l.b16 %v601
      %v640 = vunpack.c.l.b16 %v602
      %v641 = vpack.c.b16 %v640, %v639
      %vm642 = vcmask 523264
      %v644 = vsel %vm642, %v600, 0
      %v647 = vsel %vm642, %v641, 0
      %649 = vmatprep.subr.bf16.mxu0 0
      %650 = vmatpush1.bf16.xpose.msra.mxu0 %v647
      %651 = vmatprep.subr.bf16.mxu0 0
      %652 = vmatpush1.bf16.xpose.msra.mxu0 0
      %653 = vmatprep.subr.bf16.mxu0 0
      %654 = vmatpush1.bf16.xpose.msra.mxu0 0
      %655 = vmatprep.subr.bf16.mxu0 0
      %656 = vmatpush1.bf16.xpose.msra.mxu0 0
      %657 = vmatprep.subr.bf16.mxu0 0
      %658 = vmatpush1.bf16.xpose.msra.mxu0 0
      %659 = vmatprep.subr.bf16.mxu0 0
      %660 = vmatpush1.bf16.xpose.msra.mxu0 0
      %661 = vmatprep.subr.bf16.mxu0 0
      %662 = vmatpush1.bf16.xpose.msra.mxu0 0
      %663 = vmatprep.subr.bf16.mxu0 0
      %664 = vmatpush1.bf16.xpose.msra.mxu0 0
      %665 = vmatprep.subr.bf16.mxu0 0
      %666 = vmatpush1.bf16.xpose.msra.mxu0 0
      %667 = vmatprep.subr.bf16.mxu0 0
      %668 = vmatpush1.bf16.xpose.msra.mxu0 0
      %669 = vmatprep.subr.bf16.mxu0 0
      %670 = vmatpush1.bf16.xpose.msra.mxu0 0
      %671 = vmatprep.subr.bf16.mxu0 0
      %672 = vmatpush1.bf16.xpose.msra.mxu0 0
      %673 = vmatprep.subr.bf16.mxu0 0
      %674 = vmatpush1.bf16.xpose.msra.mxu0 0
      %675 = vmatprep.subr.bf16.mxu0 0
      %676 = vmatpush1.bf16.xpose.msra.mxu0 0
      %677 = vmatprep.subr.bf16.mxu0 0
      %678 = vmatpush1.bf16.xpose.msra.mxu0 0
      %679 = vmatprep.subr.bf16.mxu0 0
      %680 = vmatpush1.bf16.xpose.msra.mxu0 0
      %681 = vmatprep.mubr.bf16.mxu0 0
      %682 = vmatmul.mubr.bf16.gmra.mrb[0].mxu0 %v644
      %v683 = vpop.f32.mrb[0].mxu0
      %v684 = vadd.f32 %v620, %v683
      %v685 = vpop.f32.mrb[0].mxu0
      %v686 = vpop.f32.mrb[0].mxu0
      %v687 = vpop.f32.mrb[0].mxu0
      %688 = vdwg.mxu0
      %v691 = vunpack.c.l.b16 %v603
      %v692 = vunpack.c.l.b16 %v604
      %v693 = vpack.c.b16 %v692, %v691
      %v695 = vsel %vm642, %v693, 0
      %697 = vmatprep.subr.bf16.mxu0 0
      %698 = vmatpush1.bf16.xpose.msra.mxu0 %v695
      %699 = vmatprep.subr.bf16.mxu0 0
      %700 = vmatpush1.bf16.xpose.msra.mxu0 0
      %701 = vmatprep.subr.bf16.mxu0 0
      %702 = vmatpush1.bf16.xpose.msra.mxu0 0
      %703 = vmatprep.subr.bf16.mxu0 0
      %704 = vmatpush1.bf16.xpose.msra.mxu0 0
      %705 = vmatprep.subr.bf16.mxu0 0
      %706 = vmatpush1.bf16.xpose.msra.mxu0 0
      %707 = vmatprep.subr.bf16.mxu0 0
      %708 = vmatpush1.bf16.xpose.msra.mxu0 0
      %709 = vmatprep.subr.bf16.mxu0 0
      %710 = vmatpush1.bf16.xpose.msra.mxu0 0
      %711 = vmatprep.subr.bf16.mxu0 0
      %712 = vmatpush1.bf16.xpose.msra.mxu0 0
      %713 = vmatprep.subr.bf16.mxu0 0
      %714 = vmatpush1.bf16.xpose.msra.mxu0 0
      %715 = vmatprep.subr.bf16.mxu0 0
      %716 = vmatpush1.bf16.xpose.msra.mxu0 0
      %717 = vmatprep.subr.bf16.mxu0 0
      %718 = vmatpush1.bf16.xpose.msra.mxu0 0
      %719 = vmatprep.subr.bf16.mxu0 0
      %720 = vmatpush1.bf16.xpose.msra.mxu0 0
      %721 = vmatprep.subr.bf16.mxu0 0
      %722 = vmatpush1.bf16.xpose.msra.mxu0 0
      %723 = vmatprep.subr.bf16.mxu0 0
      %724 = vmatpush1.bf16.xpose.msra.mxu0 0
      %725 = vmatprep.subr.bf16.mxu0 0
      %726 = vmatpush1.bf16.xpose.msra.mxu0 0
      %727 = vmatprep.subr.bf16.mxu0 0
      %728 = vmatpush1.bf16.xpose.msra.mxu0 0
      %729 = vmatprep.mubr.bf16.mxu0 0
      %730 = vmatmul.mubr.bf16.gmra.mrb[0].mxu0 %v644
      %v731 = vpop.f32.mrb[0].mxu0
      %v732 = vadd.f32 %v624, %v731
      %v733 = vpop.f32.mrb[0].mxu0
      %v734 = vpop.f32.mrb[0].mxu0
      %v735 = vpop.f32.mrb[0].mxu0
      %736 = vdwg.mxu0
      %v739 = vunpack.c.l.b16 %v605
      %v740 = vunpack.c.l.b16 %v606
      %v741 = vpack.c.b16 %v740, %v739
      %v743 = vsel %vm642, %v741, 0
      %745 = vmatprep.subr.bf16.mxu0 0
      %746 = vmatpush1.bf16.xpose.msra.mxu0 %v743
      %747 = vmatprep.subr.bf16.mxu0 0
      %748 = vmatpush1.bf16.xpose.msra.mxu0 0
      %749 = vmatprep.subr.bf16.mxu0 0
      %750 = vmatpush1.bf16.xpose.msra.mxu0 0
      %751 = vmatprep.subr.bf16.mxu0 0
      %752 = vmatpush1.bf16.xpose.msra.mxu0 0
      %753 = vmatprep.subr.bf16.mxu0 0
      %754 = vmatpush1.bf16.xpose.msra.mxu0 0
      %755 = vmatprep.subr.bf16.mxu0 0
      %756 = vmatpush1.bf16.xpose.msra.mxu0 0
      %757 = vmatprep.subr.bf16.mxu0 0
      %758 = vmatpush1.bf16.xpose.msra.mxu0 0
      %759 = vmatprep.subr.bf16.mxu0 0
      %760 = vmatpush1.bf16.xpose.msra.mxu0 0
      %761 = vmatprep.subr.bf16.mxu0 0
      %762 = vmatpush1.bf16.xpose.msra.mxu0 0
      %763 = vmatprep.subr.bf16.mxu0 0
      %764 = vmatpush1.bf16.xpose.msra.mxu0 0
      %765 = vmatprep.subr.bf16.mxu0 0
      %766 = vmatpush1.bf16.xpose.msra.mxu0 0
      %767 = vmatprep.subr.bf16.mxu0 0
      %768 = vmatpush1.bf16.xpose.msra.mxu0 0
      %769 = vmatprep.subr.bf16.mxu0 0
      %770 = vmatpush1.bf16.xpose.msra.mxu0 0
      %771 = vmatprep.subr.bf16.mxu0 0
      %772 = vmatpush1.bf16.xpose.msra.mxu0 0
      %773 = vmatprep.subr.bf16.mxu0 0
      %774 = vmatpush1.bf16.xpose.msra.mxu0 0
      %775 = vmatprep.subr.bf16.mxu0 0
      %776 = vmatpush1.bf16.xpose.msra.mxu0 0
      %777 = vmatprep.mubr.bf16.mxu0 0
      %778 = vmatmul.mubr.bf16.gmra.mrb[0].mxu0 %v644
      %v779 = vpop.f32.mrb[0].mxu0
      %v780 = vadd.f32 %v628, %v779
      %v781 = vpop.f32.mrb[0].mxu0
      %v782 = vpop.f32.mrb[0].mxu0
      %v783 = vpop.f32.mrb[0].mxu0
      %784 = vdwg.mxu0
      %v787 = vunpack.c.l.b16 %v607
      %v788 = vunpack.c.l.b16 %v608
      %v789 = vpack.c.b16 %v788, %v787
      %v791 = vsel %vm642, %v789, 0
      %793 = vmatprep.subr.bf16.mxu0 0
      %794 = vmatpush1.bf16.xpose.msra.mxu0 %v791
      %795 = vmatprep.subr.bf16.mxu0 0
      %796 = vmatpush1.bf16.xpose.msra.mxu0 0
      %797 = vmatprep.subr.bf16.mxu0 0
      %798 = vmatpush1.bf16.xpose.msra.mxu0 0
      %799 = vmatprep.subr.bf16.mxu0 0
      %800 = vmatpush1.bf16.xpose.msra.mxu0 0
      %801 = vmatprep.subr.bf16.mxu0 0
      %802 = vmatpush1.bf16.xpose.msra.mxu0 0
      %803 = vmatprep.subr.bf16.mxu0 0
      %804 = vmatpush1.bf16.xpose.msra.mxu0 0
      %805 = vmatprep.subr.bf16.mxu0 0
      %806 = vmatpush1.bf16.xpose.msra.mxu0 0
      %807 = vmatprep.subr.bf16.mxu0 0
      %808 = vmatpush1.bf16.xpose.msra.mxu0 0
      %809 = vmatprep.subr.bf16.mxu0 0
      %810 = vmatpush1.bf16.xpose.msra.mxu0 0
      %811 = vmatprep.subr.bf16.mxu0 0
      %812 = vmatpush1.bf16.xpose.msra.mxu0 0
      %813 = vmatprep.subr.bf16.mxu0 0
      %814 = vmatpush1.bf16.xpose.msra.mxu0 0
      %815 = vmatprep.subr.bf16.mxu0 0
      %816 = vmatpush1.bf16.xpose.msra.mxu0 0
      %817 = vmatprep.subr.bf16.mxu0 0
      %818 = vmatpush1.bf16.xpose.msra.mxu0 0
      %819 = vmatprep.subr.bf16.mxu0 0
      %820 = vmatpush1.bf16.xpose.msra.mxu0 0
      %821 = vmatprep.subr.bf16.mxu0 0
      %822 = vmatpush1.bf16.xpose.msra.mxu0 0
      %823 = vmatprep.subr.bf16.mxu0 0
      %824 = vmatpush1.bf16.xpose.msra.mxu0 0
      %825 = vmatprep.mubr.bf16.mxu0 0
      %826 = vmatmul.mubr.bf16.gmra.mrb[0].mxu0 %v644
      %v827 = vpop.f32.mrb[0].mxu0
      %v828 = vadd.f32 %v632, %v827
      %v829 = vpop.f32.mrb[0].mxu0
      %v830 = vpop.f32.mrb[0].mxu0
      %v831 = vpop.f32.mrb[0].mxu0
      %832 = vdwg.mxu0
      %v833 = vld [vmem:[%s2] sm:$0xf]
      %v834 = vld [vmem:[%s2 + $0x4] sm:$0xf]
      %v835 = vld [vmem:[%s2 + $0x8] sm:$0xf]
      %v836 = vld [vmem:[%s2 + $0xc] sm:$0xf]
      %v837 = vld [vmem:[%s2 + $0x10] sm:$0xf]
      %v838 = vld [vmem:[%s2 + $0x14] sm:$0xf]
      %v839 = vld [vmem:[%s2 + $0x18] sm:$0xf]
      %v840 = vld [vmem:[%s2 + $0x1c] sm:$0xf]
      %v841 = vld [vmem:[%s5] sm:$0x1]
      %v842 = vld [vmem:[%s5 + $0x1] sm:$0x1]
      %v843 = vld [vmem:[%s5 + $0x2] sm:$0x1]
      %v844 = vld [vmem:[%s5 + $0x3] sm:$0x1]
      %v849 = vlaneseq
      %v850 = vshrl.u32 %v849, 7
      %v851 = vsub.s32 0, %v850
      %v852 = vrot.slane %v841, %v851
      %v853 = vlaneseq
      %v854 = vshrl.u32 %v853, 7
      %v855 = vsub.s32 0, %v854
      %v856 = vrot.slane %v842, %v855
      %v857 = vlaneseq
      %v858 = vshrl.u32 %v857, 7
      %v859 = vsub.s32 0, %v858
      %v860 = vrot.slane %v843, %v859
      %v861 = vlaneseq
      %v862 = vshrl.u32 %v861, 7
      %v863 = vsub.s32 0, %v862
      %v864 = vrot.slane %v844, %v863
      %v871 = vunpack.c.l.b16 %v833
      %v872 = vunpack.c.l.b16 %v834
      %v873 = vpack.c.b16 %v872, %v871
      %v875 = vsel %vm642, %v873, 0
      %877 = vmatprep.subr.bf16.mxu0 0
      %878 = vmatpush1.bf16.xpose.msra.mxu0 %v875
      %879 = vmatprep.subr.bf16.mxu0 0
      %880 = vmatpush1.bf16.xpose.msra.mxu0 0
      %881 = vmatprep.subr.bf16.mxu0 0
      %882 = vmatpush1.bf16.xpose.msra.mxu0 0
      %883 = vmatprep.subr.bf16.mxu0 0
      %884 = vmatpush1.bf16.xpose.msra.mxu0 0
      %885 = vmatprep.subr.bf16.mxu0 0
      %886 = vmatpush1.bf16.xpose.msra.mxu0 0
      %887 = vmatprep.subr.bf16.mxu0 0
      %888 = vmatpush1.bf16.xpose.msra.mxu0 0
      %889 = vmatprep.subr.bf16.mxu0 0
      %890 = vmatpush1.bf16.xpose.msra.mxu0 0
      %891 = vmatprep.subr.bf16.mxu0 0
      %892 = vmatpush1.bf16.xpose.msra.mxu0 0
      %893 = vmatprep.subr.bf16.mxu0 0
      %894 = vmatpush1.bf16.xpose.msra.mxu0 0
      %895 = vmatprep.subr.bf16.mxu0 0
      %896 = vmatpush1.bf16.xpose.msra.mxu0 0
      %897 = vmatprep.subr.bf16.mxu0 0
      %898 = vmatpush1.bf16.xpose.msra.mxu0 0
      %899 = vmatprep.subr.bf16.mxu0 0
      %900 = vmatpush1.bf16.xpose.msra.mxu0 0
      %901 = vmatprep.subr.bf16.mxu0 0
      %902 = vmatpush1.bf16.xpose.msra.mxu0 0
      %903 = vmatprep.subr.bf16.mxu0 0
      %904 = vmatpush1.bf16.xpose.msra.mxu0 0
      %905 = vmatprep.subr.bf16.mxu0 0
      %906 = vmatpush1.bf16.xpose.msra.mxu0 0
      %907 = vmatprep.subr.bf16.mxu0 0
      %908 = vmatpush1.bf16.xpose.msra.mxu0 0
      %909 = vmatprep.mubr.bf16.mxu0 0
      %910 = vmatmul.mubr.bf16.gmra.mrb[0].mxu0 %v644
      %v911 = vpop.f32.mrb[0].mxu0
      %v912 = vadd.f32 %v852, %v911
      %v913 = vpop.f32.mrb[0].mxu0
      %v914 = vpop.f32.mrb[0].mxu0
      %v915 = vpop.f32.mrb[0].mxu0
      %916 = vdwg.mxu0
      %v919 = vunpack.c.l.b16 %v835
      %v920 = vunpack.c.l.b16 %v836
      %v921 = vpack.c.b16 %v920, %v919
      %v923 = vsel %vm642, %v921, 0
      %925 = vmatprep.subr.bf16.mxu0 0
      %926 = vmatpush1.bf16.xpose.msra.mxu0 %v923
      %927 = vmatprep.subr.bf16.mxu0 0
      %928 = vmatpush1.bf16.xpose.msra.mxu0 0
      %929 = vmatprep.subr.bf16.mxu0 0
      %930 = vmatpush1.bf16.xpose.msra.mxu0 0
      %931 = vmatprep.subr.bf16.mxu0 0
      %932 = vmatpush1.bf16.xpose.msra.mxu0 0
      %933 = vmatprep.subr.bf16.mxu0 0
      %934 = vmatpush1.bf16.xpose.msra.mxu0 0
      %935 = vmatprep.subr.bf16.mxu0 0
      %936 = vmatpush1.bf16.xpose.msra.mxu0 0
      %937 = vmatprep.subr.bf16.mxu0 0
      %938 = vmatpush1.bf16.xpose.msra.mxu0 0
      %939 = vmatprep.subr.bf16.mxu0 0
      %940 = vmatpush1.bf16.xpose.msra.mxu0 0
      %941 = vmatprep.subr.bf16.mxu0 0
      %942 = vmatpush1.bf16.xpose.msra.mxu0 0
      %943 = vmatprep.subr.bf16.mxu0 0
      %944 = vmatpush1.bf16.xpose.msra.mxu0 0
      %945 = vmatprep.subr.bf16.mxu0 0
      %946 = vmatpush1.bf16.xpose.msra.mxu0 0
      %947 = vmatprep.subr.bf16.mxu0 0
      %948 = vmatpush1.bf16.xpose.msra.mxu0 0
      %949 = vmatprep.subr.bf16.mxu0 0
      %950 = vmatpush1.bf16.xpose.msra.mxu0 0
      %951 = vmatprep.subr.bf16.mxu0 0
      %952 = vmatpush1.bf16.xpose.msra.mxu0 0
      %953 = vmatprep.subr.bf16.mxu0 0
      %954 = vmatpush1.bf16.xpose.msra.mxu0 0
      %955 = vmatprep.subr.bf16.mxu0 0
      %956 = vmatpush1.bf16.xpose.msra.mxu0 0
      %957 = vmatprep.mubr.bf16.mxu0 0
      %958 = vmatmul.mubr.bf16.gmra.mrb[0].mxu0 %v644
      %v959 = vpop.f32.mrb[0].mxu0
      %v960 = vadd.f32 %v856, %v959
      %v961 = vpop.f32.mrb[0].mxu0
      %v962 = vpop.f32.mrb[0].mxu0
      %v963 = vpop.f32.mrb[0].mxu0
      %964 = vdwg.mxu0
      %v967 = vunpack.c.l.b16 %v837
      %v968 = vunpack.c.l.b16 %v838
      %v969 = vpack.c.b16 %v968, %v967
      %v971 = vsel %vm642, %v969, 0
      %973 = vmatprep.subr.bf16.mxu0 0
      %974 = vmatpush1.bf16.xpose.msra.mxu0 %v971
      %975 = vmatprep.subr.bf16.mxu0 0
      %976 = vmatpush1.bf16.xpose.msra.mxu0 0
      %977 = vmatprep.subr.bf16.mxu0 0
      %978 = vmatpush1.bf16.xpose.msra.mxu0 0
      %979 = vmatprep.subr.bf16.mxu0 0
      %980 = vmatpush1.bf16.xpose.msra.mxu0 0
      %981 = vmatprep.subr.bf16.mxu0 0
      %982 = vmatpush1.bf16.xpose.msra.mxu0 0
      %983 = vmatprep.subr.bf16.mxu0 0
      %984 = vmatpush1.bf16.xpose.msra.mxu0 0
      %985 = vmatprep.subr.bf16.mxu0 0
      %986 = vmatpush1.bf16.xpose.msra.mxu0 0
      %987 = vmatprep.subr.bf16.mxu0 0
      %988 = vmatpush1.bf16.xpose.msra.mxu0 0
      %989 = vmatprep.subr.bf16.mxu0 0
      %990 = vmatpush1.bf16.xpose.msra.mxu0 0
      %991 = vmatprep.subr.bf16.mxu0 0
      %992 = vmatpush1.bf16.xpose.msra.mxu0 0
      %993 = vmatprep.subr.bf16.mxu0 0
      %994 = vmatpush1.bf16.xpose.msra.mxu0 0
      %995 = vmatprep.subr.bf16.mxu0 0
      %996 = vmatpush1.bf16.xpose.msra.mxu0 0
      %997 = vmatprep.subr.bf16.mxu0 0
      %998 = vmatpush1.bf16.xpose.msra.mxu0 0
      %999 = vmatprep.subr.bf16.mxu0 0
      %1000 = vmatpush1.bf16.xpose.msra.mxu0 0
      %1001 = vmatprep.subr.bf16.mxu0 0
      %1002 = vmatpush1.bf16.xpose.msra.mxu0 0
      %1003 = vmatprep.subr.bf16.mxu0 0
      %1004 = vmatpush1.bf16.xpose.msra.mxu0 0
      %1005 = vmatprep.mubr.bf16.mxu0 0
      %1006 = vmatmul.mubr.bf16.gmra.mrb[0].mxu0 %v644
      %v1007 = vpop.f32.mrb[0].mxu0
      %v1008 = vadd.f32 %v860, %v1007
      %v1009 = vpop.f32.mrb[0].mxu0
      %v1010 = vpop.f32.mrb[0].mxu0
      %v1011 = vpop.f32.mrb[0].mxu0
      %1012 = vdwg.mxu0
      %v1015 = vunpack.c.l.b16 %v839
      %v1016 = vunpack.c.l.b16 %v840
      %v1017 = vpack.c.b16 %v1016, %v1015
      %v1019 = vsel %vm642, %v1017, 0
      %1021 = vmatprep.subr.bf16.mxu0 0
      %1022 = vmatpush1.bf16.xpose.msra.mxu0 %v1019
      %1023 = vmatprep.subr.bf16.mxu0 0
      %1024 = vmatpush1.bf16.xpose.msra.mxu0 0
      %1025 = vmatprep.subr.bf16.mxu0 0
      %1026 = vmatpush1.bf16.xpose.msra.mxu0 0
      %1027 = vmatprep.subr.bf16.mxu0 0
      %1028 = vmatpush1.bf16.xpose.msra.mxu0 0
      %1029 = vmatprep.subr.bf16.mxu0 0
      %1030 = vmatpush1.bf16.xpose.msra.mxu0 0
      %1031 = vmatprep.subr.bf16.mxu0 0
      %1032 = vmatpush1.bf16.xpose.msra.mxu0 0
      %1033 = vmatprep.subr.bf16.mxu0 0
      %1034 = vmatpush1.bf16.xpose.msra.mxu0 0
      %1035 = vmatprep.subr.bf16.mxu0 0
      %1036 = vmatpush1.bf16.xpose.msra.mxu0 0
      %1037 = vmatprep.subr.bf16.mxu0 0
      %1038 = vmatpush1.bf16.xpose.msra.mxu0 0
      %1039 = vmatprep.subr.bf16.mxu0 0
      %1040 = vmatpush1.bf16.xpose.msra.mxu0 0
      %1041 = vmatprep.subr.bf16.mxu0 0
      %1042 = vmatpush1.bf16.xpose.msra.mxu0 0
      %1043 = vmatprep.subr.bf16.mxu0 0
      %1044 = vmatpush1.bf16.xpose.msra.mxu0 0
      %1045 = vmatprep.subr.bf16.mxu0 0
      %1046 = vmatpush1.bf16.xpose.msra.mxu0 0
      %1047 = vmatprep.subr.bf16.mxu0 0
      %1048 = vmatpush1.bf16.xpose.msra.mxu0 0
      %1049 = vmatprep.subr.bf16.mxu0 0
      %1050 = vmatpush1.bf16.xpose.msra.mxu0 0
      %1051 = vmatprep.subr.bf16.mxu0 0
      %1052 = vmatpush1.bf16.xpose.msra.mxu0 0
      %1053 = vmatprep.mubr.bf16.mxu0 0
      %1054 = vmatmul.mubr.bf16.gmra.mrb[0].mxu0 %v644
      %v1055 = vpop.f32.mrb[0].mxu0
      %v1056 = vadd.f32 %v864, %v1055
      %v1057 = vpop.f32.mrb[0].mxu0
      %v1058 = vpop.f32.mrb[0].mxu0
      %v1059 = vpop.f32.mrb[0].mxu0
      %1060 = vdwg.mxu0
      %v1061 = vld [vmem:[%s3] sm:$0xf]
      %v1062 = vld [vmem:[%s3 + $0x4] sm:$0xf]
      %v1063 = vld [vmem:[%s3 + $0x8] sm:$0xf]
      %v1064 = vld [vmem:[%s3 + $0xc] sm:$0xf]
      %v1065 = vld [vmem:[%s3 + $0x10] sm:$0xf]
      %v1066 = vld [vmem:[%s3 + $0x14] sm:$0xf]
      %v1067 = vld [vmem:[%s3 + $0x18] sm:$0xf]
      %v1068 = vld [vmem:[%s3 + $0x1c] sm:$0xf]
      %v1069 = vld [vmem:[%s6] sm:$0x1]
      %v1070 = vld [vmem:[%s6 + $0x1] sm:$0x1]
      %v1071 = vld [vmem:[%s6 + $0x2] sm:$0x1]
      %v1072 = vld [vmem:[%s6 + $0x3] sm:$0x1]
      %v1077 = vlaneseq
      %v1078 = vshrl.u32 %v1077, 7
      %v1079 = vsub.s32 0, %v1078
      %v1080 = vrot.slane %v1069, %v1079
      %v1081 = vlaneseq
      %v1082 = vshrl.u32 %v1081, 7
      %v1083 = vsub.s32 0, %v1082
      %v1084 = vrot.slane %v1070, %v1083
      %v1085 = vlaneseq
      %v1086 = vshrl.u32 %v1085, 7
      %v1087 = vsub.s32 0, %v1086
      %v1088 = vrot.slane %v1071, %v1087
      %v1089 = vlaneseq
      %v1090 = vshrl.u32 %v1089, 7
      %v1091 = vsub.s32 0, %v1090
      %v1092 = vrot.slane %v1072, %v1091
      %v1099 = vunpack.c.l.b16 %v1061
      %v1100 = vunpack.c.l.b16 %v1062
      %v1101 = vpack.c.b16 %v1100, %v1099
      %v1103 = vsel %vm642, %v1101, 0
      %1105 = vmatprep.subr.bf16.mxu0 0
      %1106 = vmatpush1.bf16.xpose.msra.mxu0 %v1103
      %1107 = vmatprep.subr.bf16.mxu0 0
      %1108 = vmatpush1.bf16.xpose.msra.mxu0 0
      %1109 = vmatprep.subr.bf16.mxu0 0
      %1110 = vmatpush1.bf16.xpose.msra.mxu0 0
      %1111 = vmatprep.subr.bf16.mxu0 0
      %1112 = vmatpush1.bf16.xpose.msra.mxu0 0
      %1113 = vmatprep.subr.bf16.mxu0 0
      %1114 = vmatpush1.bf16.xpose.msra.mxu0 0
      %1115 = vmatprep.subr.bf16.mxu0 0
      %1116 = vmatpush1.bf16.xpose.msra.mxu0 0
      %1117 = vmatprep.subr.bf16.mxu0 0
      %1118 = vmatpush1.bf16.xpose.msra.mxu0 0
      %1119 = vmatprep.subr.bf16.mxu0 0
      %1120 = vmatpush1.bf16.xpose.msra.mxu0 0
      %1121 = vmatprep.subr.bf16.mxu0 0
      %1122 = vmatpush1.bf16.xpose.msra.mxu0 0
      %1123 = vmatprep.subr.bf16.mxu0 0
      %1124 = vmatpush1.bf16.xpose.msra.mxu0 0
      %1125 = vmatprep.subr.bf16.mxu0 0
      %1126 = vmatpush1.bf16.xpose.msra.mxu0 0
      %1127 = vmatprep.subr.bf16.mxu0 0
      %1128 = vmatpush1.bf16.xpose.msra.mxu0 0
      %1129 = vmatprep.subr.bf16.mxu0 0
      %1130 = vmatpush1.bf16.xpose.msra.mxu0 0
      %1131 = vmatprep.subr.bf16.mxu0 0
      %1132 = vmatpush1.bf16.xpose.msra.mxu0 0
      %1133 = vmatprep.subr.bf16.mxu0 0
      %1134 = vmatpush1.bf16.xpose.msra.mxu0 0
      %1135 = vmatprep.subr.bf16.mxu0 0
      %1136 = vmatpush1.bf16.xpose.msra.mxu0 0
      %1137 = vmatprep.mubr.bf16.mxu0 0
      %1138 = vmatmul.mubr.bf16.gmra.mrb[0].mxu0 %v644
      %v1139 = vpop.f32.mrb[0].mxu0
      %v1140 = vadd.f32 %v1080, %v1139
      %v1141 = vpop.f32.mrb[0].mxu0
      %v1142 = vpop.f32.mrb[0].mxu0
      %v1143 = vpop.f32.mrb[0].mxu0
      %1144 = vdwg.mxu0
      %v1147 = vunpack.c.l.b16 %v1063
      %v1148 = vunpack.c.l.b16 %v1064
      %v1149 = vpack.c.b16 %v1148, %v1147
      %v1151 = vsel %vm642, %v1149, 0
      %1153 = vmatprep.subr.bf16.mxu0 0
      %1154 = vmatpush1.bf16.xpose.msra.mxu0 %v1151
      %1155 = vmatprep.subr.bf16.mxu0 0
      %1156 = vmatpush1.bf16.xpose.msra.mxu0 0
      %1157 = vmatprep.subr.bf16.mxu0 0
      %1158 = vmatpush1.bf16.xpose.msra.mxu0 0
      %1159 = vmatprep.subr.bf16.mxu0 0
      %1160 = vmatpush1.bf16.xpose.msra.mxu0 0
      %1161 = vmatprep.subr.bf16.mxu0 0
      %1162 = vmatpush1.bf16.xpose.msra.mxu0 0
      %1163 = vmatprep.subr.bf16.mxu0 0
      %1164 = vmatpush1.bf16.xpose.msra.mxu0 0
      %1165 = vmatprep.subr.bf16.mxu0 0
      %1166 = vmatpush1.bf16.xpose.msra.mxu0 0
      %1167 = vmatprep.subr.bf16.mxu0 0
      %1168 = vmatpush1.bf16.xpose.msra.mxu0 0
      %1169 = vmatprep.subr.bf16.mxu0 0
      %1170 = vmatpush1.bf16.xpose.msra.mxu0 0
      %1171 = vmatprep.subr.bf16.mxu0 0
      %1172 = vmatpush1.bf16.xpose.msra.mxu0 0
      %1173 = vmatprep.subr.bf16.mxu0 0
      %1174 = vmatpush1.bf16.xpose.msra.mxu0 0
      %1175 = vmatprep.subr.bf16.mxu0 0
      %1176 = vmatpush1.bf16.xpose.msra.mxu0 0
      %1177 = vmatprep.subr.bf16.mxu0 0
      %1178 = vmatpush1.bf16.xpose.msra.mxu0 0
      %1179 = vmatprep.subr.bf16.mxu0 0
      %1180 = vmatpush1.bf16.xpose.msra.mxu0 0
      %1181 = vmatprep.subr.bf16.mxu0 0
      %1182 = vmatpush1.bf16.xpose.msra.mxu0 0
      %1183 = vmatprep.subr.bf16.mxu0 0
      %1184 = vmatpush1.bf16.xpose.msra.mxu0 0
      %1185 = vmatprep.mubr.bf16.mxu0 0
      %1186 = vmatmul.mubr.bf16.gmra.mrb[0].mxu0 %v644
      %v1187 = vpop.f32.mrb[0].mxu0
      %v1188 = vadd.f32 %v1084, %v1187
      %v1189 = vpop.f32.mrb[0].mxu0
      %v1190 = vpop.f32.mrb[0].mxu0
      %v1191 = vpop.f32.mrb[0].mxu0
      %1192 = vdwg.mxu0
      %v1195 = vunpack.c.l.b16 %v1065
      %v1196 = vunpack.c.l.b16 %v1066
      %v1197 = vpack.c.b16 %v1196, %v1195
      %v1199 = vsel %vm642, %v1197, 0
      %1201 = vmatprep.subr.bf16.mxu0 0
      %1202 = vmatpush1.bf16.xpose.msra.mxu0 %v1199
      %1203 = vmatprep.subr.bf16.mxu0 0
      %1204 = vmatpush1.bf16.xpose.msra.mxu0 0
      %1205 = vmatprep.subr.bf16.mxu0 0
      %1206 = vmatpush1.bf16.xpose.msra.mxu0 0
      %1207 = vmatprep.subr.bf16.mxu0 0
      %1208 = vmatpush1.bf16.xpose.msra.mxu0 0
      %1209 = vmatprep.subr.bf16.mxu0 0
      %1210 = vmatpush1.bf16.xpose.msra.mxu0 0
      %1211 = vmatprep.subr.bf16.mxu0 0
      %1212 = vmatpush1.bf16.xpose.msra.mxu0 0
      %1213 = vmatprep.subr.bf16.mxu0 0
      %1214 = vmatpush1.bf16.xpose.msra.mxu0 0
      %1215 = vmatprep.subr.bf16.mxu0 0
      %1216 = vmatpush1.bf16.xpose.msra.mxu0 0
      %1217 = vmatprep.subr.bf16.mxu0 0
      %1218 = vmatpush1.bf16.xpose.msra.mxu0 0
      %1219 = vmatprep.subr.bf16.mxu0 0
      %1220 = vmatpush1.bf16.xpose.msra.mxu0 0
      %1221 = vmatprep.subr.bf16.mxu0 0
      %1222 = vmatpush1.bf16.xpose.msra.mxu0 0
      %1223 = vmatprep.subr.bf16.mxu0 0
      %1224 = vmatpush1.bf16.xpose.msra.mxu0 0
      %1225 = vmatprep.subr.bf16.mxu0 0
      %1226 = vmatpush1.bf16.xpose.msra.mxu0 0
      %1227 = vmatprep.subr.bf16.mxu0 0
      %1228 = vmatpush1.bf16.xpose.msra.mxu0 0
      %1229 = vmatprep.subr.bf16.mxu0 0
      %1230 = vmatpush1.bf16.xpose.msra.mxu0 0
      %1231 = vmatprep.subr.bf16.mxu0 0
      %1232 = vmatpush1.bf16.xpose.msra.mxu0 0
      %1233 = vmatprep.mubr.bf16.mxu0 0
      %1234 = vmatmul.mubr.bf16.gmra.mrb[0].mxu0 %v644
      %v1235 = vpop.f32.mrb[0].mxu0
      %v1236 = vadd.f32 %v1088, %v1235
      %v1237 = vpop.f32.mrb[0].mxu0
      %v1238 = vpop.f32.mrb[0].mxu0
      %v1239 = vpop.f32.mrb[0].mxu0
      %1240 = vdwg.mxu0
      %v1243 = vunpack.c.l.b16 %v1067
      %v1244 = vunpack.c.l.b16 %v1068
      %v1245 = vpack.c.b16 %v1244, %v1243
      %v1247 = vsel %vm642, %v1245, 0
      %1249 = vmatprep.subr.bf16.mxu0 0
      %1250 = vmatpush1.bf16.xpose.msra.mxu0 %v1247
      %1251 = vmatprep.subr.bf16.mxu0 0
      %1252 = vmatpush1.bf16.xpose.msra.mxu0 0
      %1253 = vmatprep.subr.bf16.mxu0 0
      %1254 = vmatpush1.bf16.xpose.msra.mxu0 0
      %1255 = vmatprep.subr.bf16.mxu0 0
      %1256 = vmatpush1.bf16.xpose.msra.mxu0 0
      %1257 = vmatprep.subr.bf16.mxu0 0
      %1258 = vmatpush1.bf16.xpose.msra.mxu0 0
      %1259 = vmatprep.subr.bf16.mxu0 0
      %1260 = vmatpush1.bf16.xpose.msra.mxu0 0
      %1261 = vmatprep.subr.bf16.mxu0 0
      %1262 = vmatpush1.bf16.xpose.msra.mxu0 0
      %1263 = vmatprep.subr.bf16.mxu0 0
      %1264 = vmatpush1.bf16.xpose.msra.mxu0 0
      %1265 = vmatprep.subr.bf16.mxu0 0
      %1266 = vmatpush1.bf16.xpose.msra.mxu0 0
      %1267 = vmatprep.subr.bf16.mxu0 0
      %1268 = vmatpush1.bf16.xpose.msra.mxu0 0
      %1269 = vmatprep.subr.bf16.mxu0 0
      %1270 = vmatpush1.bf16.xpose.msra.mxu0 0
      %1271 = vmatprep.subr.bf16.mxu0 0
      %1272 = vmatpush1.bf16.xpose.msra.mxu0 0
      %1273 = vmatprep.subr.bf16.mxu0 0
      %1274 = vmatpush1.bf16.xpose.msra.mxu0 0
      %1275 = vmatprep.subr.bf16.mxu0 0
      %1276 = vmatpush1.bf16.xpose.msra.mxu0 0
      %1277 = vmatprep.subr.bf16.mxu0 0
      %1278 = vmatpush1.bf16.xpose.msra.mxu0 0
      %1279 = vmatprep.subr.bf16.mxu0 0
      %1280 = vmatpush1.bf16.xpose.msra.mxu0 0
      %1281 = vmatprep.mubr.bf16.mxu0 0
      %1282 = vmatmul.mubr.bf16.gmra.mrb[0].mxu0 %v644
      %v1283 = vpop.f32.mrb[0].mxu0
      %v1284 = vadd.f32 %v1092, %v1283
      %v1285 = vpop.f32.mrb[0].mxu0
      %v1286 = vpop.f32.mrb[0].mxu0
      %v1287 = vpop.f32.mrb[0].mxu0
      %1288 = vdwg.mxu0
      %v1289 = vpack.c.bf16 %v684, %v684
      %v1290 = vpack.c.bf16 %v732, %v732
      %v1291 = vpack.c.bf16 %v780, %v780
      %v1292 = vpack.c.bf16 %v828, %v828
      %v1293 = vpack.c.bf16 %v912, %v912
      %v1294 = vpack.c.bf16 %v960, %v960
      %v1295 = vpack.c.bf16 %v1008, %v1008
      %v1296 = vpack.c.bf16 %v1056, %v1056
      %vm1297 = vcmask 130048
      %v1299 = vsel %vm1297, %v1289, 0
      %v1302 = vsel %vm1297, %v1293, 0
      %1304 = vmatprep.subr.bf16.mxu0 0
      %1305 = vmatpush1.bf16.xpose.msra.mxu0 %v1302
      %1306 = vmatprep.subr.bf16.mxu0 0
      %1307 = vmatpush1.bf16.xpose.msra.mxu0 0
      %1308 = vmatprep.subr.bf16.mxu0 0
      %1309 = vmatpush1.bf16.xpose.msra.mxu0 0
      %1310 = vmatprep.subr.bf16.mxu0 0
      %1311 = vmatpush1.bf16.xpose.msra.mxu0 0
      %1312 = vmatprep.subr.bf16.mxu0 0
      %1313 = vmatpush1.bf16.xpose.msra.mxu0 0
      %1314 = vmatprep.subr.bf16.mxu0 0
      %1315 = vmatpush1.bf16.xpose.msra.mxu0 0
      %1316 = vmatprep.subr.bf16.mxu0 0
      %1317 = vmatpush1.bf16.xpose.msra.mxu0 0
      %1318 = vmatprep.subr.bf16.mxu0 0
      %1319 = vmatpush1.bf16.xpose.msra.mxu0 0
      %1320 = vmatprep.subr.bf16.mxu0 0
      %1321 = vmatpush1.bf16.xpose.msra.mxu0 0
      %1322 = vmatprep.subr.bf16.mxu0 0
      %1323 = vmatpush1.bf16.xpose.msra.mxu0 0
      %1324 = vmatprep.subr.bf16.mxu0 0
      %1325 = vmatpush1.bf16.xpose.msra.mxu0 0
      %1326 = vmatprep.subr.bf16.mxu0 0
      %1327 = vmatpush1.bf16.xpose.msra.mxu0 0
      %1328 = vmatprep.subr.bf16.mxu0 0
      %1329 = vmatpush1.bf16.xpose.msra.mxu0 0
      %1330 = vmatprep.subr.bf16.mxu0 0
      %1331 = vmatpush1.bf16.xpose.msra.mxu0 0
      %1332 = vmatprep.subr.bf16.mxu0 0
      %1333 = vmatpush1.bf16.xpose.msra.mxu0 0
      %1334 = vmatprep.subr.bf16.mxu0 0
      %1335 = vmatpush1.bf16.xpose.msra.mxu0 0
      %1336 = vmatprep.mubr.bf16.mxu0 0
      %1337 = vmatmul.mubr.bf16.gmra.mrb[0].mxu0 %v1299
      %v1338 = vpop.f32.mrb[0].mxu0
      %v1339 = vadd.f32 0.0, %v1338
      %v1340 = vpop.f32.mrb[0].mxu0
      %v1341 = vpop.f32.mrb[0].mxu0
      %v1342 = vpop.f32.mrb[0].mxu0
      %1343 = vdwg.mxu0
      %v1345 = vsel %vm1297, %v1290, 0
      %v1348 = vsel %vm1297, %v1294, 0
      %1350 = vmatprep.subr.bf16.mxu0 0
      %1351 = vmatpush1.bf16.xpose.msra.mxu0 %v1348
      %1352 = vmatprep.subr.bf16.mxu0 0
      %1353 = vmatpush1.bf16.xpose.msra.mxu0 0
      %1354 = vmatprep.subr.bf16.mxu0 0
      %1355 = vmatpush1.bf16.xpose.msra.mxu0 0
      %1356 = vmatprep.subr.bf16.mxu0 0
      %1357 = vmatpush1.bf16.xpose.msra.mxu0 0
      %1358 = vmatprep.subr.bf16.mxu0 0
      %1359 = vmatpush1.bf16.xpose.msra.mxu0 0
      %1360 = vmatprep.subr.bf16.mxu0 0
      %1361 = vmatpush1.bf16.xpose.msra.mxu0 0
      %1362 = vmatprep.subr.bf16.mxu0 0
      %1363 = vmatpush1.bf16.xpose.msra.mxu0 0
      %1364 = vmatprep.subr.bf16.mxu0 0
      %1365 = vmatpush1.bf16.xpose.msra.mxu0 0
      %1366 = vmatprep.subr.bf16.mxu0 0
      %1367 = vmatpush1.bf16.xpose.msra.mxu0 0
      %1368 = vmatprep.subr.bf16.mxu0 0
      %1369 = vmatpush1.bf16.xpose.msra.mxu0 0
      %1370 = vmatprep.subr.bf16.mxu0 0
      %1371 = vmatpush1.bf16.xpose.msra.mxu0 0
      %1372 = vmatprep.subr.bf16.mxu0 0
      %1373 = vmatpush1.bf16.xpose.msra.mxu0 0
      %1374 = vmatprep.subr.bf16.mxu0 0
      %1375 = vmatpush1.bf16.xpose.msra.mxu0 0
      %1376 = vmatprep.subr.bf16.mxu0 0
      %1377 = vmatpush1.bf16.xpose.msra.mxu0 0
      %1378 = vmatprep.subr.bf16.mxu0 0
      %1379 = vmatpush1.bf16.xpose.msra.mxu0 0
      %1380 = vmatprep.subr.bf16.mxu0 0
      %1381 = vmatpush1.bf16.xpose.msra.mxu0 0
      %1382 = vmatprep.mubr.bf16.mxu0 0
      %1383 = vmatmul.mubr.bf16.gmra.mrb[0].mxu0 %v1345
      %v1384 = vpop.f32.mrb[0].mxu0
      %v1385 = vadd.f32 0.0, %v1384
      %v1386 = vpop.f32.mrb[0].mxu0
      %v1387 = vpop.f32.mrb[0].mxu0
      %v1388 = vpop.f32.mrb[0].mxu0
      %1389 = vdwg.mxu0
      %v1391 = vsel %vm1297, %v1291, 0
      %v1394 = vsel %vm1297, %v1295, 0
      %1396 = vmatprep.subr.bf16.mxu0 0
      %1397 = vmatpush1.bf16.xpose.msra.mxu0 %v1394
      %1398 = vmatprep.subr.bf16.mxu0 0
      %1399 = vmatpush1.bf16.xpose.msra.mxu0 0
      %1400 = vmatprep.subr.bf16.mxu0 0
      %1401 = vmatpush1.bf16.xpose.msra.mxu0 0
      %1402 = vmatprep.subr.bf16.mxu0 0
      %1403 = vmatpush1.bf16.xpose.msra.mxu0 0
      %1404 = vmatprep.subr.bf16.mxu0 0
      %1405 = vmatpush1.bf16.xpose.msra.mxu0 0
      %1406 = vmatprep.subr.bf16.mxu0 0
      %1407 = vmatpush1.bf16.xpose.msra.mxu0 0
      %1408 = vmatprep.subr.bf16.mxu0 0
      %1409 = vmatpush1.bf16.xpose.msra.mxu0 0
      %1410 = vmatprep.subr.bf16.mxu0 0
      %1411 = vmatpush1.bf16.xpose.msra.mxu0 0
      %1412 = vmatprep.subr.bf16.mxu0 0
      %1413 = vmatpush1.bf16.xpose.msra.mxu0 0
      %1414 = vmatprep.subr.bf16.mxu0 0
      %1415 = vmatpush1.bf16.xpose.msra.mxu0 0
      %1416 = vmatprep.subr.bf16.mxu0 0
      %1417 = vmatpush1.bf16.xpose.msra.mxu0 0
      %1418 = vmatprep.subr.bf16.mxu0 0
      %1419 = vmatpush1.bf16.xpose.msra.mxu0 0
      %1420 = vmatprep.subr.bf16.mxu0 0
      %1421 = vmatpush1.bf16.xpose.msra.mxu0 0
      %1422 = vmatprep.subr.bf16.mxu0 0
      %1423 = vmatpush1.bf16.xpose.msra.mxu0 0
      %1424 = vmatprep.subr.bf16.mxu0 0
      %1425 = vmatpush1.bf16.xpose.msra.mxu0 0
      %1426 = vmatprep.subr.bf16.mxu0 0
      %1427 = vmatpush1.bf16.xpose.msra.mxu0 0
      %1428 = vmatprep.mubr.bf16.mxu0 0
      %1429 = vmatmul.mubr.bf16.gmra.mrb[0].mxu0 %v1391
      %v1430 = vpop.f32.mrb[0].mxu0
      %v1431 = vadd.f32 0.0, %v1430
      %v1432 = vpop.f32.mrb[0].mxu0
      %v1433 = vpop.f32.mrb[0].mxu0
      %v1434 = vpop.f32.mrb[0].mxu0
      %1435 = vdwg.mxu0
      %v1437 = vsel %vm1297, %v1292, 0
      %v1440 = vsel %vm1297, %v1296, 0
      %1442 = vmatprep.subr.bf16.mxu0 0
      %1443 = vmatpush1.bf16.xpose.msra.mxu0 %v1440
      %1444 = vmatprep.subr.bf16.mxu0 0
      %1445 = vmatpush1.bf16.xpose.msra.mxu0 0
      %1446 = vmatprep.subr.bf16.mxu0 0
      %1447 = vmatpush1.bf16.xpose.msra.mxu0 0
      %1448 = vmatprep.subr.bf16.mxu0 0
      %1449 = vmatpush1.bf16.xpose.msra.mxu0 0
      %1450 = vmatprep.subr.bf16.mxu0 0
      %1451 = vmatpush1.bf16.xpose.msra.mxu0 0
      %1452 = vmatprep.subr.bf16.mxu0 0
      %1453 = vmatpush1.bf16.xpose.msra.mxu0 0
      %1454 = vmatprep.subr.bf16.mxu0 0
      %1455 = vmatpush1.bf16.xpose.msra.mxu0 0
      %1456 = vmatprep.subr.bf16.mxu0 0
      %1457 = vmatpush1.bf16.xpose.msra.mxu0 0
      %1458 = vmatprep.subr.bf16.mxu0 0
      %1459 = vmatpush1.bf16.xpose.msra.mxu0 0
      %1460 = vmatprep.subr.bf16.mxu0 0
      %1461 = vmatpush1.bf16.xpose.msra.mxu0 0
      %1462 = vmatprep.subr.bf16.mxu0 0
      %1463 = vmatpush1.bf16.xpose.msra.mxu0 0
      %1464 = vmatprep.subr.bf16.mxu0 0
      %1465 = vmatpush1.bf16.xpose.msra.mxu0 0
      %1466 = vmatprep.subr.bf16.mxu0 0
      %1467 = vmatpush1.bf16.xpose.msra.mxu0 0
      %1468 = vmatprep.subr.bf16.mxu0 0
      %1469 = vmatpush1.bf16.xpose.msra.mxu0 0
      %1470 = vmatprep.subr.bf16.mxu0 0
      %1471 = vmatpush1.bf16.xpose.msra.mxu0 0
      %1472 = vmatprep.subr.bf16.mxu0 0
      %1473 = vmatpush1.bf16.xpose.msra.mxu0 0
      %1474 = vmatprep.mubr.bf16.mxu0 0
      %1475 = vmatmul.mubr.bf16.gmra.mrb[0].mxu0 %v1437
      %v1476 = vpop.f32.mrb[0].mxu0
      %v1477 = vadd.f32 0.0, %v1476
      %v1478 = vpop.f32.mrb[0].mxu0
      %v1479 = vpop.f32.mrb[0].mxu0
      %v1480 = vpop.f32.mrb[0].mxu0
      %1481 = vdwg.mxu0
      %vm1482 = vcmask 64512
      %v1483 = vsel %vm1482, %v1339, -inf
      %1484 = vmax.xlane.f32.xlu0 %v1483
      %v1485 = vpop.xlane.xlu0 %1484
      %v1486 = vsel %vm1482, %v1385, -inf
      %1487 = vmax.xlane.f32.xlu0 %v1486
      %v1488 = vpop.xlane.xlu0 %1487
      %v1489 = vsel %vm1482, %v1431, -inf
      %1490 = vmax.xlane.f32.xlu0 %v1489
      %v1491 = vpop.xlane.xlu0 %1490
      %v1492 = vsel %vm1482, %v1477, -inf
      %1493 = vmax.xlane.f32.xlu0 %v1492
      %v1494 = vpop.xlane.xlu0 %1493
      %v1495 = vsub.f32 %v1339, %v1485
      %v1496 = vsub.f32 %v1385, %v1488
      %v1497 = vsub.f32 %v1431, %v1491
      %v1498 = vsub.f32 %v1477, %v1494
      %v1499 = vmul.f32 %v1495, 1.442695
      %v1500 = vpow.pop %v1499
      %v1501 = vmul.f32 %v1496, 1.442695
      %v1502 = vpow.pop %v1501
      %v1503 = vmul.f32 %v1497, 1.442695
      %v1504 = vpow.pop %v1503
      %v1505 = vmul.f32 %v1498, 1.442695
      %v1506 = vpow.pop %v1505
      %v1507 = vsel %vm1482, %v1500, 0.0
      %1508 = vadd.xlane.f32.xlu0 %v1507
      %v1509 = vpop.xlane.xlu0 %1508
      %v1510 = vsel %vm1482, %v1502, 0.0
      %1511 = vadd.xlane.f32.xlu0 %v1510
      %v1512 = vpop.xlane.xlu0 %1511
      %v1513 = vsel %vm1482, %v1504, 0.0
      %1514 = vadd.xlane.f32.xlu0 %v1513
      %v1515 = vpop.xlane.xlu0 %1514
      %v1516 = vsel %vm1482, %v1506, 0.0
      %1517 = vadd.xlane.f32.xlu0 %v1516
      %v1518 = vpop.xlane.xlu0 %1517
      %v1519 = vrcp.pop %v1509
      %v1520 = vrcp.pop %v1512
      %v1521 = vrcp.pop %v1515
      %v1522 = vrcp.pop %v1518
      %v1523 = vmul.f32 %v1500, %v1519
      %v1524 = vmul.f32 %v1502, %v1520
      %v1525 = vmul.f32 %v1504, %v1521
      %v1526 = vmul.f32 %v1506, %v1522
      %v1527 = vpack.c.bf16 %v1523, %v1523
      %v1528 = vpack.c.bf16 %v1524, %v1524
      %v1529 = vpack.c.bf16 %v1525, %v1525
      %v1530 = vpack.c.bf16 %v1526, %v1526
      %v1531 = vpack.c.bf16 %v1140, %v1140
      %v1532 = vpack.c.bf16 %v1188, %v1188
      %v1533 = vpack.c.bf16 %v1236, %v1236
      %v1534 = vpack.c.bf16 %v1284, %v1284
      %v1536 = vsel %vm1482, %v1527, 0
      %vm1538 = vcmask 1043456
      %v1540 = vsel %vm1538, %v1531, 0
      %1542 = vmatprep.subr.bf16.mxu0 0
      %1543 = vmatpush1.bf16.msra.mxu0 %v1540
      %1544 = vmatprep.subr.bf16.mxu0 0
      %1545 = vmatpush1.bf16.msra.mxu0 0
      %1546 = vmatprep.subr.bf16.mxu0 0
      %1547 = vmatpush1.bf16.msra.mxu0 0
      %1548 = vmatprep.subr.bf16.mxu0 0
      %1549 = vmatpush1.bf16.msra.mxu0 0
      %1550 = vmatprep.subr.bf16.mxu0 0
      %1551 = vmatpush1.bf16.msra.mxu0 0
      %1552 = vmatprep.subr.bf16.mxu0 0
      %1553 = vmatpush1.bf16.msra.mxu0 0
      %1554 = vmatprep.subr.bf16.mxu0 0
      %1555 = vmatpush1.bf16.msra.mxu0 0
      %1556 = vmatprep.subr.bf16.mxu0 0
      %1557 = vmatpush1.bf16.msra.mxu0 0
      %1558 = vmatprep.subr.bf16.mxu0 0
      %1559 = vmatpush1.bf16.msra.mxu0 0
      %1560 = vmatprep.subr.bf16.mxu0 0
      %1561 = vmatpush1.bf16.msra.mxu0 0
      %1562 = vmatprep.subr.bf16.mxu0 0
      %1563 = vmatpush1.bf16.msra.mxu0 0
      %1564 = vmatprep.subr.bf16.mxu0 0
      %1565 = vmatpush1.bf16.msra.mxu0 0
      %1566 = vmatprep.subr.bf16.mxu0 0
      %1567 = vmatpush1.bf16.msra.mxu0 0
      %1568 = vmatprep.subr.bf16.mxu0 0
      %1569 = vmatpush1.bf16.msra.mxu0 0
      %1570 = vmatprep.subr.bf16.mxu0 0
      %1571 = vmatpush1.bf16.msra.mxu0 0
      %1572 = vmatprep.subr.bf16.mxu0 0
      %1573 = vmatpush1.bf16.msra.mxu0 0
      %1574 = vmatprep.mubr.bf16.mxu0 0
      %1575 = vmatmul.mubr.bf16.gmra.mrb[0].mxu0 %v1536
      %v1576 = vpop.f32.mrb[0].mxu0
      %v1577 = vadd.f32 0.0, %v1576
      %v1578 = vpop.f32.mrb[0].mxu0
      %v1579 = vpop.f32.mrb[0].mxu0
      %v1580 = vpop.f32.mrb[0].mxu0
      %1581 = vdwg.mxu0
      %v1583 = vsel %vm1482, %v1528, 0
      %v1586 = vsel %vm1538, %v1532, 0
      %1588 = vmatprep.subr.bf16.mxu0 0
      %1589 = vmatpush1.bf16.msra.mxu0 %v1586
      %1590 = vmatprep.subr.bf16.mxu0 0
      %1591 = vmatpush1.bf16.msra.mxu0 0
      %1592 = vmatprep.subr.bf16.mxu0 0
      %1593 = vmatpush1.bf16.msra.mxu0 0
      %1594 = vmatprep.subr.bf16.mxu0 0
      %1595 = vmatpush1.bf16.msra.mxu0 0
      %1596 = vmatprep.subr.bf16.mxu0 0
      %1597 = vmatpush1.bf16.msra.mxu0 0
      %1598 = vmatprep.subr.bf16.mxu0 0
      %1599 = vmatpush1.bf16.msra.mxu0 0
      %1600 = vmatprep.subr.bf16.mxu0 0
      %1601 = vmatpush1.bf16.msra.mxu0 0
      %1602 = vmatprep.subr.bf16.mxu0 0
      %1603 = vmatpush1.bf16.msra.mxu0 0
      %1604 = vmatprep.subr.bf16.mxu0 0
      %1605 = vmatpush1.bf16.msra.mxu0 0
      %1606 = vmatprep.subr.bf16.mxu0 0
      %1607 = vmatpush1.bf16.msra.mxu0 0
      %1608 = vmatprep.subr.bf16.mxu0 0
      %1609 = vmatpush1.bf16.msra.mxu0 0
      %1610 = vmatprep.subr.bf16.mxu0 0
      %1611 = vmatpush1.bf16.msra.mxu0 0
      %1612 = vmatprep.subr.bf16.mxu0 0
      %1613 = vmatpush1.bf16.msra.mxu0 0
      %1614 = vmatprep.subr.bf16.mxu0 0
      %1615 = vmatpush1.bf16.msra.mxu0 0
      %1616 = vmatprep.subr.bf16.mxu0 0
      %1617 = vmatpush1.bf16.msra.mxu0 0
      %1618 = vmatprep.subr.bf16.mxu0 0
      %1619 = vmatpush1.bf16.msra.mxu0 0
      %1620 = vmatprep.mubr.bf16.mxu0 0
      %1621 = vmatmul.mubr.bf16.gmra.mrb[0].mxu0 %v1583
      %v1622 = vpop.f32.mrb[0].mxu0
      %v1623 = vadd.f32 0.0, %v1622
      %v1624 = vpop.f32.mrb[0].mxu0
      %v1625 = vpop.f32.mrb[0].mxu0
      %v1626 = vpop.f32.mrb[0].mxu0
      %1627 = vdwg.mxu0
      %v1629 = vsel %vm1482, %v1529, 0
      %v1632 = vsel %vm1538, %v1533, 0
      %1634 = vmatprep.subr.bf16.mxu0 0
      %1635 = vmatpush1.bf16.msra.mxu0 %v1632
      %1636 = vmatprep.subr.bf16.mxu0 0
      %1637 = vmatpush1.bf16.msra.mxu0 0
      %1638 = vmatprep.subr.bf16.mxu0 0
      %1639 = vmatpush1.bf16.msra.mxu0 0
      %1640 = vmatprep.subr.bf16.mxu0 0
      %1641 = vmatpush1.bf16.msra.mxu0 0
      %1642 = vmatprep.subr.bf16.mxu0 0
      %1643 = vmatpush1.bf16.msra.mxu0 0
      %1644 = vmatprep.subr.bf16.mxu0 0
      %1645 = vmatpush1.bf16.msra.mxu0 0
      %1646 = vmatprep.subr.bf16.mxu0 0
      %1647 = vmatpush1.bf16.msra.mxu0 0
      %1648 = vmatprep.subr.bf16.mxu0 0
      %1649 = vmatpush1.bf16.msra.mxu0 0
      %1650 = vmatprep.subr.bf16.mxu0 0
      %1651 = vmatpush1.bf16.msra.mxu0 0
      %1652 = vmatprep.subr.bf16.mxu0 0
      %1653 = vmatpush1.bf16.msra.mxu0 0
      %1654 = vmatprep.subr.bf16.mxu0 0
      %1655 = vmatpush1.bf16.msra.mxu0 0
      %1656 = vmatprep.subr.bf16.mxu0 0
      %1657 = vmatpush1.bf16.msra.mxu0 0
      %1658 = vmatprep.subr.bf16.mxu0 0
      %1659 = vmatpush1.bf16.msra.mxu0 0
      %1660 = vmatprep.subr.bf16.mxu0 0
      %1661 = vmatpush1.bf16.msra.mxu0 0
      %1662 = vmatprep.subr.bf16.mxu0 0
      %1663 = vmatpush1.bf16.msra.mxu0 0
      %1664 = vmatprep.subr.bf16.mxu0 0
      %1665 = vmatpush1.bf16.msra.mxu0 0
      %1666 = vmatprep.mubr.bf16.mxu0 0
      %1667 = vmatmul.mubr.bf16.gmra.mrb[0].mxu0 %v1629
      %v1668 = vpop.f32.mrb[0].mxu0
      %v1669 = vadd.f32 0.0, %v1668
      %v1670 = vpop.f32.mrb[0].mxu0
      %v1671 = vpop.f32.mrb[0].mxu0
      %v1672 = vpop.f32.mrb[0].mxu0
      %1673 = vdwg.mxu0
      %v1675 = vsel %vm1482, %v1530, 0
      %v1678 = vsel %vm1538, %v1534, 0
      %1680 = vmatprep.subr.bf16.mxu0 0
      %1681 = vmatpush1.bf16.msra.mxu0 %v1678
      %1682 = vmatprep.subr.bf16.mxu0 0
      %1683 = vmatpush1.bf16.msra.mxu0 0
      %1684 = vmatprep.subr.bf16.mxu0 0
      %1685 = vmatpush1.bf16.msra.mxu0 0
      %1686 = vmatprep.subr.bf16.mxu0 0
      %1687 = vmatpush1.bf16.msra.mxu0 0
      %1688 = vmatprep.subr.bf16.mxu0 0
      %1689 = vmatpush1.bf16.msra.mxu0 0
      %1690 = vmatprep.subr.bf16.mxu0 0
      %1691 = vmatpush1.bf16.msra.mxu0 0
      %1692 = vmatprep.subr.bf16.mxu0 0
      %1693 = vmatpush1.bf16.msra.mxu0 0
      %1694 = vmatprep.subr.bf16.mxu0 0
      %1695 = vmatpush1.bf16.msra.mxu0 0
      %1696 = vmatprep.subr.bf16.mxu0 0
      %1697 = vmatpush1.bf16.msra.mxu0 0
      %1698 = vmatprep.subr.bf16.mxu0 0
      %1699 = vmatpush1.bf16.msra.mxu0 0
      %1700 = vmatprep.subr.bf16.mxu0 0
      %1701 = vmatpush1.bf16.msra.mxu0 0
      %1702 = vmatprep.subr.bf16.mxu0 0
      %1703 = vmatpush1.bf16.msra.mxu0 0
      %1704 = vmatprep.subr.bf16.mxu0 0
      %1705 = vmatpush1.bf16.msra.mxu0 0
      %1706 = vmatprep.subr.bf16.mxu0 0
      %1707 = vmatpush1.bf16.msra.mxu0 0
      %1708 = vmatprep.subr.bf16.mxu0 0
      %1709 = vmatpush1.bf16.msra.mxu0 0
      %1710 = vmatprep.subr.bf16.mxu0 0
      %1711 = vmatpush1.bf16.msra.mxu0 0
      %1712 = vmatprep.mubr.bf16.mxu0 0
      %1713 = vmatmul.mubr.bf16.gmra.mrb[0].mxu0 %v1675
      %v1714 = vpop.f32.mrb[0].mxu0
      %v1715 = vadd.f32 0.0, %v1714
      %v1716 = vpop.f32.mrb[0].mxu0
      %v1717 = vpop.f32.mrb[0].mxu0
      %v1718 = vpop.f32.mrb[0].mxu0
      %1719 = vdwg.mxu0
      %v1720 = vpack.c.bf16 %v1577, %v1577
      %v1721 = vpack.c.bf16 %v1623, %v1623
      %v1722 = vpack.c.bf16 %v1669, %v1669
      %v1723 = vpack.c.bf16 %v1715, %v1715
      %v1724 = vld [vmem:[%s7] sm:$0xf]
      %v1725 = vld [vmem:[%s7 + $0x4] sm:$0xf]
      %v1726 = vld [vmem:[%s7 + $0x8] sm:$0xf]
      %v1727 = vld [vmem:[%s7 + $0xc] sm:$0xf]
      %v1728 = vld [vmem:[%s7 + $0x10] sm:$0xf]
      %v1729 = vld [vmem:[%s7 + $0x14] sm:$0xf]
      %v1730 = vld [vmem:[%s7 + $0x18] sm:$0xf]
      %v1731 = vld [vmem:[%s7 + $0x1c] sm:$0xf]
      %v1732 = vld [vmem:[%s7 + $0x20] sm:$0xf]
      %v1733 = vld [vmem:[%s7 + $0x24] sm:$0xf]
      %v1734 = vld [vmem:[%s7 + $0x28] sm:$0xf]
      %v1735 = vld [vmem:[%s7 + $0x2c] sm:$0xf]
      %v1736 = vld [vmem:[%s7 + $0x30] sm:$0xf]
      %v1737 = vld [vmem:[%s7 + $0x34] sm:$0xf]
      %v1738 = vld [vmem:[%s7 + $0x38] sm:$0xf]
      %v1739 = vld [vmem:[%s7 + $0x3c] sm:$0xf]
      %v1740 = vld [vmem:[%s7 + $0x40] sm:$0xf]
      %v1741 = vld [vmem:[%s7 + $0x44] sm:$0xf]
      %v1742 = vld [vmem:[%s7 + $0x48] sm:$0xf]
      %v1743 = vld [vmem:[%s7 + $0x4c] sm:$0xf]
      %v1744 = vld [vmem:[%s7 + $0x50] sm:$0xf]
      %v1745 = vld [vmem:[%s7 + $0x54] sm:$0xf]
      %v1746 = vld [vmem:[%s7 + $0x58] sm:$0xf]
      %v1747 = vld [vmem:[%s7 + $0x5c] sm:$0xf]
      %v1748 = vld [vmem:[%s7 + $0x60] sm:$0xf]
      %v1749 = vld [vmem:[%s7 + $0x64] sm:$0xf]
      %v1750 = vld [vmem:[%s7 + $0x68] sm:$0xf]
      %v1751 = vld [vmem:[%s7 + $0x6c] sm:$0xf]
      %v1752 = vld [vmem:[%s7 + $0x70] sm:$0xf]
      %v1753 = vld [vmem:[%s7 + $0x74] sm:$0xf]
      %v1754 = vld [vmem:[%s7 + $0x78] sm:$0xf]
      %v1755 = vld [vmem:[%s7 + $0x7c] sm:$0xf]
      %v1764 = vunpack.c.l.b16 %v1724
      %v1765 = vunpack.c.l.b16 %v1725
      %v1766 = vunpack.c.l.b16 %v1726
      %v1767 = vunpack.c.l.b16 %v1727
      %v1768 = vunpack.c.l.b16 %v1728
      %v1769 = vunpack.c.l.b16 %v1729
      %v1770 = vunpack.c.l.b16 %v1730
      %v1771 = vunpack.c.l.b16 %v1731
      %v1772 = vpack.c.b16 %v1765, %v1764
      %v1773 = vpack.c.b16 %v1767, %v1766
      %v1774 = vpack.c.b16 %v1769, %v1768
      %v1775 = vpack.c.b16 %v1771, %v1770
      %v1777 = vsel %vm1297, %v1720, 0
      %v1780 = vsel %vm1297, %v1772, 0
      %v1783 = vsel %vm1297, %v1773, 0
      %v1786 = vsel %vm1297, %v1774, 0
      %v1789 = vsel %vm1297, %v1775, 0
      %1791 = vmatprep.subr.bf16.mxu0 0
      %1792 = vmatpush1.bf16.xpose.msra.mxu0 %v1780
      %1793 = vmatprep.subr.bf16.mxu0 0
      %1794 = vmatpush1.bf16.xpose.msra.mxu0 %v1783
      %1795 = vmatprep.subr.bf16.mxu0 0
      %1796 = vmatpush1.bf16.xpose.msra.mxu0 %v1786
      %1797 = vmatprep.subr.bf16.mxu0 0
      %1798 = vmatpush1.bf16.xpose.msra.mxu0 %v1789
      %1799 = vmatprep.subr.bf16.mxu0 0
      %1800 = vmatpush1.bf16.xpose.msra.mxu0 0
      %1801 = vmatprep.subr.bf16.mxu0 0
      %1802 = vmatpush1.bf16.xpose.msra.mxu0 0
      %1803 = vmatprep.subr.bf16.mxu0 0
      %1804 = vmatpush1.bf16.xpose.msra.mxu0 0
      %1805 = vmatprep.subr.bf16.mxu0 0
      %1806 = vmatpush1.bf16.xpose.msra.mxu0 0
      %1807 = vmatprep.subr.bf16.mxu0 0
      %1808 = vmatpush1.bf16.xpose.msra.mxu0 0
      %1809 = vmatprep.subr.bf16.mxu0 0
      %1810 = vmatpush1.bf16.xpose.msra.mxu0 0
      %1811 = vmatprep.subr.bf16.mxu0 0
      %1812 = vmatpush1.bf16.xpose.msra.mxu0 0
      %1813 = vmatprep.subr.bf16.mxu0 0
      %1814 = vmatpush1.bf16.xpose.msra.mxu0 0
      %1815 = vmatprep.subr.bf16.mxu0 0
      %1816 = vmatpush1.bf16.xpose.msra.mxu0 0
      %1817 = vmatprep.subr.bf16.mxu0 0
      %1818 = vmatpush1.bf16.xpose.msra.mxu0 0
      %1819 = vmatprep.subr.bf16.mxu0 0
      %1820 = vmatpush1.bf16.xpose.msra.mxu0 0
      %1821 = vmatprep.subr.bf16.mxu0 0
      %1822 = vmatpush1.bf16.xpose.msra.mxu0 0
      %1823 = vmatprep.mubr.bf16.mxu0 0
      %1824 = vmatmul.mubr.bf16.gmra.mrb[0].mxu0 %v1777
      %v1825 = vpop.f32.mrb[0].mxu0
      %v1826 = vadd.f32 0.0, %v1825
      %v1827 = vpop.f32.mrb[0].mxu0
      %v1828 = vpop.f32.mrb[0].mxu0
      %v1829 = vpop.f32.mrb[0].mxu0
      %1830 = vdwg.mxu0
      %v1839 = vunpack.c.l.b16 %v1732
      %v1840 = vunpack.c.l.b16 %v1733
      %v1841 = vunpack.c.l.b16 %v1734
      %v1842 = vunpack.c.l.b16 %v1735
      %v1843 = vunpack.c.l.b16 %v1736
      %v1844 = vunpack.c.l.b16 %v1737
      %v1845 = vunpack.c.l.b16 %v1738
      %v1846 = vunpack.c.l.b16 %v1739
      %v1847 = vpack.c.b16 %v1840, %v1839
      %v1848 = vpack.c.b16 %v1842, %v1841
      %v1849 = vpack.c.b16 %v1844, %v1843
      %v1850 = vpack.c.b16 %v1846, %v1845
      %v1852 = vsel %vm1297, %v1721, 0
      %v1855 = vsel %vm1297, %v1847, 0
      %v1858 = vsel %vm1297, %v1848, 0
      %v1861 = vsel %vm1297, %v1849, 0
      %v1864 = vsel %vm1297, %v1850, 0
      %1866 = vmatprep.subr.bf16.mxu0 0
      %1867 = vmatpush1.bf16.xpose.msra.mxu0 %v1855
      %1868 = vmatprep.subr.bf16.mxu0 0
      %1869 = vmatpush1.bf16.xpose.msra.mxu0 %v1858
      %1870 = vmatprep.subr.bf16.mxu0 0
      %1871 = vmatpush1.bf16.xpose.msra.mxu0 %v1861
      %1872 = vmatprep.subr.bf16.mxu0 0
      %1873 = vmatpush1.bf16.xpose.msra.mxu0 %v1864
      %1874 = vmatprep.subr.bf16.mxu0 0
      %1875 = vmatpush1.bf16.xpose.msra.mxu0 0
      %1876 = vmatprep.subr.bf16.mxu0 0
      %1877 = vmatpush1.bf16.xpose.msra.mxu0 0
      %1878 = vmatprep.subr.bf16.mxu0 0
      %1879 = vmatpush1.bf16.xpose.msra.mxu0 0
      %1880 = vmatprep.subr.bf16.mxu0 0
      %1881 = vmatpush1.bf16.xpose.msra.mxu0 0
      %1882 = vmatprep.subr.bf16.mxu0 0
      %1883 = vmatpush1.bf16.xpose.msra.mxu0 0
      %1884 = vmatprep.subr.bf16.mxu0 0
      %1885 = vmatpush1.bf16.xpose.msra.mxu0 0
      %1886 = vmatprep.subr.bf16.mxu0 0
      %1887 = vmatpush1.bf16.xpose.msra.mxu0 0
      %1888 = vmatprep.subr.bf16.mxu0 0
      %1889 = vmatpush1.bf16.xpose.msra.mxu0 0
      %1890 = vmatprep.subr.bf16.mxu0 0
      %1891 = vmatpush1.bf16.xpose.msra.mxu0 0
      %1892 = vmatprep.subr.bf16.mxu0 0
      %1893 = vmatpush1.bf16.xpose.msra.mxu0 0
      %1894 = vmatprep.subr.bf16.mxu0 0
      %1895 = vmatpush1.bf16.xpose.msra.mxu0 0
      %1896 = vmatprep.subr.bf16.mxu0 0
      %1897 = vmatpush1.bf16.xpose.msra.mxu0 0
      %1898 = vmatprep.mubr.bf16.mxu0 0
      %1899 = vmatmul.mubr.bf16.gmra.mrb[0].mxu0 %v1852
      %v1900 = vpop.f32.mrb[0].mxu0
      %v1901 = vadd.f32 0.0, %v1900
      %v1902 = vpop.f32.mrb[0].mxu0
      %v1903 = vpop.f32.mrb[0].mxu0
      %v1904 = vpop.f32.mrb[0].mxu0
      %1905 = vdwg.mxu0
      %v1914 = vunpack.c.l.b16 %v1740
      %v1915 = vunpack.c.l.b16 %v1741
      %v1916 = vunpack.c.l.b16 %v1742
      %v1917 = vunpack.c.l.b16 %v1743
      %v1918 = vunpack.c.l.b16 %v1744
      %v1919 = vunpack.c.l.b16 %v1745
      %v1920 = vunpack.c.l.b16 %v1746
      %v1921 = vunpack.c.l.b16 %v1747
      %v1922 = vpack.c.b16 %v1915, %v1914
      %v1923 = vpack.c.b16 %v1917, %v1916
      %v1924 = vpack.c.b16 %v1919, %v1918
      %v1925 = vpack.c.b16 %v1921, %v1920
      %v1927 = vsel %vm1297, %v1722, 0
      %v1930 = vsel %vm1297, %v1922, 0
      %v1933 = vsel %vm1297, %v1923, 0
      %v1936 = vsel %vm1297, %v1924, 0
      %v1939 = vsel %vm1297, %v1925, 0
      %1941 = vmatprep.subr.bf16.mxu0 0
      %1942 = vmatpush1.bf16.xpose.msra.mxu0 %v1930
      %1943 = vmatprep.subr.bf16.mxu0 0
      %1944 = vmatpush1.bf16.xpose.msra.mxu0 %v1933
      %1945 = vmatprep.subr.bf16.mxu0 0
      %1946 = vmatpush1.bf16.xpose.msra.mxu0 %v1936
      %1947 = vmatprep.subr.bf16.mxu0 0
      %1948 = vmatpush1.bf16.xpose.msra.mxu0 %v1939
      %1949 = vmatprep.subr.bf16.mxu0 0
      %1950 = vmatpush1.bf16.xpose.msra.mxu0 0
      %1951 = vmatprep.subr.bf16.mxu0 0
      %1952 = vmatpush1.bf16.xpose.msra.mxu0 0
      %1953 = vmatprep.subr.bf16.mxu0 0
      %1954 = vmatpush1.bf16.xpose.msra.mxu0 0
      %1955 = vmatprep.subr.bf16.mxu0 0
      %1956 = vmatpush1.bf16.xpose.msra.mxu0 0
      %1957 = vmatprep.subr.bf16.mxu0 0
      %1958 = vmatpush1.bf16.xpose.msra.mxu0 0
      %1959 = vmatprep.subr.bf16.mxu0 0
      %1960 = vmatpush1.bf16.xpose.msra.mxu0 0
      %1961 = vmatprep.subr.bf16.mxu0 0
      %1962 = vmatpush1.bf16.xpose.msra.mxu0 0
      %1963 = vmatprep.subr.bf16.mxu0 0
      %1964 = vmatpush1.bf16.xpose.msra.mxu0 0
      %1965 = vmatprep.subr.bf16.mxu0 0
      %1966 = vmatpush1.bf16.xpose.msra.mxu0 0
      %1967 = vmatprep.subr.bf16.mxu0 0
      %1968 = vmatpush1.bf16.xpose.msra.mxu0 0
      %1969 = vmatprep.subr.bf16.mxu0 0
      %1970 = vmatpush1.bf16.xpose.msra.mxu0 0
      %1971 = vmatprep.subr.bf16.mxu0 0
      %1972 = vmatpush1.bf16.xpose.msra.mxu0 0
      %1973 = vmatprep.mubr.bf16.mxu0 0
      %1974 = vmatmul.mubr.bf16.gmra.mrb[0].mxu0 %v1927
      %v1975 = vpop.f32.mrb[0].mxu0
      %v1976 = vadd.f32 0.0, %v1975
      %v1977 = vpop.f32.mrb[0].mxu0
      %v1978 = vpop.f32.mrb[0].mxu0
      %v1979 = vpop.f32.mrb[0].mxu0
      %1980 = vdwg.mxu0
      %v1989 = vunpack.c.l.b16 %v1748
      %v1990 = vunpack.c.l.b16 %v1749
      %v1991 = vunpack.c.l.b16 %v1750
      %v1992 = vunpack.c.l.b16 %v1751
      %v1993 = vunpack.c.l.b16 %v1752
      %v1994 = vunpack.c.l.b16 %v1753
      %v1995 = vunpack.c.l.b16 %v1754
      %v1996 = vunpack.c.l.b16 %v1755
      %v1997 = vpack.c.b16 %v1990, %v1989
      %v1998 = vpack.c.b16 %v1992, %v1991
      %v1999 = vpack.c.b16 %v1994, %v1993
      %v2000 = vpack.c.b16 %v1996, %v1995
      %v2002 = vsel %vm1297, %v1723, 0
      %v2005 = vsel %vm1297, %v1997, 0
      %v2008 = vsel %vm1297, %v1998, 0
      %v2011 = vsel %vm1297, %v1999, 0
      %v2014 = vsel %vm1297, %v2000, 0
      %2016 = vmatprep.subr.bf16.mxu0 0
      %2017 = vmatpush1.bf16.xpose.msra.mxu0 %v2005
      %2018 = vmatprep.subr.bf16.mxu0 0
      %2019 = vmatpush1.bf16.xpose.msra.mxu0 %v2008
      %2020 = vmatprep.subr.bf16.mxu0 0
      %2021 = vmatpush1.bf16.xpose.msra.mxu0 %v2011
      %2022 = vmatprep.subr.bf16.mxu0 0
      %2023 = vmatpush1.bf16.xpose.msra.mxu0 %v2014
      %2024 = vmatprep.subr.bf16.mxu0 0
      %2025 = vmatpush1.bf16.xpose.msra.mxu0 0
      %2026 = vmatprep.subr.bf16.mxu0 0
      %2027 = vmatpush1.bf16.xpose.msra.mxu0 0
      %2028 = vmatprep.subr.bf16.mxu0 0
      %2029 = vmatpush1.bf16.xpose.msra.mxu0 0
      %2030 = vmatprep.subr.bf16.mxu0 0
      %2031 = vmatpush1.bf16.xpose.msra.mxu0 0
      %2032 = vmatprep.subr.bf16.mxu0 0
      %2033 = vmatpush1.bf16.xpose.msra.mxu0 0
      %2034 = vmatprep.subr.bf16.mxu0 0
      %2035 = vmatpush1.bf16.xpose.msra.mxu0 0
      %2036 = vmatprep.subr.bf16.mxu0 0
      %2037 = vmatpush1.bf16.xpose.msra.mxu0 0
      %2038 = vmatprep.subr.bf16.mxu0 0
      %2039 = vmatpush1.bf16.xpose.msra.mxu0 0
      %2040 = vmatprep.subr.bf16.mxu0 0
      %2041 = vmatpush1.bf16.xpose.msra.mxu0 0
      %2042 = vmatprep.subr.bf16.mxu0 0
      %2043 = vmatpush1.bf16.xpose.msra.mxu0 0
      %2044 = vmatprep.subr.bf16.mxu0 0
      %2045 = vmatpush1.bf16.xpose.msra.mxu0 0
      %2046 = vmatprep.subr.bf16.mxu0 0
      %2047 = vmatpush1.bf16.xpose.msra.mxu0 0
      %2048 = vmatprep.mubr.bf16.mxu0 0
      %2049 = vmatmul.mubr.bf16.gmra.mrb[0].mxu0 %v2002
      %v2050 = vpop.f32.mrb[0].mxu0
      %v2051 = vadd.f32 0.0, %v2050
      %v2052 = vpop.f32.mrb[0].mxu0
      %v2053 = vpop.f32.mrb[0].mxu0
      %v2054 = vpop.f32.mrb[0].mxu0
      %2055 = vdwg.mxu0
      %v2056 = vsel %vm642, %v1826, 0.0
      %v2057 = vsel %vm642, %v1901, 0.0
      %v2058 = vadd.f32 %v2056, %v2057
      %v2059 = vsel %vm642, %v1976, 0.0
      %v2060 = vadd.f32 %v2058, %v2059
      %v2061 = vsel %vm642, %v2051, 0.0
      %v2062 = vadd.f32 %v2060, %v2061
      %v2063 = vld [vmem:[%s8] sm:$0x1]
      %v2065 = vlaneseq
      %v2066 = vshrl.u32 %v2065, 7
      %v2067 = vsub.s32 0, %v2066
      %v2068 = vrot.slane %v2063, %v2067
      %v2070 = vadd.f32 %v2062, %v2068
      %v2071 = vadd.f32 %v599, %v2070
      %v2072 = vld [vmem:[%s13] sm:$0x1]
      %v2073 = vld [vmem:[%s14] sm:$0x1]
      %v2074 = vsel %vm642, %v2071, 0.0
      %2075 = vadd.xlane.f32.xlu0 %v2074
      %v2076 = vpop.xlane.xlu0 %2075
      %v2077 = vrcp.pop 64.0
      %v2078 = vmul.f32 %v2076, %v2077
      %v2079 = vsub.f32 %v2071, %v2078
      %v2080 = vmul.f32 %v2079, %v2079
      %v2081 = vsel %vm642, %v2080, 0.0
      %2082 = vadd.xlane.f32.xlu0 %v2081
      %v2083 = vpop.xlane.xlu0 %2082
      %v2084 = vmul.f32 %v2083, %v2077
      %v2085 = vadd.f32 %v2084, 1e-05
      %v2086 = vrsqrt.pop %v2085
      %v2087 = vmul.f32 %v2079, %v2086
      %v2089 = vlaneseq
      %v2090 = vshrl.u32 %v2089, 7
      %v2091 = vsub.s32 0, %v2090
      %v2092 = vrot.slane %v2072, %v2091
      %v2094 = vmul.f32 %v2087, %v2092
      %v2096 = vlaneseq
      %v2097 = vshrl.u32 %v2096, 7
      %v2098 = vsub.s32 0, %v2097
      %v2099 = vrot.slane %v2073, %v2098
      %v2101 = vadd.f32 %v2094, %v2099
      %v2102 = vpack.c.bf16 %v2101, %v2101
      %v2103 = vld [vmem:[%s9] sm:$0xff]
      %v2104 = vld [vmem:[%s9 + $0x8] sm:$0xff]
      %v2105 = vld [vmem:[%s9 + $0x10] sm:$0xff]
      %v2106 = vld [vmem:[%s9 + $0x18] sm:$0xff]
      %v2107 = vld [vmem:[%s9 + $0x20] sm:$0xff]
      %v2108 = vld [vmem:[%s9 + $0x28] sm:$0xff]
      %v2109 = vld [vmem:[%s9 + $0x30] sm:$0xff]
      %v2110 = vld [vmem:[%s9 + $0x38] sm:$0xff]
      %v2111 = vld [vmem:[%s9 + $0x40] sm:$0xff]
      %v2112 = vld [vmem:[%s9 + $0x48] sm:$0xff]
      %v2113 = vld [vmem:[%s9 + $0x50] sm:$0xff]
      %v2114 = vld [vmem:[%s9 + $0x58] sm:$0xff]
      %v2115 = vld [vmem:[%s9 + $0x60] sm:$0xff]
      %v2116 = vld [vmem:[%s9 + $0x68] sm:$0xff]
      %v2117 = vld [vmem:[%s9 + $0x70] sm:$0xff]
      %v2118 = vld [vmem:[%s9 + $0x78] sm:$0xff]
      %v2119 = vld [vmem:[%s10] sm:$0xf]
      %v2121 = vlaneseq
      %v2122 = vshrl.u32 %v2121, 7
      %v2123 = vsub.s32 0, %v2122
      %v2124 = vrot.slane %v2119, %v2123
      %v2125 = vlaneseq
      %v2126 = vshrl.u32 %v2125, 7
      %v2127 = vsub.s32 1, %v2126
      %v2128 = vrot.slane %v2119, %v2127
      %v2129 = vlaneseq
      %v2130 = vshrl.u32 %v2129, 7
      %v2131 = vsub.s32 2, %v2130
      %v2132 = vrot.slane %v2119, %v2131
      %v2133 = vlaneseq
      %v2134 = vshrl.u32 %v2133, 7
      %v2135 = vsub.s32 3, %v2134
      %v2136 = vrot.slane %v2119, %v2135
      %v2157 = vunpack.c.l.b16 %v2103
      %v2158 = vunpack.c.h.b16 %v2103
      %v2159 = vunpack.c.l.b16 %v2104
      %v2160 = vunpack.c.h.b16 %v2104
      %v2161 = vunpack.c.l.b16 %v2105
      %v2162 = vunpack.c.h.b16 %v2105
      %v2163 = vunpack.c.l.b16 %v2106
      %v2164 = vunpack.c.h.b16 %v2106
      %v2165 = vunpack.c.l.b16 %v2107
      %v2166 = vunpack.c.h.b16 %v2107
      %v2167 = vunpack.c.l.b16 %v2108
      %v2168 = vunpack.c.h.b16 %v2108
      %v2169 = vunpack.c.l.b16 %v2109
      %v2170 = vunpack.c.h.b16 %v2109
      %v2171 = vunpack.c.l.b16 %v2110
      %v2172 = vunpack.c.h.b16 %v2110
      %v2173 = vunpack.c.l.b16 %v2111
      %v2174 = vunpack.c.h.b16 %v2111
      %v2175 = vunpack.c.l.b16 %v2112
      %v2176 = vunpack.c.h.b16 %v2112
      %v2177 = vunpack.c.l.b16 %v2113
      %v2178 = vunpack.c.h.b16 %v2113
      %v2179 = vunpack.c.l.b16 %v2114
      %v2180 = vunpack.c.h.b16 %v2114
      %v2181 = vunpack.c.l.b16 %v2115
      %v2182 = vunpack.c.h.b16 %v2115
      %v2183 = vunpack.c.l.b16 %v2116
      %v2184 = vunpack.c.h.b16 %v2116
      %v2185 = vunpack.c.l.b16 %v2117
      %v2186 = vunpack.c.h.b16 %v2117
      %v2187 = vunpack.c.l.b16 %v2118
      %v2188 = vunpack.c.h.b16 %v2118
      %v2189 = vpack.c.b16 %v2161, %v2157
      %v2190 = vpack.c.b16 %v2162, %v2158
      %v2191 = vpack.c.b16 %v2163, %v2159
      %v2192 = vpack.c.b16 %v2164, %v2160
      %v2193 = vpack.c.b16 %v2169, %v2165
      %v2194 = vpack.c.b16 %v2170, %v2166
      %v2195 = vpack.c.b16 %v2171, %v2167
      %v2196 = vpack.c.b16 %v2172, %v2168
      %v2197 = vpack.c.b16 %v2177, %v2173
      %v2198 = vpack.c.b16 %v2178, %v2174
      %v2199 = vpack.c.b16 %v2179, %v2175
      %v2200 = vpack.c.b16 %v2180, %v2176
      %v2201 = vpack.c.b16 %v2185, %v2181
      %v2202 = vpack.c.b16 %v2186, %v2182
      %v2203 = vpack.c.b16 %v2187, %v2183
      %v2204 = vpack.c.b16 %v2188, %v2184
      %v2222 = vsel %vm642, %v2102, 0
      %2224 = vmatprep.subr.bf16.mxu0 %v2190
      %2225 = vmatpush1.bf16.msra.mxu0 %v2189
      %2226 = vmatprep.subr.bf16.mxu0 %v2194
      %2227 = vmatpush1.bf16.msra.mxu0 %v2193
      %2228 = vmatprep.subr.bf16.mxu0 %v2198
      %2229 = vmatpush1.bf16.msra.mxu0 %v2197
      %2230 = vmatprep.subr.bf16.mxu0 %v2202
      %2231 = vmatpush1.bf16.msra.mxu0 %v2201
      %2232 = vmatprep.subr.bf16.mxu0 0
      %2233 = vmatpush1.bf16.msra.mxu0 0
      %2234 = vmatprep.subr.bf16.mxu0 0
      %2235 = vmatpush1.bf16.msra.mxu0 0
      %2236 = vmatprep.subr.bf16.mxu0 0
      %2237 = vmatpush1.bf16.msra.mxu0 0
      %2238 = vmatprep.subr.bf16.mxu0 0
      %2239 = vmatpush1.bf16.msra.mxu0 0
      %2240 = vmatprep.subr.bf16.mxu0 0
      %2241 = vmatpush1.bf16.msra.mxu0 0
      %2242 = vmatprep.subr.bf16.mxu0 0
      %2243 = vmatpush1.bf16.msra.mxu0 0
      %2244 = vmatprep.subr.bf16.mxu0 0
      %2245 = vmatpush1.bf16.msra.mxu0 0
      %2246 = vmatprep.subr.bf16.mxu0 0
      %2247 = vmatpush1.bf16.msra.mxu0 0
      %2248 = vmatprep.subr.bf16.mxu0 0
      %2249 = vmatpush1.bf16.msra.mxu0 0
      %2250 = vmatprep.subr.bf16.mxu0 0
      %2251 = vmatpush1.bf16.msra.mxu0 0
      %2252 = vmatprep.subr.bf16.mxu0 0
      %2253 = vmatpush1.bf16.msra.mxu0 0
      %2254 = vmatprep.subr.bf16.mxu0 0
      %2255 = vmatpush1.bf16.msra.mxu0 0
      %2256 = vmatprep.mubr.bf16.mxu0 0
      %2257 = vmatmul.mubr.bf16.gmra.mrb[0].mxu0 %v2222
      %v2258 = vpop.f32.mrb[0].mxu0
      %v2259 = vadd.f32 %v2124, %v2258
      %v2260 = vpop.f32.mrb[0].mxu0
      %v2261 = vadd.f32 %v2128, %v2260
      %v2262 = vpop.f32.mrb[0].mxu0
      %v2263 = vpop.f32.mrb[0].mxu0
      %2264 = vdwg.mxu0
      %2265 = vmatprep.subr.bf16.mxu0 %v2192
      %2266 = vmatpush1.bf16.msra.mxu0 %v2191
      %2267 = vmatprep.subr.bf16.mxu0 %v2196
      %2268 = vmatpush1.bf16.msra.mxu0 %v2195
      %2269 = vmatprep.subr.bf16.mxu0 %v2200
      %2270 = vmatpush1.bf16.msra.mxu0 %v2199
      %2271 = vmatprep.subr.bf16.mxu0 %v2204
      %2272 = vmatpush1.bf16.msra.mxu0 %v2203
      %2273 = vmatprep.subr.bf16.mxu0 0
      %2274 = vmatpush1.bf16.msra.mxu0 0
      %2275 = vmatprep.subr.bf16.mxu0 0
      %2276 = vmatpush1.bf16.msra.mxu0 0
      %2277 = vmatprep.subr.bf16.mxu0 0
      %2278 = vmatpush1.bf16.msra.mxu0 0
      %2279 = vmatprep.subr.bf16.mxu0 0
      %2280 = vmatpush1.bf16.msra.mxu0 0
      %2281 = vmatprep.subr.bf16.mxu0 0
      %2282 = vmatpush1.bf16.msra.mxu0 0
      %2283 = vmatprep.subr.bf16.mxu0 0
      %2284 = vmatpush1.bf16.msra.mxu0 0
      %2285 = vmatprep.subr.bf16.mxu0 0
      %2286 = vmatpush1.bf16.msra.mxu0 0
      %2287 = vmatprep.subr.bf16.mxu0 0
      %2288 = vmatpush1.bf16.msra.mxu0 0
      %2289 = vmatprep.subr.bf16.mxu0 0
      %2290 = vmatpush1.bf16.msra.mxu0 0
      %2291 = vmatprep.subr.bf16.mxu0 0
      %2292 = vmatpush1.bf16.msra.mxu0 0
      %2293 = vmatprep.subr.bf16.mxu0 0
      %2294 = vmatpush1.bf16.msra.mxu0 0
      %2295 = vmatprep.subr.bf16.mxu0 0
      %2296 = vmatpush1.bf16.msra.mxu0 0
      %2297 = vmatprep.mubr.bf16.mxu0 0
      %2298 = vmatmul.mubr.bf16.gmra.mrb[0].mxu0 %v2222
      %v2299 = vpop.f32.mrb[0].mxu0
      %v2300 = vadd.f32 %v2132, %v2299
      %v2301 = vpop.f32.mrb[0].mxu0
      %v2302 = vadd.f32 %v2136, %v2301
      %v2303 = vpop.f32.mrb[0].mxu0
      %v2304 = vpop.f32.mrb[0].mxu0
      %2305 = vdwg.mxu0
      %v2306 = vmax.f32 %v2259, 0.0
      %v2307 = vmax.f32 %v2261, 0.0
      %v2308 = vmax.f32 %v2300, 0.0
      %v2309 = vmax.f32 %v2302, 0.0
      %v2310 = vpack.c.bf16 %v2306, %v2306
      %v2311 = vpack.c.bf16 %v2307, %v2307
      %v2312 = vpack.c.bf16 %v2308, %v2308
      %v2313 = vpack.c.bf16 %v2309, %v2309
      %v2314 = vld [vmem:[%s11] sm:$0xf]
      %v2315 = vld [vmem:[%s11 + $0x4] sm:$0xf]
      %v2316 = vld [vmem:[%s11 + $0x8] sm:$0xf]
      %v2317 = vld [vmem:[%s11 + $0xc] sm:$0xf]
      %v2318 = vld [vmem:[%s11 + $0x10] sm:$0xf]
      %v2319 = vld [vmem:[%s11 + $0x14] sm:$0xf]
      %v2320 = vld [vmem:[%s11 + $0x18] sm:$0xf]
      %v2321 = vld [vmem:[%s11 + $0x1c] sm:$0xf]
      %v2322 = vld [vmem:[%s11 + $0x20] sm:$0xf]
      %v2323 = vld [vmem:[%s11 + $0x24] sm:$0xf]
      %v2324 = vld [vmem:[%s11 + $0x28] sm:$0xf]
      %v2325 = vld [vmem:[%s11 + $0x2c] sm:$0xf]
      %v2326 = vld [vmem:[%s11 + $0x30] sm:$0xf]
      %v2327 = vld [vmem:[%s11 + $0x34] sm:$0xf]
      %v2328 = vld [vmem:[%s11 + $0x38] sm:$0xf]
      %v2329 = vld [vmem:[%s11 + $0x3c] sm:$0xf]
      %v2330 = vld [vmem:[%s11 + $0x40] sm:$0xf]
      %v2331 = vld [vmem:[%s11 + $0x44] sm:$0xf]
      %v2332 = vld [vmem:[%s11 + $0x48] sm:$0xf]
      %v2333 = vld [vmem:[%s11 + $0x4c] sm:$0xf]
      %v2334 = vld [vmem:[%s11 + $0x50] sm:$0xf]
      %v2335 = vld [vmem:[%s11 + $0x54] sm:$0xf]
      %v2336 = vld [vmem:[%s11 + $0x58] sm:$0xf]
      %v2337 = vld [vmem:[%s11 + $0x5c] sm:$0xf]
      %v2338 = vld [vmem:[%s11 + $0x60] sm:$0xf]
      %v2339 = vld [vmem:[%s11 + $0x64] sm:$0xf]
      %v2340 = vld [vmem:[%s11 + $0x68] sm:$0xf]
      %v2341 = vld [vmem:[%s11 + $0x6c] sm:$0xf]
      %v2342 = vld [vmem:[%s11 + $0x70] sm:$0xf]
      %v2343 = vld [vmem:[%s11 + $0x74] sm:$0xf]
      %v2344 = vld [vmem:[%s11 + $0x78] sm:$0xf]
      %v2345 = vld [vmem:[%s11 + $0x7c] sm:$0xf]
      %v2346 = vld [vmem:[%s11 + $0x80] sm:$0xf]
      %v2347 = vld [vmem:[%s11 + $0x84] sm:$0xf]
      %v2348 = vld [vmem:[%s11 + $0x88] sm:$0xf]
      %v2349 = vld [vmem:[%s11 + $0x8c] sm:$0xf]
      %v2350 = vld [vmem:[%s11 + $0x90] sm:$0xf]
      %v2351 = vld [vmem:[%s11 + $0x94] sm:$0xf]
      %v2352 = vld [vmem:[%s11 + $0x98] sm:$0xf]
      %v2353 = vld [vmem:[%s11 + $0x9c] sm:$0xf]
      %v2354 = vld [vmem:[%s11 + $0xa0] sm:$0xf]
      %v2355 = vld [vmem:[%s11 + $0xa4] sm:$0xf]
      %v2356 = vld [vmem:[%s11 + $0xa8] sm:$0xf]
      %v2357 = vld [vmem:[%s11 + $0xac] sm:$0xf]
      %v2358 = vld [vmem:[%s11 + $0xb0] sm:$0xf]
      %v2359 = vld [vmem:[%s11 + $0xb4] sm:$0xf]
      %v2360 = vld [vmem:[%s11 + $0xb8] sm:$0xf]
      %v2361 = vld [vmem:[%s11 + $0xbc] sm:$0xf]
      %v2362 = vld [vmem:[%s11 + $0xc0] sm:$0xf]
      %v2363 = vld [vmem:[%s11 + $0xc4] sm:$0xf]
      %v2364 = vld [vmem:[%s11 + $0xc8] sm:$0xf]
      %v2365 = vld [vmem:[%s11 + $0xcc] sm:$0xf]
      %v2366 = vld [vmem:[%s11 + $0xd0] sm:$0xf]
      %v2367 = vld [vmem:[%s11 + $0xd4] sm:$0xf]
      %v2368 = vld [vmem:[%s11 + $0xd8] sm:$0xf]
      %v2369 = vld [vmem:[%s11 + $0xdc] sm:$0xf]
      %v2370 = vld [vmem:[%s11 + $0xe0] sm:$0xf]
      %v2371 = vld [vmem:[%s11 + $0xe4] sm:$0xf]
      %v2372 = vld [vmem:[%s11 + $0xe8] sm:$0xf]
      %v2373 = vld [vmem:[%s11 + $0xec] sm:$0xf]
      %v2374 = vld [vmem:[%s11 + $0xf0] sm:$0xf]
      %v2375 = vld [vmem:[%s11 + $0xf4] sm:$0xf]
      %v2376 = vld [vmem:[%s11 + $0xf8] sm:$0xf]
      %v2377 = vld [vmem:[%s11 + $0xfc] sm:$0xf]
      %v2378 = vld [vmem:[%s12] sm:$0x1]
      %v2380 = vlaneseq
      %v2381 = vshrl.u32 %v2380, 7
      %v2382 = vsub.s32 0, %v2381
      %v2383 = vrot.slane %v2378, %v2382
      %v2449 = vunpack.c.l.b16 %v2314
      %v2450 = vunpack.c.l.b16 %v2315
      %v2451 = vunpack.c.l.b16 %v2316
      %v2452 = vunpack.c.l.b16 %v2317
      %v2453 = vunpack.c.l.b16 %v2318
      %v2454 = vunpack.c.l.b16 %v2319
      %v2455 = vunpack.c.l.b16 %v2320
      %v2456 = vunpack.c.l.b16 %v2321
      %v2457 = vunpack.c.l.b16 %v2322
      %v2458 = vunpack.c.l.b16 %v2323
      %v2459 = vunpack.c.l.b16 %v2324
      %v2460 = vunpack.c.l.b16 %v2325
      %v2461 = vunpack.c.l.b16 %v2326
      %v2462 = vunpack.c.l.b16 %v2327
      %v2463 = vunpack.c.l.b16 %v2328
      %v2464 = vunpack.c.l.b16 %v2329
      %v2465 = vunpack.c.l.b16 %v2330
      %v2466 = vunpack.c.l.b16 %v2331
      %v2467 = vunpack.c.l.b16 %v2332
      %v2468 = vunpack.c.l.b16 %v2333
      %v2469 = vunpack.c.l.b16 %v2334
      %v2470 = vunpack.c.l.b16 %v2335
      %v2471 = vunpack.c.l.b16 %v2336
      %v2472 = vunpack.c.l.b16 %v2337
      %v2473 = vunpack.c.l.b16 %v2338
      %v2474 = vunpack.c.l.b16 %v2339
      %v2475 = vunpack.c.l.b16 %v2340
      %v2476 = vunpack.c.l.b16 %v2341
      %v2477 = vunpack.c.l.b16 %v2342
      %v2478 = vunpack.c.l.b16 %v2343
      %v2479 = vunpack.c.l.b16 %v2344
      %v2480 = vunpack.c.l.b16 %v2345
      %v2481 = vunpack.c.l.b16 %v2346
      %v2482 = vunpack.c.l.b16 %v2347
      %v2483 = vunpack.c.l.b16 %v2348
      %v2484 = vunpack.c.l.b16 %v2349
      %v2485 = vunpack.c.l.b16 %v2350
      %v2486 = vunpack.c.l.b16 %v2351
      %v2487 = vunpack.c.l.b16 %v2352
      %v2488 = vunpack.c.l.b16 %v2353
      %v2489 = vunpack.c.l.b16 %v2354
      %v2490 = vunpack.c.l.b16 %v2355
      %v2491 = vunpack.c.l.b16 %v2356
      %v2492 = vunpack.c.l.b16 %v2357
      %v2493 = vunpack.c.l.b16 %v2358
      %v2494 = vunpack.c.l.b16 %v2359
      %v2495 = vunpack.c.l.b16 %v2360
      %v2496 = vunpack.c.l.b16 %v2361
      %v2497 = vunpack.c.l.b16 %v2362
      %v2498 = vunpack.c.l.b16 %v2363
      %v2499 = vunpack.c.l.b16 %v2364
      %v2500 = vunpack.c.l.b16 %v2365
      %v2501 = vunpack.c.l.b16 %v2366
      %v2502 = vunpack.c.l.b16 %v2367
      %v2503 = vunpack.c.l.b16 %v2368
      %v2504 = vunpack.c.l.b16 %v2369
      %v2505 = vunpack.c.l.b16 %v2370
      %v2506 = vunpack.c.l.b16 %v2371
      %v2507 = vunpack.c.l.b16 %v2372
      %v2508 = vunpack.c.l.b16 %v2373
      %v2509 = vunpack.c.l.b16 %v2374
      %v2510 = vunpack.c.l.b16 %v2375
      %v2511 = vunpack.c.l.b16 %v2376
      %v2512 = vunpack.c.l.b16 %v2377
      %v2513 = vpack.c.b16 %v2450, %v2449
      %v2514 = vpack.c.b16 %v2452, %v2451
      %v2515 = vpack.c.b16 %v2454, %v2453
      %v2516 = vpack.c.b16 %v2456, %v2455
      %v2517 = vpack.c.b16 %v2458, %v2457
      %v2518 = vpack.c.b16 %v2460, %v2459
      %v2519 = vpack.c.b16 %v2462, %v2461
      %v2520 = vpack.c.b16 %v2464, %v2463
      %v2521 = vpack.c.b16 %v2466, %v2465
      %v2522 = vpack.c.b16 %v2468, %v2467
      %v2523 = vpack.c.b16 %v2470, %v2469
      %v2524 = vpack.c.b16 %v2472, %v2471
      %v2525 = vpack.c.b16 %v2474, %v2473
      %v2526 = vpack.c.b16 %v2476, %v2475
      %v2527 = vpack.c.b16 %v2478, %v2477
      %v2528 = vpack.c.b16 %v2480, %v2479
      %v2529 = vpack.c.b16 %v2482, %v2481
      %v2530 = vpack.c.b16 %v2484, %v2483
      %v2531 = vpack.c.b16 %v2486, %v2485
      %v2532 = vpack.c.b16 %v2488, %v2487
      %v2533 = vpack.c.b16 %v2490, %v2489
      %v2534 = vpack.c.b16 %v2492, %v2491
      %v2535 = vpack.c.b16 %v2494, %v2493
      %v2536 = vpack.c.b16 %v2496, %v2495
      %v2537 = vpack.c.b16 %v2498, %v2497
      %v2538 = vpack.c.b16 %v2500, %v2499
      %v2539 = vpack.c.b16 %v2502, %v2501
      %v2540 = vpack.c.b16 %v2504, %v2503
      %v2541 = vpack.c.b16 %v2506, %v2505
      %v2542 = vpack.c.b16 %v2508, %v2507
      %v2543 = vpack.c.b16 %v2510, %v2509
      %v2544 = vpack.c.b16 %v2512, %v2511
      %2577 = vmatprep.subr.bf16.mxu0 0
      %2578 = vmatpush1.bf16.msra.mxu0 %v2513
      %2579 = vmatprep.subr.bf16.mxu0 0
      %2580 = vmatpush1.bf16.msra.mxu0 %v2514
      %2581 = vmatprep.subr.bf16.mxu0 0
      %2582 = vmatpush1.bf16.msra.mxu0 %v2515
      %2583 = vmatprep.subr.bf16.mxu0 0
      %2584 = vmatpush1.bf16.msra.mxu0 %v2516
      %2585 = vmatprep.subr.bf16.mxu0 0
      %2586 = vmatpush1.bf16.msra.mxu0 %v2517
      %2587 = vmatprep.subr.bf16.mxu0 0
      %2588 = vmatpush1.bf16.msra.mxu0 %v2518
      %2589 = vmatprep.subr.bf16.mxu0 0
      %2590 = vmatpush1.bf16.msra.mxu0 %v2519
      %2591 = vmatprep.subr.bf16.mxu0 0
      %2592 = vmatpush1.bf16.msra.mxu0 %v2520
      %2593 = vmatprep.subr.bf16.mxu0 0
      %2594 = vmatpush1.bf16.msra.mxu0 %v2521
      %2595 = vmatprep.subr.bf16.mxu0 0
      %2596 = vmatpush1.bf16.msra.mxu0 %v2522
      %2597 = vmatprep.subr.bf16.mxu0 0
      %2598 = vmatpush1.bf16.msra.mxu0 %v2523
      %2599 = vmatprep.subr.bf16.mxu0 0
      %2600 = vmatpush1.bf16.msra.mxu0 %v2524
      %2601 = vmatprep.subr.bf16.mxu0 0
      %2602 = vmatpush1.bf16.msra.mxu0 %v2525
      %2603 = vmatprep.subr.bf16.mxu0 0
      %2604 = vmatpush1.bf16.msra.mxu0 %v2526
      %2605 = vmatprep.subr.bf16.mxu0 0
      %2606 = vmatpush1.bf16.msra.mxu0 %v2527
      %2607 = vmatprep.subr.bf16.mxu0 0
      %2608 = vmatpush1.bf16.msra.mxu0 %v2528
      %2609 = vmatprep.mubr.bf16.mxu0 %v2311
      %2610 = vmatmul.mubr.bf16.gmra.mrb[0].mxu0 %v2310
      %v2611 = vpop.f32.mrb[0].mxu0
      %v2612 = vadd.f32 %v2383, %v2611
      %v2613 = vpop.f32.mrb[0].mxu0
      %v2614 = vpop.f32.mrb[0].mxu0
      %v2615 = vpop.f32.mrb[0].mxu0
      %2616 = vdwg.mxu0
      %2617 = vmatprep.subr.bf16.mxu0 0
      %2618 = vmatpush1.bf16.msra.mxu0 %v2529
      %2619 = vmatprep.subr.bf16.mxu0 0
      %2620 = vmatpush1.bf16.msra.mxu0 %v2530
      %2621 = vmatprep.subr.bf16.mxu0 0
      %2622 = vmatpush1.bf16.msra.mxu0 %v2531
      %2623 = vmatprep.subr.bf16.mxu0 0
      %2624 = vmatpush1.bf16.msra.mxu0 %v2532
      %2625 = vmatprep.subr.bf16.mxu0 0
      %2626 = vmatpush1.bf16.msra.mxu0 %v2533
      %2627 = vmatprep.subr.bf16.mxu0 0
      %2628 = vmatpush1.bf16.msra.mxu0 %v2534
      %2629 = vmatprep.subr.bf16.mxu0 0
      %2630 = vmatpush1.bf16.msra.mxu0 %v2535
      %2631 = vmatprep.subr.bf16.mxu0 0
      %2632 = vmatpush1.bf16.msra.mxu0 %v2536
      %2633 = vmatprep.subr.bf16.mxu0 0
      %2634 = vmatpush1.bf16.msra.mxu0 %v2537
      %2635 = vmatprep.subr.bf16.mxu0 0
      %2636 = vmatpush1.bf16.msra.mxu0 %v2538
      %2637 = vmatprep.subr.bf16.mxu0 0
      %2638 = vmatpush1.bf16.msra.mxu0 %v2539
      %2639 = vmatprep.subr.bf16.mxu0 0
      %2640 = vmatpush1.bf16.msra.mxu0 %v2540
      %2641 = vmatprep.subr.bf16.mxu0 0
      %2642 = vmatpush1.bf16.msra.mxu0 %v2541
      %2643 = vmatprep.subr.bf16.mxu0 0
      %2644 = vmatpush1.bf16.msra.mxu0 %v2542
      %2645 = vmatprep.subr.bf16.mxu0 0
      %2646 = vmatpush1.bf16.msra.mxu0 %v2543
      %2647 = vmatprep.subr.bf16.mxu0 0
      %2648 = vmatpush1.bf16.msra.mxu0 %v2544
      %2649 = vmatprep.mubr.bf16.mxu0 %v2313
      %2650 = vmatmul.mubr.bf16.gmra.mrb[0].mxu0 %v2312
      %v2651 = vpop.f32.mrb[0].mxu0
      %v2652 = vadd.f32 %v2612, %v2651
      %v2653 = vpop.f32.mrb[0].mxu0
      %v2654 = vpop.f32.mrb[0].mxu0
      %v2655 = vpop.f32.mrb[0].mxu0
      %2656 = vdwg.mxu0
      %v2657 = vadd.f32 %v2101, %v2652
      %v2658 = vld [vmem:[%s15] sm:$0x1]
      %v2659 = vld [vmem:[%s16] sm:$0x1]
      %v2660 = vsel %vm642, %v2657, 0.0
      %2661 = vadd.xlane.f32.xlu0 %v2660
      %v2662 = vpop.xlane.xlu0 %2661
      %v2663 = vmul.f32 %v2662, %v2077
      %v2664 = vsub.f32 %v2657, %v2663
      %v2665 = vmul.f32 %v2664, %v2664
      %v2666 = vsel %vm642, %v2665, 0.0
      %2667 = vadd.xlane.f32.xlu0 %v2666
      %v2668 = vpop.xlane.xlu0 %2667
      %v2669 = vmul.f32 %v2668, %v2077
      %v2670 = vadd.f32 %v2669, 1e-05
      %v2671 = vrsqrt.pop %v2670
      %v2672 = vmul.f32 %v2664, %v2671
      %v2674 = vlaneseq
      %v2675 = vshrl.u32 %v2674, 7
      %v2676 = vsub.s32 0, %v2675
      %v2677 = vrot.slane %v2658, %v2676
      %v2679 = vmul.f32 %v2672, %v2677
      %v2681 = vlaneseq
      %v2682 = vshrl.u32 %v2681, 7
      %v2683 = vsub.s32 0, %v2682
      %v2684 = vrot.slane %v2659, %v2683
      %v2686 = vadd.f32 %v2679, %v2684
      %v2687 = vpack.c.bf16 %v2686, %v2686
      %s2688 = scalar_lea.vmem %s1, 32
      %v2689 = vld [vmem:[%s2688] sm:$0xf]
      %v2690 = vld [vmem:[%s2688 + $0x4] sm:$0xf]
      %v2691 = vld [vmem:[%s2688 + $0x8] sm:$0xf]
      %v2692 = vld [vmem:[%s2688 + $0xc] sm:$0xf]
      %v2693 = vld [vmem:[%s2688 + $0x10] sm:$0xf]
      %v2694 = vld [vmem:[%s2688 + $0x14] sm:$0xf]
      %v2695 = vld [vmem:[%s2688 + $0x18] sm:$0xf]
      %v2696 = vld [vmem:[%s2688 + $0x1c] sm:$0xf]
      %s2697 = scalar_lea.vmem %s4, 4
      %v2698 = vld [vmem:[%s2697] sm:$0x1]
      %v2699 = vld [vmem:[%s2697 + $0x1] sm:$0x1]
      %v2700 = vld [vmem:[%s2697 + $0x2] sm:$0x1]
      %v2701 = vld [vmem:[%s2697 + $0x3] sm:$0x1]
      %v2706 = vlaneseq
      %v2707 = vshrl.u32 %v2706, 7
      %v2708 = vsub.s32 0, %v2707
      %v2709 = vrot.slane %v2698, %v2708
      %v2710 = vlaneseq
      %v2711 = vshrl.u32 %v2710, 7
      %v2712 = vsub.s32 0, %v2711
      %v2713 = vrot.slane %v2699, %v2712
      %v2714 = vlaneseq
      %v2715 = vshrl.u32 %v2714, 7
      %v2716 = vsub.s32 0, %v2715
      %v2717 = vrot.slane %v2700, %v2716
      %v2718 = vlaneseq
      %v2719 = vshrl.u32 %v2718, 7
      %v2720 = vsub.s32 0, %v2719
      %v2721 = vrot.slane %v2701, %v2720
      %v2728 = vunpack.c.l.b16 %v2689
      %v2729 = vunpack.c.l.b16 %v2690
      %v2730 = vpack.c.b16 %v2729, %v2728
      %v2732 = vsel %vm642, %v2687, 0
      %v2735 = vsel %vm642, %v2730, 0
      %2737 = vmatprep.subr.bf16.mxu0 0
      %2738 = vmatpush1.bf16.xpose.msra.mxu0 %v2735
      %2739 = vmatprep.subr.bf16.mxu0 0
      %2740 = vmatpush1.bf16.xpose.msra.mxu0 0
      %2741 = vmatprep.subr.bf16.mxu0 0
      %2742 = vmatpush1.bf16.xpose.msra.mxu0 0
      %2743 = vmatprep.subr.bf16.mxu0 0
      %2744 = vmatpush1.bf16.xpose.msra.mxu0 0
      %2745 = vmatprep.subr.bf16.mxu0 0
      %2746 = vmatpush1.bf16.xpose.msra.mxu0 0
      %2747 = vmatprep.subr.bf16.mxu0 0
      %2748 = vmatpush1.bf16.xpose.msra.mxu0 0
      %2749 = vmatprep.subr.bf16.mxu0 0
      %2750 = vmatpush1.bf16.xpose.msra.mxu0 0
      %2751 = vmatprep.subr.bf16.mxu0 0
      %2752 = vmatpush1.bf16.xpose.msra.mxu0 0
      %2753 = vmatprep.subr.bf16.mxu0 0
      %2754 = vmatpush1.bf16.xpose.msra.mxu0 0
      %2755 = vmatprep.subr.bf16.mxu0 0
      %2756 = vmatpush1.bf16.xpose.msra.mxu0 0
      %2757 = vmatprep.subr.bf16.mxu0 0
      %2758 = vmatpush1.bf16.xpose.msra.mxu0 0
      %2759 = vmatprep.subr.bf16.mxu0 0
      %2760 = vmatpush1.bf16.xpose.msra.mxu0 0
      %2761 = vmatprep.subr.bf16.mxu0 0
      %2762 = vmatpush1.bf16.xpose.msra.mxu0 0
      %2763 = vmatprep.subr.bf16.mxu0 0
      %2764 = vmatpush1.bf16.xpose.msra.mxu0 0
      %2765 = vmatprep.subr.bf16.mxu0 0
      %2766 = vmatpush1.bf16.xpose.msra.mxu0 0
      %2767 = vmatprep.subr.bf16.mxu0 0
      %2768 = vmatpush1.bf16.xpose.msra.mxu0 0
      %2769 = vmatprep.mubr.bf16.mxu0 0
      %2770 = vmatmul.mubr.bf16.gmra.mrb[0].mxu0 %v2732
      %v2771 = vpop.f32.mrb[0].mxu0
      %v2772 = vadd.f32 %v2709, %v2771
      %v2773 = vpop.f32.mrb[0].mxu0
      %v2774 = vpop.f32.mrb[0].mxu0
      %v2775 = vpop.f32.mrb[0].mxu0
      %2776 = vdwg.mxu0
      %v2779 = vunpack.c.l.b16 %v2691
      %v2780 = vunpack.c.l.b16 %v2692
      %v2781 = vpack.c.b16 %v2780, %v2779
      %v2783 = vsel %vm642, %v2781, 0
      %2785 = vmatprep.subr.bf16.mxu0 0
      %2786 = vmatpush1.bf16.xpose.msra.mxu0 %v2783
      %2787 = vmatprep.subr.bf16.mxu0 0
      %2788 = vmatpush1.bf16.xpose.msra.mxu0 0
      %2789 = vmatprep.subr.bf16.mxu0 0
      %2790 = vmatpush1.bf16.xpose.msra.mxu0 0
      %2791 = vmatprep.subr.bf16.mxu0 0
      %2792 = vmatpush1.bf16.xpose.msra.mxu0 0
      %2793 = vmatprep.subr.bf16.mxu0 0
      %2794 = vmatpush1.bf16.xpose.msra.mxu0 0
      %2795 = vmatprep.subr.bf16.mxu0 0
      %2796 = vmatpush1.bf16.xpose.msra.mxu0 0
      %2797 = vmatprep.subr.bf16.mxu0 0
      %2798 = vmatpush1.bf16.xpose.msra.mxu0 0
      %2799 = vmatprep.subr.bf16.mxu0 0
      %2800 = vmatpush1.bf16.xpose.msra.mxu0 0
      %2801 = vmatprep.subr.bf16.mxu0 0
      %2802 = vmatpush1.bf16.xpose.msra.mxu0 0
      %2803 = vmatprep.subr.bf16.mxu0 0
      %2804 = vmatpush1.bf16.xpose.msra.mxu0 0
      %2805 = vmatprep.subr.bf16.mxu0 0
      %2806 = vmatpush1.bf16.xpose.msra.mxu0 0
      %2807 = vmatprep.subr.bf16.mxu0 0
      %2808 = vmatpush1.bf16.xpose.msra.mxu0 0
      %2809 = vmatprep.subr.bf16.mxu0 0
      %2810 = vmatpush1.bf16.xpose.msra.mxu0 0
      %2811 = vmatprep.subr.bf16.mxu0 0
      %2812 = vmatpush1.bf16.xpose.msra.mxu0 0
      %2813 = vmatprep.subr.bf16.mxu0 0
      %2814 = vmatpush1.bf16.xpose.msra.mxu0 0
      %2815 = vmatprep.subr.bf16.mxu0 0
      %2816 = vmatpush1.bf16.xpose.msra.mxu0 0
      %2817 = vmatprep.mubr.bf16.mxu0 0
      %2818 = vmatmul.mubr.bf16.gmra.mrb[0].mxu0 %v2732
      %v2819 = vpop.f32.mrb[0].mxu0
      %v2820 = vadd.f32 %v2713, %v2819
      %v2821 = vpop.f32.mrb[0].mxu0
      %v2822 = vpop.f32.mrb[0].mxu0
      %v2823 = vpop.f32.mrb[0].mxu0
      %2824 = vdwg.mxu0
      %v2827 = vunpack.c.l.b16 %v2693
      %v2828 = vunpack.c.l.b16 %v2694
      %v2829 = vpack.c.b16 %v2828, %v2827
      %v2831 = vsel %vm642, %v2829, 0
      %2833 = vmatprep.subr.bf16.mxu0 0
      %2834 = vmatpush1.bf16.xpose.msra.mxu0 %v2831
      %2835 = vmatprep.subr.bf16.mxu0 0
      %2836 = vmatpush1.bf16.xpose.msra.mxu0 0
      %2837 = vmatprep.subr.bf16.mxu0 0
      %2838 = vmatpush1.bf16.xpose.msra.mxu0 0
      %2839 = vmatprep.subr.bf16.mxu0 0
      %2840 = vmatpush1.bf16.xpose.msra.mxu0 0
      %2841 = vmatprep.subr.bf16.mxu0 0
      %2842 = vmatpush1.bf16.xpose.msra.mxu0 0
      %2843 = vmatprep.subr.bf16.mxu0 0
      %2844 = vmatpush1.bf16.xpose.msra.mxu0 0
      %2845 = vmatprep.subr.bf16.mxu0 0
      %2846 = vmatpush1.bf16.xpose.msra.mxu0 0
      %2847 = vmatprep.subr.bf16.mxu0 0
      %2848 = vmatpush1.bf16.xpose.msra.mxu0 0
      %2849 = vmatprep.subr.bf16.mxu0 0
      %2850 = vmatpush1.bf16.xpose.msra.mxu0 0
      %2851 = vmatprep.subr.bf16.mxu0 0
      %2852 = vmatpush1.bf16.xpose.msra.mxu0 0
      %2853 = vmatprep.subr.bf16.mxu0 0
      %2854 = vmatpush1.bf16.xpose.msra.mxu0 0
      %2855 = vmatprep.subr.bf16.mxu0 0
      %2856 = vmatpush1.bf16.xpose.msra.mxu0 0
      %2857 = vmatprep.subr.bf16.mxu0 0
      %2858 = vmatpush1.bf16.xpose.msra.mxu0 0
      %2859 = vmatprep.subr.bf16.mxu0 0
      %2860 = vmatpush1.bf16.xpose.msra.mxu0 0
      %2861 = vmatprep.subr.bf16.mxu0 0
      %2862 = vmatpush1.bf16.xpose.msra.mxu0 0
      %2863 = vmatprep.subr.bf16.mxu0 0
      %2864 = vmatpush1.bf16.xpose.msra.mxu0 0
      %2865 = vmatprep.mubr.bf16.mxu0 0
      %2866 = vmatmul.mubr.bf16.gmra.mrb[0].mxu0 %v2732
      %v2867 = vpop.f32.mrb[0].mxu0
      %v2868 = vadd.f32 %v2717, %v2867
      %v2869 = vpop.f32.mrb[0].mxu0
      %v2870 = vpop.f32.mrb[0].mxu0
      %v2871 = vpop.f32.mrb[0].mxu0
      %2872 = vdwg.mxu0
      %v2875 = vunpack.c.l.b16 %v2695
      %v2876 = vunpack.c.l.b16 %v2696
      %v2877 = vpack.c.b16 %v2876, %v2875
      %v2879 = vsel %vm642, %v2877, 0
      %2881 = vmatprep.subr.bf16.mxu0 0
      %2882 = vmatpush1.bf16.xpose.msra.mxu0 %v2879
      %2883 = vmatprep.subr.bf16.mxu0 0
      %2884 = vmatpush1.bf16.xpose.msra.mxu0 0
      %2885 = vmatprep.subr.bf16.mxu0 0
      %2886 = vmatpush1.bf16.xpose.msra.mxu0 0
      %2887 = vmatprep.subr.bf16.mxu0 0
      %2888 = vmatpush1.bf16.xpose.msra.mxu0 0
      %2889 = vmatprep.subr.bf16.mxu0 0
      %2890 = vmatpush1.bf16.xpose.msra.mxu0 0
      %2891 = vmatprep.subr.bf16.mxu0 0
      %2892 = vmatpush1.bf16.xpose.msra.mxu0 0
      %2893 = vmatprep.subr.bf16.mxu0 0
      %2894 = vmatpush1.bf16.xpose.msra.mxu0 0
      %2895 = vmatprep.subr.bf16.mxu0 0
      %2896 = vmatpush1.bf16.xpose.msra.mxu0 0
      %2897 = vmatprep.subr.bf16.mxu0 0
      %2898 = vmatpush1.bf16.xpose.msra.mxu0 0
      %2899 = vmatprep.subr.bf16.mxu0 0
      %2900 = vmatpush1.bf16.xpose.msra.mxu0 0
      %2901 = vmatprep.subr.bf16.mxu0 0
      %2902 = vmatpush1.bf16.xpose.msra.mxu0 0
      %2903 = vmatprep.subr.bf16.mxu0 0
      %2904 = vmatpush1.bf16.xpose.msra.mxu0 0
      %2905 = vmatprep.subr.bf16.mxu0 0
      %2906 = vmatpush1.bf16.xpose.msra.mxu0 0
      %2907 = vmatprep.subr.bf16.mxu0 0
      %2908 = vmatpush1.bf16.xpose.msra.mxu0 0
      %2909 = vmatprep.subr.bf16.mxu0 0
      %2910 = vmatpush1.bf16.xpose.msra.mxu0 0
      %2911 = vmatprep.subr.bf16.mxu0 0
      %2912 = vmatpush1.bf16.xpose.msra.mxu0 0
      %2913 = vmatprep.mubr.bf16.mxu0 0
      %2914 = vmatmul.mubr.bf16.gmra.mrb[0].mxu0 %v2732
      %v2915 = vpop.f32.mrb[0].mxu0
      %v2916 = vadd.f32 %v2721, %v2915
      %v2917 = vpop.f32.mrb[0].mxu0
      %v2918 = vpop.f32.mrb[0].mxu0
      %v2919 = vpop.f32.mrb[0].mxu0
      %2920 = vdwg.mxu0
      %s2921 = scalar_lea.vmem %s2, 32
      %v2922 = vld [vmem:[%s2921] sm:$0xf]
      %v2923 = vld [vmem:[%s2921 + $0x4] sm:$0xf]
      %v2924 = vld [vmem:[%s2921 + $0x8] sm:$0xf]
      %v2925 = vld [vmem:[%s2921 + $0xc] sm:$0xf]
      %v2926 = vld [vmem:[%s2921 + $0x10] sm:$0xf]
      %v2927 = vld [vmem:[%s2921 + $0x14] sm:$0xf]
      %v2928 = vld [vmem:[%s2921 + $0x18] sm:$0xf]
      %v2929 = vld [vmem:[%s2921 + $0x1c] sm:$0xf]
      %s2930 = scalar_lea.vmem %s5, 4
      %v2931 = vld [vmem:[%s2930] sm:$0x1]
      %v2932 = vld [vmem:[%s2930 + $0x1] sm:$0x1]
      %v2933 = vld [vmem:[%s2930 + $0x2] sm:$0x1]
      %v2934 = vld [vmem:[%s2930 + $0x3] sm:$0x1]
      %v2939 = vlaneseq
      %v2940 = vshrl.u32 %v2939, 7
      %v2941 = vsub.s32 0, %v2940
      %v2942 = vrot.slane %v2931, %v2941
      %v2943 = vlaneseq
      %v2944 = vshrl.u32 %v2943, 7
      %v2945 = vsub.s32 0, %v2944
      %v2946 = vrot.slane %v2932, %v2945
      %v2947 = vlaneseq
      %v2948 = vshrl.u32 %v2947, 7
      %v2949 = vsub.s32 0, %v2948
      %v2950 = vrot.slane %v2933, %v2949
      %v2951 = vlaneseq
      %v2952 = vshrl.u32 %v2951, 7
      %v2953 = vsub.s32 0, %v2952
      %v2954 = vrot.slane %v2934, %v2953
      %v2961 = vunpack.c.l.b16 %v2922
      %v2962 = vunpack.c.l.b16 %v2923
      %v2963 = vpack.c.b16 %v2962, %v2961
      %v2965 = vsel %vm642, %v2963, 0
      %2967 = vmatprep.subr.bf16.mxu0 0
      %2968 = vmatpush1.bf16.xpose.msra.mxu0 %v2965
      %2969 = vmatprep.subr.bf16.mxu0 0
      %2970 = vmatpush1.bf16.xpose.msra.mxu0 0
      %2971 = vmatprep.subr.bf16.mxu0 0
      %2972 = vmatpush1.bf16.xpose.msra.mxu0 0
      %2973 = vmatprep.subr.bf16.mxu0 0
      %2974 = vmatpush1.bf16.xpose.msra.mxu0 0
      %2975 = vmatprep.subr.bf16.mxu0 0
      %2976 = vmatpush1.bf16.xpose.msra.mxu0 0
      %2977 = vmatprep.subr.bf16.mxu0 0
      %2978 = vmatpush1.bf16.xpose.msra.mxu0 0
      %2979 = vmatprep.subr.bf16.mxu0 0
      %2980 = vmatpush1.bf16.xpose.msra.mxu0 0
      %2981 = vmatprep.subr.bf16.mxu0 0
      %2982 = vmatpush1.bf16.xpose.msra.mxu0 0
      %2983 = vmatprep.subr.bf16.mxu0 0
      %2984 = vmatpush1.bf16.xpose.msra.mxu0 0
      %2985 = vmatprep.subr.bf16.mxu0 0
      %2986 = vmatpush1.bf16.xpose.msra.mxu0 0
      %2987 = vmatprep.subr.bf16.mxu0 0
      %2988 = vmatpush1.bf16.xpose.msra.mxu0 0
      %2989 = vmatprep.subr.bf16.mxu0 0
      %2990 = vmatpush1.bf16.xpose.msra.mxu0 0
      %2991 = vmatprep.subr.bf16.mxu0 0
      %2992 = vmatpush1.bf16.xpose.msra.mxu0 0
      %2993 = vmatprep.subr.bf16.mxu0 0
      %2994 = vmatpush1.bf16.xpose.msra.mxu0 0
      %2995 = vmatprep.subr.bf16.mxu0 0
      %2996 = vmatpush1.bf16.xpose.msra.mxu0 0
      %2997 = vmatprep.subr.bf16.mxu0 0
      %2998 = vmatpush1.bf16.xpose.msra.mxu0 0
      %2999 = vmatprep.mubr.bf16.mxu0 0
      %3000 = vmatmul.mubr.bf16.gmra.mrb[0].mxu0 %v2732
      %v3001 = vpop.f32.mrb[0].mxu0
      %v3002 = vadd.f32 %v2942, %v3001
      %v3003 = vpop.f32.mrb[0].mxu0
      %v3004 = vpop.f32.mrb[0].mxu0
      %v3005 = vpop.f32.mrb[0].mxu0
      %3006 = vdwg.mxu0
      %v3009 = vunpack.c.l.b16 %v2924
      %v3010 = vunpack.c.l.b16 %v2925
      %v3011 = vpack.c.b16 %v3010, %v3009
      %v3013 = vsel %vm642, %v3011, 0
      %3015 = vmatprep.subr.bf16.mxu0 0
      %3016 = vmatpush1.bf16.xpose.msra.mxu0 %v3013
      %3017 = vmatprep.subr.bf16.mxu0 0
      %3018 = vmatpush1.bf16.xpose.msra.mxu0 0
      %3019 = vmatprep.subr.bf16.mxu0 0
      %3020 = vmatpush1.bf16.xpose.msra.mxu0 0
      %3021 = vmatprep.subr.bf16.mxu0 0
      %3022 = vmatpush1.bf16.xpose.msra.mxu0 0
      %3023 = vmatprep.subr.bf16.mxu0 0
      %3024 = vmatpush1.bf16.xpose.msra.mxu0 0
      %3025 = vmatprep.subr.bf16.mxu0 0
      %3026 = vmatpush1.bf16.xpose.msra.mxu0 0
      %3027 = vmatprep.subr.bf16.mxu0 0
      %3028 = vmatpush1.bf16.xpose.msra.mxu0 0
      %3029 = vmatprep.subr.bf16.mxu0 0
      %3030 = vmatpush1.bf16.xpose.msra.mxu0 0
      %3031 = vmatprep.subr.bf16.mxu0 0
      %3032 = vmatpush1.bf16.xpose.msra.mxu0 0
      %3033 = vmatprep.subr.bf16.mxu0 0
      %3034 = vmatpush1.bf16.xpose.msra.mxu0 0
      %3035 = vmatprep.subr.bf16.mxu0 0
      %3036 = vmatpush1.bf16.xpose.msra.mxu0 0
      %3037 = vmatprep.subr.bf16.mxu0 0
      %3038 = vmatpush1.bf16.xpose.msra.mxu0 0
      %3039 = vmatprep.subr.bf16.mxu0 0
      %3040 = vmatpush1.bf16.xpose.msra.mxu0 0
      %3041 = vmatprep.subr.bf16.mxu0 0
      %3042 = vmatpush1.bf16.xpose.msra.mxu0 0
      %3043 = vmatprep.subr.bf16.mxu0 0
      %3044 = vmatpush1.bf16.xpose.msra.mxu0 0
      %3045 = vmatprep.subr.bf16.mxu0 0
      %3046 = vmatpush1.bf16.xpose.msra.mxu0 0
      %3047 = vmatprep.mubr.bf16.mxu0 0
      %3048 = vmatmul.mubr.bf16.gmra.mrb[0].mxu0 %v2732
      %v3049 = vpop.f32.mrb[0].mxu0
      %v3050 = vadd.f32 %v2946, %v3049
      %v3051 = vpop.f32.mrb[0].mxu0
      %v3052 = vpop.f32.mrb[0].mxu0
      %v3053 = vpop.f32.mrb[0].mxu0
      %3054 = vdwg.mxu0
      %v3057 = vunpack.c.l.b16 %v2926
      %v3058 = vunpack.c.l.b16 %v2927
      %v3059 = vpack.c.b16 %v3058, %v3057
      %v3061 = vsel %vm642, %v3059, 0
      %3063 = vmatprep.subr.bf16.mxu0 0
      %3064 = vmatpush1.bf16.xpose.msra.mxu0 %v3061
      %3065 = vmatprep.subr.bf16.mxu0 0
      %3066 = vmatpush1.bf16.xpose.msra.mxu0 0
      %3067 = vmatprep.subr.bf16.mxu0 0
      %3068 = vmatpush1.bf16.xpose.msra.mxu0 0
      %3069 = vmatprep.subr.bf16.mxu0 0
      %3070 = vmatpush1.bf16.xpose.msra.mxu0 0
      %3071 = vmatprep.subr.bf16.mxu0 0
      %3072 = vmatpush1.bf16.xpose.msra.mxu0 0
      %3073 = vmatprep.subr.bf16.mxu0 0
      %3074 = vmatpush1.bf16.xpose.msra.mxu0 0
      %3075 = vmatprep.subr.bf16.mxu0 0
      %3076 = vmatpush1.bf16.xpose.msra.mxu0 0
      %3077 = vmatprep.subr.bf16.mxu0 0
      %3078 = vmatpush1.bf16.xpose.msra.mxu0 0
      %3079 = vmatprep.subr.bf16.mxu0 0
      %3080 = vmatpush1.bf16.xpose.msra.mxu0 0
      %3081 = vmatprep.subr.bf16.mxu0 0
      %3082 = vmatpush1.bf16.xpose.msra.mxu0 0
      %3083 = vmatprep.subr.bf16.mxu0 0
      %3084 = vmatpush1.bf16.xpose.msra.mxu0 0
      %3085 = vmatprep.subr.bf16.mxu0 0
      %3086 = vmatpush1.bf16.xpose.msra.mxu0 0
      %3087 = vmatprep.subr.bf16.mxu0 0
      %3088 = vmatpush1.bf16.xpose.msra.mxu0 0
      %3089 = vmatprep.subr.bf16.mxu0 0
      %3090 = vmatpush1.bf16.xpose.msra.mxu0 0
      %3091 = vmatprep.subr.bf16.mxu0 0
      %3092 = vmatpush1.bf16.xpose.msra.mxu0 0
      %3093 = vmatprep.subr.bf16.mxu0 0
      %3094 = vmatpush1.bf16.xpose.msra.mxu0 0
      %3095 = vmatprep.mubr.bf16.mxu0 0
      %3096 = vmatmul.mubr.bf16.gmra.mrb[0].mxu0 %v2732
      %v3097 = vpop.f32.mrb[0].mxu0
      %v3098 = vadd.f32 %v2950, %v3097
      %v3099 = vpop.f32.mrb[0].mxu0
      %v3100 = vpop.f32.mrb[0].mxu0
      %v3101 = vpop.f32.mrb[0].mxu0
      %3102 = vdwg.mxu0
      %v3105 = vunpack.c.l.b16 %v2928
      %v3106 = vunpack.c.l.b16 %v2929
      %v3107 = vpack.c.b16 %v3106, %v3105
      %v3109 = vsel %vm642, %v3107, 0
      %3111 = vmatprep.subr.bf16.mxu0 0
      %3112 = vmatpush1.bf16.xpose.msra.mxu0 %v3109
      %3113 = vmatprep.subr.bf16.mxu0 0
      %3114 = vmatpush1.bf16.xpose.msra.mxu0 0
      %3115 = vmatprep.subr.bf16.mxu0 0
      %3116 = vmatpush1.bf16.xpose.msra.mxu0 0
      %3117 = vmatprep.subr.bf16.mxu0 0
      %3118 = vmatpush1.bf16.xpose.msra.mxu0 0
      %3119 = vmatprep.subr.bf16.mxu0 0
      %3120 = vmatpush1.bf16.xpose.msra.mxu0 0
      %3121 = vmatprep.subr.bf16.mxu0 0
      %3122 = vmatpush1.bf16.xpose.msra.mxu0 0
      %3123 = vmatprep.subr.bf16.mxu0 0
      %3124 = vmatpush1.bf16.xpose.msra.mxu0 0
      %3125 = vmatprep.subr.bf16.mxu0 0
      %3126 = vmatpush1.bf16.xpose.msra.mxu0 0
      %3127 = vmatprep.subr.bf16.mxu0 0
      %3128 = vmatpush1.bf16.xpose.msra.mxu0 0
      %3129 = vmatprep.subr.bf16.mxu0 0
      %3130 = vmatpush1.bf16.xpose.msra.mxu0 0
      %3131 = vmatprep.subr.bf16.mxu0 0
      %3132 = vmatpush1.bf16.xpose.msra.mxu0 0
      %3133 = vmatprep.subr.bf16.mxu0 0
      %3134 = vmatpush1.bf16.xpose.msra.mxu0 0
      %3135 = vmatprep.subr.bf16.mxu0 0
      %3136 = vmatpush1.bf16.xpose.msra.mxu0 0
      %3137 = vmatprep.subr.bf16.mxu0 0
      %3138 = vmatpush1.bf16.xpose.msra.mxu0 0
      %3139 = vmatprep.subr.bf16.mxu0 0
      %3140 = vmatpush1.bf16.xpose.msra.mxu0 0
      %3141 = vmatprep.subr.bf16.mxu0 0
      %3142 = vmatpush1.bf16.xpose.msra.mxu0 0
      %3143 = vmatprep.mubr.bf16.mxu0 0
      %3144 = vmatmul.mubr.bf16.gmra.mrb[0].mxu0 %v2732
      %v3145 = vpop.f32.mrb[0].mxu0
      %v3146 = vadd.f32 %v2954, %v3145
      %v3147 = vpop.f32.mrb[0].mxu0
      %v3148 = vpop.f32.mrb[0].mxu0
      %v3149 = vpop.f32.mrb[0].mxu0
      %3150 = vdwg.mxu0
      %s3151 = scalar_lea.vmem %s3, 32
      %v3152 = vld [vmem:[%s3151] sm:$0xf]
      %v3153 = vld [vmem:[%s3151 + $0x4] sm:$0xf]
      %v3154 = vld [vmem:[%s3151 + $0x8] sm:$0xf]
      %v3155 = vld [vmem:[%s3151 + $0xc] sm:$0xf]
      %v3156 = vld [vmem:[%s3151 + $0x10] sm:$0xf]
      %v3157 = vld [vmem:[%s3151 + $0x14] sm:$0xf]
      %v3158 = vld [vmem:[%s3151 + $0x18] sm:$0xf]
      %v3159 = vld [vmem:[%s3151 + $0x1c] sm:$0xf]
      %s3160 = scalar_lea.vmem %s6, 4
      %v3161 = vld [vmem:[%s3160] sm:$0x1]
      %v3162 = vld [vmem:[%s3160 + $0x1] sm:$0x1]
      %v3163 = vld [vmem:[%s3160 + $0x2] sm:$0x1]
      %v3164 = vld [vmem:[%s3160 + $0x3] sm:$0x1]
      %v3169 = vlaneseq
      %v3170 = vshrl.u32 %v3169, 7
      %v3171 = vsub.s32 0, %v3170
      %v3172 = vrot.slane %v3161, %v3171
      %v3173 = vlaneseq
      %v3174 = vshrl.u32 %v3173, 7
      %v3175 = vsub.s32 0, %v3174
      %v3176 = vrot.slane %v3162, %v3175
      %v3177 = vlaneseq
      %v3178 = vshrl.u32 %v3177, 7
      %v3179 = vsub.s32 0, %v3178
      %v3180 = vrot.slane %v3163, %v3179
      %v3181 = vlaneseq
      %v3182 = vshrl.u32 %v3181, 7
      %v3183 = vsub.s32 0, %v3182
      %v3184 = vrot.slane %v3164, %v3183
      %v3191 = vunpack.c.l.b16 %v3152
      %v3192 = vunpack.c.l.b16 %v3153
      %v3193 = vpack.c.b16 %v3192, %v3191
      %v3195 = vsel %vm642, %v3193, 0
      %3197 = vmatprep.subr.bf16.mxu0 0
      %3198 = vmatpush1.bf16.xpose.msra.mxu0 %v3195
      %3199 = vmatprep.subr.bf16.mxu0 0
      %3200 = vmatpush1.bf16.xpose.msra.mxu0 0
      %3201 = vmatprep.subr.bf16.mxu0 0
      %3202 = vmatpush1.bf16.xpose.msra.mxu0 0
      %3203 = vmatprep.subr.bf16.mxu0 0
      %3204 = vmatpush1.bf16.xpose.msra.mxu0 0
      %3205 = vmatprep.subr.bf16.mxu0 0
      %3206 = vmatpush1.bf16.xpose.msra.mxu0 0
      %3207 = vmatprep.subr.bf16.mxu0 0
      %3208 = vmatpush1.bf16.xpose.msra.mxu0 0
      %3209 = vmatprep.subr.bf16.mxu0 0
      %3210 = vmatpush1.bf16.xpose.msra.mxu0 0
      %3211 = vmatprep.subr.bf16.mxu0 0
      %3212 = vmatpush1.bf16.xpose.msra.mxu0 0
      %3213 = vmatprep.subr.bf16.mxu0 0
      %3214 = vmatpush1.bf16.xpose.msra.mxu0 0
      %3215 = vmatprep.subr.bf16.mxu0 0
      %3216 = vmatpush1.bf16.xpose.msra.mxu0 0
      %3217 = vmatprep.subr.bf16.mxu0 0
      %3218 = vmatpush1.bf16.xpose.msra.mxu0 0
      %3219 = vmatprep.subr.bf16.mxu0 0
      %3220 = vmatpush1.bf16.xpose.msra.mxu0 0
      %3221 = vmatprep.subr.bf16.mxu0 0
      %3222 = vmatpush1.bf16.xpose.msra.mxu0 0
      %3223 = vmatprep.subr.bf16.mxu0 0
      %3224 = vmatpush1.bf16.xpose.msra.mxu0 0
      %3225 = vmatprep.subr.bf16.mxu0 0
      %3226 = vmatpush1.bf16.xpose.msra.mxu0 0
      %3227 = vmatprep.subr.bf16.mxu0 0
      %3228 = vmatpush1.bf16.xpose.msra.mxu0 0
      %3229 = vmatprep.mubr.bf16.mxu0 0
      %3230 = vmatmul.mubr.bf16.gmra.mrb[0].mxu0 %v2732
      %v3231 = vpop.f32.mrb[0].mxu0
      %v3232 = vadd.f32 %v3172, %v3231
      %v3233 = vpop.f32.mrb[0].mxu0
      %v3234 = vpop.f32.mrb[0].mxu0
      %v3235 = vpop.f32.mrb[0].mxu0
      %3236 = vdwg.mxu0
      %v3239 = vunpack.c.l.b16 %v3154
      %v3240 = vunpack.c.l.b16 %v3155
      %v3241 = vpack.c.b16 %v3240, %v3239
      %v3243 = vsel %vm642, %v3241, 0
      %3245 = vmatprep.subr.bf16.mxu0 0
      %3246 = vmatpush1.bf16.xpose.msra.mxu0 %v3243
      %3247 = vmatprep.subr.bf16.mxu0 0
      %3248 = vmatpush1.bf16.xpose.msra.mxu0 0
      %3249 = vmatprep.subr.bf16.mxu0 0
      %3250 = vmatpush1.bf16.xpose.msra.mxu0 0
      %3251 = vmatprep.subr.bf16.mxu0 0
      %3252 = vmatpush1.bf16.xpose.msra.mxu0 0
      %3253 = vmatprep.subr.bf16.mxu0 0
      %3254 = vmatpush1.bf16.xpose.msra.mxu0 0
      %3255 = vmatprep.subr.bf16.mxu0 0
      %3256 = vmatpush1.bf16.xpose.msra.mxu0 0
      %3257 = vmatprep.subr.bf16.mxu0 0
      %3258 = vmatpush1.bf16.xpose.msra.mxu0 0
      %3259 = vmatprep.subr.bf16.mxu0 0
      %3260 = vmatpush1.bf16.xpose.msra.mxu0 0
      %3261 = vmatprep.subr.bf16.mxu0 0
      %3262 = vmatpush1.bf16.xpose.msra.mxu0 0
      %3263 = vmatprep.subr.bf16.mxu0 0
      %3264 = vmatpush1.bf16.xpose.msra.mxu0 0
      %3265 = vmatprep.subr.bf16.mxu0 0
      %3266 = vmatpush1.bf16.xpose.msra.mxu0 0
      %3267 = vmatprep.subr.bf16.mxu0 0
      %3268 = vmatpush1.bf16.xpose.msra.mxu0 0
      %3269 = vmatprep.subr.bf16.mxu0 0
      %3270 = vmatpush1.bf16.xpose.msra.mxu0 0
      %3271 = vmatprep.subr.bf16.mxu0 0
      %3272 = vmatpush1.bf16.xpose.msra.mxu0 0
      %3273 = vmatprep.subr.bf16.mxu0 0
      %3274 = vmatpush1.bf16.xpose.msra.mxu0 0
      %3275 = vmatprep.subr.bf16.mxu0 0
      %3276 = vmatpush1.bf16.xpose.msra.mxu0 0
      %3277 = vmatprep.mubr.bf16.mxu0 0
      %3278 = vmatmul.mubr.bf16.gmra.mrb[0].mxu0 %v2732
      %v3279 = vpop.f32.mrb[0].mxu0
      %v3280 = vadd.f32 %v3176, %v3279
      %v3281 = vpop.f32.mrb[0].mxu0
      %v3282 = vpop.f32.mrb[0].mxu0
      %v3283 = vpop.f32.mrb[0].mxu0
      %3284 = vdwg.mxu0
      %v3287 = vunpack.c.l.b16 %v3156
      %v3288 = vunpack.c.l.b16 %v3157
      %v3289 = vpack.c.b16 %v3288, %v3287
      %v3291 = vsel %vm642, %v3289, 0
      %3293 = vmatprep.subr.bf16.mxu0 0
      %3294 = vmatpush1.bf16.xpose.msra.mxu0 %v3291
      %3295 = vmatprep.subr.bf16.mxu0 0
      %3296 = vmatpush1.bf16.xpose.msra.mxu0 0
      %3297 = vmatprep.subr.bf16.mxu0 0
      %3298 = vmatpush1.bf16.xpose.msra.mxu0 0
      %3299 = vmatprep.subr.bf16.mxu0 0
      %3300 = vmatpush1.bf16.xpose.msra.mxu0 0
      %3301 = vmatprep.subr.bf16.mxu0 0
      %3302 = vmatpush1.bf16.xpose.msra.mxu0 0
      %3303 = vmatprep.subr.bf16.mxu0 0
      %3304 = vmatpush1.bf16.xpose.msra.mxu0 0
      %3305 = vmatprep.subr.bf16.mxu0 0
      %3306 = vmatpush1.bf16.xpose.msra.mxu0 0
      %3307 = vmatprep.subr.bf16.mxu0 0
      %3308 = vmatpush1.bf16.xpose.msra.mxu0 0
      %3309 = vmatprep.subr.bf16.mxu0 0
      %3310 = vmatpush1.bf16.xpose.msra.mxu0 0
      %3311 = vmatprep.subr.bf16.mxu0 0
      %3312 = vmatpush1.bf16.xpose.msra.mxu0 0
      %3313 = vmatprep.subr.bf16.mxu0 0
      %3314 = vmatpush1.bf16.xpose.msra.mxu0 0
      %3315 = vmatprep.subr.bf16.mxu0 0
      %3316 = vmatpush1.bf16.xpose.msra.mxu0 0
      %3317 = vmatprep.subr.bf16.mxu0 0
      %3318 = vmatpush1.bf16.xpose.msra.mxu0 0
      %3319 = vmatprep.subr.bf16.mxu0 0
      %3320 = vmatpush1.bf16.xpose.msra.mxu0 0
      %3321 = vmatprep.subr.bf16.mxu0 0
      %3322 = vmatpush1.bf16.xpose.msra.mxu0 0
      %3323 = vmatprep.subr.bf16.mxu0 0
      %3324 = vmatpush1.bf16.xpose.msra.mxu0 0
      %3325 = vmatprep.mubr.bf16.mxu0 0
      %3326 = vmatmul.mubr.bf16.gmra.mrb[0].mxu0 %v2732
      %v3327 = vpop.f32.mrb[0].mxu0
      %v3328 = vadd.f32 %v3180, %v3327
      %v3329 = vpop.f32.mrb[0].mxu0
      %v3330 = vpop.f32.mrb[0].mxu0
      %v3331 = vpop.f32.mrb[0].mxu0
      %3332 = vdwg.mxu0
      %v3335 = vunpack.c.l.b16 %v3158
      %v3336 = vunpack.c.l.b16 %v3159
      %v3337 = vpack.c.b16 %v3336, %v3335
      %v3339 = vsel %vm642, %v3337, 0
      %3341 = vmatprep.subr.bf16.mxu0 0
      %3342 = vmatpush1.bf16.xpose.msra.mxu0 %v3339
      %3343 = vmatprep.subr.bf16.mxu0 0
      %3344 = vmatpush1.bf16.xpose.msra.mxu0 0
      %3345 = vmatprep.subr.bf16.mxu0 0
      %3346 = vmatpush1.bf16.xpose.msra.mxu0 0
      %3347 = vmatprep.subr.bf16.mxu0 0
      %3348 = vmatpush1.bf16.xpose.msra.mxu0 0
      %3349 = vmatprep.subr.bf16.mxu0 0
      %3350 = vmatpush1.bf16.xpose.msra.mxu0 0
      %3351 = vmatprep.subr.bf16.mxu0 0
      %3352 = vmatpush1.bf16.xpose.msra.mxu0 0
      %3353 = vmatprep.subr.bf16.mxu0 0
      %3354 = vmatpush1.bf16.xpose.msra.mxu0 0
      %3355 = vmatprep.subr.bf16.mxu0 0
      %3356 = vmatpush1.bf16.xpose.msra.mxu0 0
      %3357 = vmatprep.subr.bf16.mxu0 0
      %3358 = vmatpush1.bf16.xpose.msra.mxu0 0
      %3359 = vmatprep.subr.bf16.mxu0 0
      %3360 = vmatpush1.bf16.xpose.msra.mxu0 0
      %3361 = vmatprep.subr.bf16.mxu0 0
      %3362 = vmatpush1.bf16.xpose.msra.mxu0 0
      %3363 = vmatprep.subr.bf16.mxu0 0
      %3364 = vmatpush1.bf16.xpose.msra.mxu0 0
      %3365 = vmatprep.subr.bf16.mxu0 0
      %3366 = vmatpush1.bf16.xpose.msra.mxu0 0
      %3367 = vmatprep.subr.bf16.mxu0 0
      %3368 = vmatpush1.bf16.xpose.msra.mxu0 0
      %3369 = vmatprep.subr.bf16.mxu0 0
      %3370 = vmatpush1.bf16.xpose.msra.mxu0 0
      %3371 = vmatprep.subr.bf16.mxu0 0
      %3372 = vmatpush1.bf16.xpose.msra.mxu0 0
      %3373 = vmatprep.mubr.bf16.mxu0 0
      %3374 = vmatmul.mubr.bf16.gmra.mrb[0].mxu0 %v2732
      %v3375 = vpop.f32.mrb[0].mxu0
      %v3376 = vadd.f32 %v3184, %v3375
      %v3377 = vpop.f32.mrb[0].mxu0
      %v3378 = vpop.f32.mrb[0].mxu0
      %v3379 = vpop.f32.mrb[0].mxu0
      %3380 = vdwg.mxu0
      %v3381 = vpack.c.bf16 %v2772, %v2772
      %v3382 = vpack.c.bf16 %v2820, %v2820
      %v3383 = vpack.c.bf16 %v2868, %v2868
      %v3384 = vpack.c.bf16 %v2916, %v2916
      %v3385 = vpack.c.bf16 %v3002, %v3002
      %v3386 = vpack.c.bf16 %v3050, %v3050
      %v3387 = vpack.c.bf16 %v3098, %v3098
      %v3388 = vpack.c.bf16 %v3146, %v3146
      %v3390 = vsel %vm1297, %v3381, 0
      %v3393 = vsel %vm1297, %v3385, 0
      %3395 = vmatprep.subr.bf16.mxu0 0
      %3396 = vmatpush1.bf16.xpose.msra.mxu0 %v3393
      %3397 = vmatprep.subr.bf16.mxu0 0
      %3398 = vmatpush1.bf16.xpose.msra.mxu0 0
      %3399 = vmatprep.subr.bf16.mxu0 0
      %3400 = vmatpush1.bf16.xpose.msra.mxu0 0
      %3401 = vmatprep.subr.bf16.mxu0 0
      %3402 = vmatpush1.bf16.xpose.msra.mxu0 0
      %3403 = vmatprep.subr.bf16.mxu0 0
      %3404 = vmatpush1.bf16.xpose.msra.mxu0 0
      %3405 = vmatprep.subr.bf16.mxu0 0
      %3406 = vmatpush1.bf16.xpose.msra.mxu0 0
      %3407 = vmatprep.subr.bf16.mxu0 0
      %3408 = vmatpush1.bf16.xpose.msra.mxu0 0
      %3409 = vmatprep.subr.bf16.mxu0 0
      %3410 = vmatpush1.bf16.xpose.msra.mxu0 0
      %3411 = vmatprep.subr.bf16.mxu0 0
      %3412 = vmatpush1.bf16.xpose.msra.mxu0 0
      %3413 = vmatprep.subr.bf16.mxu0 0
      %3414 = vmatpush1.bf16.xpose.msra.mxu0 0
      %3415 = vmatprep.subr.bf16.mxu0 0
      %3416 = vmatpush1.bf16.xpose.msra.mxu0 0
      %3417 = vmatprep.subr.bf16.mxu0 0
      %3418 = vmatpush1.bf16.xpose.msra.mxu0 0
      %3419 = vmatprep.subr.bf16.mxu0 0
      %3420 = vmatpush1.bf16.xpose.msra.mxu0 0
      %3421 = vmatprep.subr.bf16.mxu0 0
      %3422 = vmatpush1.bf16.xpose.msra.mxu0 0
      %3423 = vmatprep.subr.bf16.mxu0 0
      %3424 = vmatpush1.bf16.xpose.msra.mxu0 0
      %3425 = vmatprep.subr.bf16.mxu0 0
      %3426 = vmatpush1.bf16.xpose.msra.mxu0 0
      %3427 = vmatprep.mubr.bf16.mxu0 0
      %3428 = vmatmul.mubr.bf16.gmra.mrb[0].mxu0 %v3390
      %v3429 = vpop.f32.mrb[0].mxu0
      %v3430 = vadd.f32 0.0, %v3429
      %v3431 = vpop.f32.mrb[0].mxu0
      %v3432 = vpop.f32.mrb[0].mxu0
      %v3433 = vpop.f32.mrb[0].mxu0
      %3434 = vdwg.mxu0
      %v3436 = vsel %vm1297, %v3382, 0
      %v3439 = vsel %vm1297, %v3386, 0
      %3441 = vmatprep.subr.bf16.mxu0 0
      %3442 = vmatpush1.bf16.xpose.msra.mxu0 %v3439
      %3443 = vmatprep.subr.bf16.mxu0 0
      %3444 = vmatpush1.bf16.xpose.msra.mxu0 0
      %3445 = vmatprep.subr.bf16.mxu0 0
      %3446 = vmatpush1.bf16.xpose.msra.mxu0 0
      %3447 = vmatprep.subr.bf16.mxu0 0
      %3448 = vmatpush1.bf16.xpose.msra.mxu0 0
      %3449 = vmatprep.subr.bf16.mxu0 0
      %3450 = vmatpush1.bf16.xpose.msra.mxu0 0
      %3451 = vmatprep.subr.bf16.mxu0 0
      %3452 = vmatpush1.bf16.xpose.msra.mxu0 0
      %3453 = vmatprep.subr.bf16.mxu0 0
      %3454 = vmatpush1.bf16.xpose.msra.mxu0 0
      %3455 = vmatprep.subr.bf16.mxu0 0
      %3456 = vmatpush1.bf16.xpose.msra.mxu0 0
      %3457 = vmatprep.subr.bf16.mxu0 0
      %3458 = vmatpush1.bf16.xpose.msra.mxu0 0
      %3459 = vmatprep.subr.bf16.mxu0 0
      %3460 = vmatpush1.bf16.xpose.msra.mxu0 0
      %3461 = vmatprep.subr.bf16.mxu0 0
      %3462 = vmatpush1.bf16.xpose.msra.mxu0 0
      %3463 = vmatprep.subr.bf16.mxu0 0
      %3464 = vmatpush1.bf16.xpose.msra.mxu0 0
      %3465 = vmatprep.subr.bf16.mxu0 0
      %3466 = vmatpush1.bf16.xpose.msra.mxu0 0
      %3467 = vmatprep.subr.bf16.mxu0 0
      %3468 = vmatpush1.bf16.xpose.msra.mxu0 0
      %3469 = vmatprep.subr.bf16.mxu0 0
      %3470 = vmatpush1.bf16.xpose.msra.mxu0 0
      %3471 = vmatprep.subr.bf16.mxu0 0
      %3472 = vmatpush1.bf16.xpose.msra.mxu0 0
      %3473 = vmatprep.mubr.bf16.mxu0 0
      %3474 = vmatmul.mubr.bf16.gmra.mrb[0].mxu0 %v3436
      %v3475 = vpop.f32.mrb[0].mxu0
      %v3476 = vadd.f32 0.0, %v3475
      %v3477 = vpop.f32.mrb[0].mxu0
      %v3478 = vpop.f32.mrb[0].mxu0
      %v3479 = vpop.f32.mrb[0].mxu0
      %3480 = vdwg.mxu0
      %v3482 = vsel %vm1297, %v3383, 0
      %v3485 = vsel %vm1297, %v3387, 0
      %3487 = vmatprep.subr.bf16.mxu0 0
      %3488 = vmatpush1.bf16.xpose.msra.mxu0 %v3485
      %3489 = vmatprep.subr.bf16.mxu0 0
      %3490 = vmatpush1.bf16.xpose.msra.mxu0 0
      %3491 = vmatprep.subr.bf16.mxu0 0
      %3492 = vmatpush1.bf16.xpose.msra.mxu0 0
      %3493 = vmatprep.subr.bf16.mxu0 0
      %3494 = vmatpush1.bf16.xpose.msra.mxu0 0
      %3495 = vmatprep.subr.bf16.mxu0 0
      %3496 = vmatpush1.bf16.xpose.msra.mxu0 0
      %3497 = vmatprep.subr.bf16.mxu0 0
      %3498 = vmatpush1.bf16.xpose.msra.mxu0 0
      %3499 = vmatprep.subr.bf16.mxu0 0
      %3500 = vmatpush1.bf16.xpose.msra.mxu0 0
      %3501 = vmatprep.subr.bf16.mxu0 0
      %3502 = vmatpush1.bf16.xpose.msra.mxu0 0
      %3503 = vmatprep.subr.bf16.mxu0 0
      %3504 = vmatpush1.bf16.xpose.msra.mxu0 0
      %3505 = vmatprep.subr.bf16.mxu0 0
      %3506 = vmatpush1.bf16.xpose.msra.mxu0 0
      %3507 = vmatprep.subr.bf16.mxu0 0
      %3508 = vmatpush1.bf16.xpose.msra.mxu0 0
      %3509 = vmatprep.subr.bf16.mxu0 0
      %3510 = vmatpush1.bf16.xpose.msra.mxu0 0
      %3511 = vmatprep.subr.bf16.mxu0 0
      %3512 = vmatpush1.bf16.xpose.msra.mxu0 0
      %3513 = vmatprep.subr.bf16.mxu0 0
      %3514 = vmatpush1.bf16.xpose.msra.mxu0 0
      %3515 = vmatprep.subr.bf16.mxu0 0
      %3516 = vmatpush1.bf16.xpose.msra.mxu0 0
      %3517 = vmatprep.subr.bf16.mxu0 0
      %3518 = vmatpush1.bf16.xpose.msra.mxu0 0
      %3519 = vmatprep.mubr.bf16.mxu0 0
      %3520 = vmatmul.mubr.bf16.gmra.mrb[0].mxu0 %v3482
      %v3521 = vpop.f32.mrb[0].mxu0
      %v3522 = vadd.f32 0.0, %v3521
      %v3523 = vpop.f32.mrb[0].mxu0
      %v3524 = vpop.f32.mrb[0].mxu0
      %v3525 = vpop.f32.mrb[0].mxu0
      %3526 = vdwg.mxu0
      %v3528 = vsel %vm1297, %v3384, 0
      %v3531 = vsel %vm1297, %v3388, 0
      %3533 = vmatprep.subr.bf16.mxu0 0
      %3534 = vmatpush1.bf16.xpose.msra.mxu0 %v3531
      %3535 = vmatprep.subr.bf16.mxu0 0
      %3536 = vmatpush1.bf16.xpose.msra.mxu0 0
      %3537 = vmatprep.subr.bf16.mxu0 0
      %3538 = vmatpush1.bf16.xpose.msra.mxu0 0
      %3539 = vmatprep.subr.bf16.mxu0 0
      %3540 = vmatpush1.bf16.xpose.msra.mxu0 0
      %3541 = vmatprep.subr.bf16.mxu0 0
      %3542 = vmatpush1.bf16.xpose.msra.mxu0 0
      %3543 = vmatprep.subr.bf16.mxu0 0
      %3544 = vmatpush1.bf16.xpose.msra.mxu0 0
      %3545 = vmatprep.subr.bf16.mxu0 0
      %3546 = vmatpush1.bf16.xpose.msra.mxu0 0
      %3547 = vmatprep.subr.bf16.mxu0 0
      %3548 = vmatpush1.bf16.xpose.msra.mxu0 0
      %3549 = vmatprep.subr.bf16.mxu0 0
      %3550 = vmatpush1.bf16.xpose.msra.mxu0 0
      %3551 = vmatprep.subr.bf16.mxu0 0
      %3552 = vmatpush1.bf16.xpose.msra.mxu0 0
      %3553 = vmatprep.subr.bf16.mxu0 0
      %3554 = vmatpush1.bf16.xpose.msra.mxu0 0
      %3555 = vmatprep.subr.bf16.mxu0 0
      %3556 = vmatpush1.bf16.xpose.msra.mxu0 0
      %3557 = vmatprep.subr.bf16.mxu0 0
      %3558 = vmatpush1.bf16.xpose.msra.mxu0 0
      %3559 = vmatprep.subr.bf16.mxu0 0
      %3560 = vmatpush1.bf16.xpose.msra.mxu0 0
      %3561 = vmatprep.subr.bf16.mxu0 0
      %3562 = vmatpush1.bf16.xpose.msra.mxu0 0
      %3563 = vmatprep.subr.bf16.mxu0 0
      %3564 = vmatpush1.bf16.xpose.msra.mxu0 0
      %3565 = vmatprep.mubr.bf16.mxu0 0
      %3566 = vmatmul.mubr.bf16.gmra.mrb[0].mxu0 %v3528
      %v3567 = vpop.f32.mrb[0].mxu0
      %v3568 = vadd.f32 0.0, %v3567
      %v3569 = vpop.f32.mrb[0].mxu0
      %v3570 = vpop.f32.mrb[0].mxu0
      %v3571 = vpop.f32.mrb[0].mxu0
      %3572 = vdwg.mxu0
      %v3573 = vsel %vm1482, %v3430, -inf
      %3574 = vmax.xlane.f32.xlu0 %v3573
      %v3575 = vpop.xlane.xlu0 %3574
      %v3576 = vsel %vm1482, %v3476, -inf
      %3577 = vmax.xlane.f32.xlu0 %v3576
      %v3578 = vpop.xlane.xlu0 %3577
      %v3579 = vsel %vm1482, %v3522, -inf
      %3580 = vmax.xlane.f32.xlu0 %v3579
      %v3581 = vpop.xlane.xlu0 %3580
      %v3582 = vsel %vm1482, %v3568, -inf
      %3583 = vmax.xlane.f32.xlu0 %v3582
      %v3584 = vpop.xlane.xlu0 %3583
      %v3585 = vsub.f32 %v3430, %v3575
      %v3586 = vsub.f32 %v3476, %v3578
      %v3587 = vsub.f32 %v3522, %v3581
      %v3588 = vsub.f32 %v3568, %v3584
      %v3589 = vmul.f32 %v3585, 1.442695
      %v3590 = vpow.pop %v3589
      %v3591 = vmul.f32 %v3586, 1.442695
      %v3592 = vpow.pop %v3591
      %v3593 = vmul.f32 %v3587, 1.442695
      %v3594 = vpow.pop %v3593
      %v3595 = vmul.f32 %v3588, 1.442695
      %v3596 = vpow.pop %v3595
      %v3597 = vsel %vm1482, %v3590, 0.0
      %3598 = vadd.xlane.f32.xlu0 %v3597
      %v3599 = vpop.xlane.xlu0 %3598
      %v3600 = vsel %vm1482, %v3592, 0.0
      %3601 = vadd.xlane.f32.xlu0 %v3600
      %v3602 = vpop.xlane.xlu0 %3601
      %v3603 = vsel %vm1482, %v3594, 0.0
      %3604 = vadd.xlane.f32.xlu0 %v3603
      %v3605 = vpop.xlane.xlu0 %3604
      %v3606 = vsel %vm1482, %v3596, 0.0
      %3607 = vadd.xlane.f32.xlu0 %v3606
      %v3608 = vpop.xlane.xlu0 %3607
      %v3609 = vrcp.pop %v3599
      %v3610 = vrcp.pop %v3602
      %v3611 = vrcp.pop %v3605
      %v3612 = vrcp.pop %v3608
      %v3613 = vmul.f32 %v3590, %v3609
      %v3614 = vmul.f32 %v3592, %v3610
      %v3615 = vmul.f32 %v3594, %v3611
      %v3616 = vmul.f32 %v3596, %v3612
      %v3617 = vpack.c.bf16 %v3613, %v3613
      %v3618 = vpack.c.bf16 %v3614, %v3614
      %v3619 = vpack.c.bf16 %v3615, %v3615
      %v3620 = vpack.c.bf16 %v3616, %v3616
      %v3621 = vpack.c.bf16 %v3232, %v3232
      %v3622 = vpack.c.bf16 %v3280, %v3280
      %v3623 = vpack.c.bf16 %v3328, %v3328
      %v3624 = vpack.c.bf16 %v3376, %v3376
      %v3626 = vsel %vm1482, %v3617, 0
      %v3629 = vsel %vm1538, %v3621, 0
      %3631 = vmatprep.subr.bf16.mxu0 0
      %3632 = vmatpush1.bf16.msra.mxu0 %v3629
      %3633 = vmatprep.subr.bf16.mxu0 0
      %3634 = vmatpush1.bf16.msra.mxu0 0
      %3635 = vmatprep.subr.bf16.mxu0 0
      %3636 = vmatpush1.bf16.msra.mxu0 0
      %3637 = vmatprep.subr.bf16.mxu0 0
      %3638 = vmatpush1.bf16.msra.mxu0 0
      %3639 = vmatprep.subr.bf16.mxu0 0
      %3640 = vmatpush1.bf16.msra.mxu0 0
      %3641 = vmatprep.subr.bf16.mxu0 0
      %3642 = vmatpush1.bf16.msra.mxu0 0
      %3643 = vmatprep.subr.bf16.mxu0 0
      %3644 = vmatpush1.bf16.msra.mxu0 0
      %3645 = vmatprep.subr.bf16.mxu0 0
      %3646 = vmatpush1.bf16.msra.mxu0 0
      %3647 = vmatprep.subr.bf16.mxu0 0
      %3648 = vmatpush1.bf16.msra.mxu0 0
      %3649 = vmatprep.subr.bf16.mxu0 0
      %3650 = vmatpush1.bf16.msra.mxu0 0
      %3651 = vmatprep.subr.bf16.mxu0 0
      %3652 = vmatpush1.bf16.msra.mxu0 0
      %3653 = vmatprep.subr.bf16.mxu0 0
      %3654 = vmatpush1.bf16.msra.mxu0 0
      %3655 = vmatprep.subr.bf16.mxu0 0
      %3656 = vmatpush1.bf16.msra.mxu0 0
      %3657 = vmatprep.subr.bf16.mxu0 0
      %3658 = vmatpush1.bf16.msra.mxu0 0
      %3659 = vmatprep.subr.bf16.mxu0 0
      %3660 = vmatpush1.bf16.msra.mxu0 0
      %3661 = vmatprep.subr.bf16.mxu0 0
      %3662 = vmatpush1.bf16.msra.mxu0 0
      %3663 = vmatprep.mubr.bf16.mxu0 0
      %3664 = vmatmul.mubr.bf16.gmra.mrb[0].mxu0 %v3626
      %v3665 = vpop.f32.mrb[0].mxu0
      %v3666 = vadd.f32 0.0, %v3665
      %v3667 = vpop.f32.mrb[0].mxu0
      %v3668 = vpop.f32.mrb[0].mxu0
      %v3669 = vpop.f32.mrb[0].mxu0
      %3670 = vdwg.mxu0
      %v3672 = vsel %vm1482, %v3618, 0
      %v3675 = vsel %vm1538, %v3622, 0
      %3677 = vmatprep.subr.bf16.mxu0 0
      %3678 = vmatpush1.bf16.msra.mxu0 %v3675
      %3679 = vmatprep.subr.bf16.mxu0 0
      %3680 = vmatpush1.bf16.msra.mxu0 0
      %3681 = vmatprep.subr.bf16.mxu0 0
      %3682 = vmatpush1.bf16.msra.mxu0 0
      %3683 = vmatprep.subr.bf16.mxu0 0
      %3684 = vmatpush1.bf16.msra.mxu0 0
      %3685 = vmatprep.subr.bf16.mxu0 0
      %3686 = vmatpush1.bf16.msra.mxu0 0
      %3687 = vmatprep.subr.bf16.mxu0 0
      %3688 = vmatpush1.bf16.msra.mxu0 0
      %3689 = vmatprep.subr.bf16.mxu0 0
      %3690 = vmatpush1.bf16.msra.mxu0 0
      %3691 = vmatprep.subr.bf16.mxu0 0
      %3692 = vmatpush1.bf16.msra.mxu0 0
      %3693 = vmatprep.subr.bf16.mxu0 0
      %3694 = vmatpush1.bf16.msra.mxu0 0
      %3695 = vmatprep.subr.bf16.mxu0 0
      %3696 = vmatpush1.bf16.msra.mxu0 0
      %3697 = vmatprep.subr.bf16.mxu0 0
      %3698 = vmatpush1.bf16.msra.mxu0 0
      %3699 = vmatprep.subr.bf16.mxu0 0
      %3700 = vmatpush1.bf16.msra.mxu0 0
      %3701 = vmatprep.subr.bf16.mxu0 0
      %3702 = vmatpush1.bf16.msra.mxu0 0
      %3703 = vmatprep.subr.bf16.mxu0 0
      %3704 = vmatpush1.bf16.msra.mxu0 0
      %3705 = vmatprep.subr.bf16.mxu0 0
      %3706 = vmatpush1.bf16.msra.mxu0 0
      %3707 = vmatprep.subr.bf16.mxu0 0
      %3708 = vmatpush1.bf16.msra.mxu0 0
      %3709 = vmatprep.mubr.bf16.mxu0 0
      %3710 = vmatmul.mubr.bf16.gmra.mrb[0].mxu0 %v3672
      %v3711 = vpop.f32.mrb[0].mxu0
      %v3712 = vadd.f32 0.0, %v3711
      %v3713 = vpop.f32.mrb[0].mxu0
      %v3714 = vpop.f32.mrb[0].mxu0
      %v3715 = vpop.f32.mrb[0].mxu0
      %3716 = vdwg.mxu0
      %v3718 = vsel %vm1482, %v3619, 0
      %v3721 = vsel %vm1538, %v3623, 0
      %3723 = vmatprep.subr.bf16.mxu0 0
      %3724 = vmatpush1.bf16.msra.mxu0 %v3721
      %3725 = vmatprep.subr.bf16.mxu0 0
      %3726 = vmatpush1.bf16.msra.mxu0 0
      %3727 = vmatprep.subr.bf16.mxu0 0
      %3728 = vmatpush1.bf16.msra.mxu0 0
      %3729 = vmatprep.subr.bf16.mxu0 0
      %3730 = vmatpush1.bf16.msra.mxu0 0
      %3731 = vmatprep.subr.bf16.mxu0 0
      %3732 = vmatpush1.bf16.msra.mxu0 0
      %3733 = vmatprep.subr.bf16.mxu0 0
      %3734 = vmatpush1.bf16.msra.mxu0 0
      %3735 = vmatprep.subr.bf16.mxu0 0
      %3736 = vmatpush1.bf16.msra.mxu0 0
      %3737 = vmatprep.subr.bf16.mxu0 0
      %3738 = vmatpush1.bf16.msra.mxu0 0
      %3739 = vmatprep.subr.bf16.mxu0 0
      %3740 = vmatpush1.bf16.msra.mxu0 0
      %3741 = vmatprep.subr.bf16.mxu0 0
      %3742 = vmatpush1.bf16.msra.mxu0 0
      %3743 = vmatprep.subr.bf16.mxu0 0
      %3744 = vmatpush1.bf16.msra.mxu0 0
      %3745 = vmatprep.subr.bf16.mxu0 0
      %3746 = vmatpush1.bf16.msra.mxu0 0
      %3747 = vmatprep.subr.bf16.mxu0 0
      %3748 = vmatpush1.bf16.msra.mxu0 0
      %3749 = vmatprep.subr.bf16.mxu0 0
      %3750 = vmatpush1.bf16.msra.mxu0 0
      %3751 = vmatprep.subr.bf16.mxu0 0
      %3752 = vmatpush1.bf16.msra.mxu0 0
      %3753 = vmatprep.subr.bf16.mxu0 0
      %3754 = vmatpush1.bf16.msra.mxu0 0
      %3755 = vmatprep.mubr.bf16.mxu0 0
      %3756 = vmatmul.mubr.bf16.gmra.mrb[0].mxu0 %v3718
      %v3757 = vpop.f32.mrb[0].mxu0
      %v3758 = vadd.f32 0.0, %v3757
      %v3759 = vpop.f32.mrb[0].mxu0
      %v3760 = vpop.f32.mrb[0].mxu0
      %v3761 = vpop.f32.mrb[0].mxu0
      %3762 = vdwg.mxu0
      %v3764 = vsel %vm1482, %v3620, 0
      %v3767 = vsel %vm1538, %v3624, 0
      %3769 = vmatprep.subr.bf16.mxu0 0
      %3770 = vmatpush1.bf16.msra.mxu0 %v3767
      %3771 = vmatprep.subr.bf16.mxu0 0
      %3772 = vmatpush1.bf16.msra.mxu0 0
      %3773 = vmatprep.subr.bf16.mxu0 0
      %3774 = vmatpush1.bf16.msra.mxu0 0
      %3775 = vmatprep.subr.bf16.mxu0 0
      %3776 = vmatpush1.bf16.msra.mxu0 0
      %3777 = vmatprep.subr.bf16.mxu0 0
      %3778 = vmatpush1.bf16.msra.mxu0 0
      %3779 = vmatprep.subr.bf16.mxu0 0
      %3780 = vmatpush1.bf16.msra.mxu0 0
      %3781 = vmatprep.subr.bf16.mxu0 0
      %3782 = vmatpush1.bf16.msra.mxu0 0
      %3783 = vmatprep.subr.bf16.mxu0 0
      %3784 = vmatpush1.bf16.msra.mxu0 0
      %3785 = vmatprep.subr.bf16.mxu0 0
      %3786 = vmatpush1.bf16.msra.mxu0 0
      %3787 = vmatprep.subr.bf16.mxu0 0
      %3788 = vmatpush1.bf16.msra.mxu0 0
      %3789 = vmatprep.subr.bf16.mxu0 0
      %3790 = vmatpush1.bf16.msra.mxu0 0
      %3791 = vmatprep.subr.bf16.mxu0 0
      %3792 = vmatpush1.bf16.msra.mxu0 0
      %3793 = vmatprep.subr.bf16.mxu0 0
      %3794 = vmatpush1.bf16.msra.mxu0 0
      %3795 = vmatprep.subr.bf16.mxu0 0
      %3796 = vmatpush1.bf16.msra.mxu0 0
      %3797 = vmatprep.subr.bf16.mxu0 0
      %3798 = vmatpush1.bf16.msra.mxu0 0
      %3799 = vmatprep.subr.bf16.mxu0 0
      %3800 = vmatpush1.bf16.msra.mxu0 0
      %3801 = vmatprep.mubr.bf16.mxu0 0
      %3802 = vmatmul.mubr.bf16.gmra.mrb[0].mxu0 %v3764
      %v3803 = vpop.f32.mrb[0].mxu0
      %v3804 = vadd.f32 0.0, %v3803
      %v3805 = vpop.f32.mrb[0].mxu0
      %v3806 = vpop.f32.mrb[0].mxu0
      %v3807 = vpop.f32.mrb[0].mxu0
      %3808 = vdwg.mxu0
      %v3809 = vpack.c.bf16 %v3666, %v3666
      %v3810 = vpack.c.bf16 %v3712, %v3712
      %v3811 = vpack.c.bf16 %v3758, %v3758
      %v3812 = vpack.c.bf16 %v3804, %v3804
      %s3813 = scalar_lea.vmem %s7, 128
      %v3814 = vld [vmem:[%s3813] sm:$0xf]
      %v3815 = vld [vmem:[%s3813 + $0x4] sm:$0xf]
      %v3816 = vld [vmem:[%s3813 + $0x8] sm:$0xf]
      %v3817 = vld [vmem:[%s3813 + $0xc] sm:$0xf]
      %v3818 = vld [vmem:[%s3813 + $0x10] sm:$0xf]
      %v3819 = vld [vmem:[%s3813 + $0x14] sm:$0xf]
      %v3820 = vld [vmem:[%s3813 + $0x18] sm:$0xf]
      %v3821 = vld [vmem:[%s3813 + $0x1c] sm:$0xf]
      %v3822 = vld [vmem:[%s3813 + $0x20] sm:$0xf]
      %v3823 = vld [vmem:[%s3813 + $0x24] sm:$0xf]
      %v3824 = vld [vmem:[%s3813 + $0x28] sm:$0xf]
      %v3825 = vld [vmem:[%s3813 + $0x2c] sm:$0xf]
      %v3826 = vld [vmem:[%s3813 + $0x30] sm:$0xf]
      %v3827 = vld [vmem:[%s3813 + $0x34] sm:$0xf]
      %v3828 = vld [vmem:[%s3813 + $0x38] sm:$0xf]
      %v3829 = vld [vmem:[%s3813 + $0x3c] sm:$0xf]
      %v3830 = vld [vmem:[%s3813 + $0x40] sm:$0xf]
      %v3831 = vld [vmem:[%s3813 + $0x44] sm:$0xf]
      %v3832 = vld [vmem:[%s3813 + $0x48] sm:$0xf]
      %v3833 = vld [vmem:[%s3813 + $0x4c] sm:$0xf]
      %v3834 = vld [vmem:[%s3813 + $0x50] sm:$0xf]
      %v3835 = vld [vmem:[%s3813 + $0x54] sm:$0xf]
      %v3836 = vld [vmem:[%s3813 + $0x58] sm:$0xf]
      %v3837 = vld [vmem:[%s3813 + $0x5c] sm:$0xf]
      %v3838 = vld [vmem:[%s3813 + $0x60] sm:$0xf]
      %v3839 = vld [vmem:[%s3813 + $0x64] sm:$0xf]
      %v3840 = vld [vmem:[%s3813 + $0x68] sm:$0xf]
      %v3841 = vld [vmem:[%s3813 + $0x6c] sm:$0xf]
      %v3842 = vld [vmem:[%s3813 + $0x70] sm:$0xf]
      %v3843 = vld [vmem:[%s3813 + $0x74] sm:$0xf]
      %v3844 = vld [vmem:[%s3813 + $0x78] sm:$0xf]
      %v3845 = vld [vmem:[%s3813 + $0x7c] sm:$0xf]
      %v3854 = vunpack.c.l.b16 %v3814
      %v3855 = vunpack.c.l.b16 %v3815
      %v3856 = vunpack.c.l.b16 %v3816
      %v3857 = vunpack.c.l.b16 %v3817
      %v3858 = vunpack.c.l.b16 %v3818
      %v3859 = vunpack.c.l.b16 %v3819
      %v3860 = vunpack.c.l.b16 %v3820
      %v3861 = vunpack.c.l.b16 %v3821
      %v3862 = vpack.c.b16 %v3855, %v3854
      %v3863 = vpack.c.b16 %v3857, %v3856
      %v3864 = vpack.c.b16 %v3859, %v3858
      %v3865 = vpack.c.b16 %v3861, %v3860
      %v3867 = vsel %vm1297, %v3809, 0
      %v3870 = vsel %vm1297, %v3862, 0
      %v3873 = vsel %vm1297, %v3863, 0
      %v3876 = vsel %vm1297, %v3864, 0
      %v3879 = vsel %vm1297, %v3865, 0
      %3881 = vmatprep.subr.bf16.mxu0 0
      %3882 = vmatpush1.bf16.xpose.msra.mxu0 %v3870
      %3883 = vmatprep.subr.bf16.mxu0 0
      %3884 = vmatpush1.bf16.xpose.msra.mxu0 %v3873
      %3885 = vmatprep.subr.bf16.mxu0 0
      %3886 = vmatpush1.bf16.xpose.msra.mxu0 %v3876
      %3887 = vmatprep.subr.bf16.mxu0 0
      %3888 = vmatpush1.bf16.xpose.msra.mxu0 %v3879
      %3889 = vmatprep.subr.bf16.mxu0 0
      %3890 = vmatpush1.bf16.xpose.msra.mxu0 0
      %3891 = vmatprep.subr.bf16.mxu0 0
      %3892 = vmatpush1.bf16.xpose.msra.mxu0 0
      %3893 = vmatprep.subr.bf16.mxu0 0
      %3894 = vmatpush1.bf16.xpose.msra.mxu0 0
      %3895 = vmatprep.subr.bf16.mxu0 0
      %3896 = vmatpush1.bf16.xpose.msra.mxu0 0
      %3897 = vmatprep.subr.bf16.mxu0 0
      %3898 = vmatpush1.bf16.xpose.msra.mxu0 0
      %3899 = vmatprep.subr.bf16.mxu0 0
      %3900 = vmatpush1.bf16.xpose.msra.mxu0 0
      %3901 = vmatprep.subr.bf16.mxu0 0
      %3902 = vmatpush1.bf16.xpose.msra.mxu0 0
      %3903 = vmatprep.subr.bf16.mxu0 0
      %3904 = vmatpush1.bf16.xpose.msra.mxu0 0
      %3905 = vmatprep.subr.bf16.mxu0 0
      %3906 = vmatpush1.bf16.xpose.msra.mxu0 0
      %3907 = vmatprep.subr.bf16.mxu0 0
      %3908 = vmatpush1.bf16.xpose.msra.mxu0 0
      %3909 = vmatprep.subr.bf16.mxu0 0
      %3910 = vmatpush1.bf16.xpose.msra.mxu0 0
      %3911 = vmatprep.subr.bf16.mxu0 0
      %3912 = vmatpush1.bf16.xpose.msra.mxu0 0
      %3913 = vmatprep.mubr.bf16.mxu0 0
      %3914 = vmatmul.mubr.bf16.gmra.mrb[0].mxu0 %v3867
      %v3915 = vpop.f32.mrb[0].mxu0
      %v3916 = vadd.f32 0.0, %v3915
      %v3917 = vpop.f32.mrb[0].mxu0
      %v3918 = vpop.f32.mrb[0].mxu0
      %v3919 = vpop.f32.mrb[0].mxu0
      %3920 = vdwg.mxu0
      %v3929 = vunpack.c.l.b16 %v3822
      %v3930 = vunpack.c.l.b16 %v3823
      %v3931 = vunpack.c.l.b16 %v3824
      %v3932 = vunpack.c.l.b16 %v3825
      %v3933 = vunpack.c.l.b16 %v3826
      %v3934 = vunpack.c.l.b16 %v3827
      %v3935 = vunpack.c.l.b16 %v3828
      %v3936 = vunpack.c.l.b16 %v3829
      %v3937 = vpack.c.b16 %v3930, %v3929
      %v3938 = vpack.c.b16 %v3932, %v3931
      %v3939 = vpack.c.b16 %v3934, %v3933
      %v3940 = vpack.c.b16 %v3936, %v3935
      %v3942 = vsel %vm1297, %v3810, 0
      %v3945 = vsel %vm1297, %v3937, 0
      %v3948 = vsel %vm1297, %v3938, 0
      %v3951 = vsel %vm1297, %v3939, 0
      %v3954 = vsel %vm1297, %v3940, 0
      %3956 = vmatprep.subr.bf16.mxu0 0
      %3957 = vmatpush1.bf16.xpose.msra.mxu0 %v3945
      %3958 = vmatprep.subr.bf16.mxu0 0
      %3959 = vmatpush1.bf16.xpose.msra.mxu0 %v3948
      %3960 = vmatprep.subr.bf16.mxu0 0
      %3961 = vmatpush1.bf16.xpose.msra.mxu0 %v3951
      %3962 = vmatprep.subr.bf16.mxu0 0
      %3963 = vmatpush1.bf16.xpose.msra.mxu0 %v3954
      %3964 = vmatprep.subr.bf16.mxu0 0
      %3965 = vmatpush1.bf16.xpose.msra.mxu0 0
      %3966 = vmatprep.subr.bf16.mxu0 0
      %3967 = vmatpush1.bf16.xpose.msra.mxu0 0
      %3968 = vmatprep.subr.bf16.mxu0 0
      %3969 = vmatpush1.bf16.xpose.msra.mxu0 0
      %3970 = vmatprep.subr.bf16.mxu0 0
      %3971 = vmatpush1.bf16.xpose.msra.mxu0 0
      %3972 = vmatprep.subr.bf16.mxu0 0
      %3973 = vmatpush1.bf16.xpose.msra.mxu0 0
      %3974 = vmatprep.subr.bf16.mxu0 0
      %3975 = vmatpush1.bf16.xpose.msra.mxu0 0
      %3976 = vmatprep.subr.bf16.mxu0 0
      %3977 = vmatpush1.bf16.xpose.msra.mxu0 0
      %3978 = vmatprep.subr.bf16.mxu0 0
      %3979 = vmatpush1.bf16.xpose.msra.mxu0 0
      %3980 = vmatprep.subr.bf16.mxu0 0
      %3981 = vmatpush1.bf16.xpose.msra.mxu0 0
      %3982 = vmatprep.subr.bf16.mxu0 0
      %3983 = vmatpush1.bf16.xpose.msra.mxu0 0
      %3984 = vmatprep.subr.bf16.mxu0 0
      %3985 = vmatpush1.bf16.xpose.msra.mxu0 0
      %3986 = vmatprep.subr.bf16.mxu0 0
      %3987 = vmatpush1.bf16.xpose.msra.mxu0 0
      %3988 = vmatprep.mubr.bf16.mxu0 0
      %3989 = vmatmul.mubr.bf16.gmra.mrb[0].mxu0 %v3942
      %v3990 = vpop.f32.mrb[0].mxu0
      %v3991 = vadd.f32 0.0, %v3990
      %v3992 = vpop.f32.mrb[0].mxu0
      %v3993 = vpop.f32.mrb[0].mxu0
      %v3994 = vpop.f32.mrb[0].mxu0
      %3995 = vdwg.mxu0
      %v4004 = vunpack.c.l.b16 %v3830
      %v4005 = vunpack.c.l.b16 %v3831
      %v4006 = vunpack.c.l.b16 %v3832
      %v4007 = vunpack.c.l.b16 %v3833
      %v4008 = vunpack.c.l.b16 %v3834
      %v4009 = vunpack.c.l.b16 %v3835
      %v4010 = vunpack.c.l.b16 %v3836
      %v4011 = vunpack.c.l.b16 %v3837
      %v4012 = vpack.c.b16 %v4005, %v4004
      %v4013 = vpack.c.b16 %v4007, %v4006
      %v4014 = vpack.c.b16 %v4009, %v4008
      %v4015 = vpack.c.b16 %v4011, %v4010
      %v4017 = vsel %vm1297, %v3811, 0
      %v4020 = vsel %vm1297, %v4012, 0
      %v4023 = vsel %vm1297, %v4013, 0
      %v4026 = vsel %vm1297, %v4014, 0
      %v4029 = vsel %vm1297, %v4015, 0
      %4031 = vmatprep.subr.bf16.mxu0 0
      %4032 = vmatpush1.bf16.xpose.msra.mxu0 %v4020
      %4033 = vmatprep.subr.bf16.mxu0 0
      %4034 = vmatpush1.bf16.xpose.msra.mxu0 %v4023
      %4035 = vmatprep.subr.bf16.mxu0 0
      %4036 = vmatpush1.bf16.xpose.msra.mxu0 %v4026
      %4037 = vmatprep.subr.bf16.mxu0 0
      %4038 = vmatpush1.bf16.xpose.msra.mxu0 %v4029
      %4039 = vmatprep.subr.bf16.mxu0 0
      %4040 = vmatpush1.bf16.xpose.msra.mxu0 0
      %4041 = vmatprep.subr.bf16.mxu0 0
      %4042 = vmatpush1.bf16.xpose.msra.mxu0 0
      %4043 = vmatprep.subr.bf16.mxu0 0
      %4044 = vmatpush1.bf16.xpose.msra.mxu0 0
      %4045 = vmatprep.subr.bf16.mxu0 0
      %4046 = vmatpush1.bf16.xpose.msra.mxu0 0
      %4047 = vmatprep.subr.bf16.mxu0 0
      %4048 = vmatpush1.bf16.xpose.msra.mxu0 0
      %4049 = vmatprep.subr.bf16.mxu0 0
      %4050 = vmatpush1.bf16.xpose.msra.mxu0 0
      %4051 = vmatprep.subr.bf16.mxu0 0
      %4052 = vmatpush1.bf16.xpose.msra.mxu0 0
      %4053 = vmatprep.subr.bf16.mxu0 0
      %4054 = vmatpush1.bf16.xpose.msra.mxu0 0
      %4055 = vmatprep.subr.bf16.mxu0 0
      %4056 = vmatpush1.bf16.xpose.msra.mxu0 0
      %4057 = vmatprep.subr.bf16.mxu0 0
      %4058 = vmatpush1.bf16.xpose.msra.mxu0 0
      %4059 = vmatprep.subr.bf16.mxu0 0
      %4060 = vmatpush1.bf16.xpose.msra.mxu0 0
      %4061 = vmatprep.subr.bf16.mxu0 0
      %4062 = vmatpush1.bf16.xpose.msra.mxu0 0
      %4063 = vmatprep.mubr.bf16.mxu0 0
      %4064 = vmatmul.mubr.bf16.gmra.mrb[0].mxu0 %v4017
      %v4065 = vpop.f32.mrb[0].mxu0
      %v4066 = vadd.f32 0.0, %v4065
      %v4067 = vpop.f32.mrb[0].mxu0
      %v4068 = vpop.f32.mrb[0].mxu0
      %v4069 = vpop.f32.mrb[0].mxu0
      %4070 = vdwg.mxu0
      %v4079 = vunpack.c.l.b16 %v3838
      %v4080 = vunpack.c.l.b16 %v3839
      %v4081 = vunpack.c.l.b16 %v3840
      %v4082 = vunpack.c.l.b16 %v3841
      %v4083 = vunpack.c.l.b16 %v3842
      %v4084 = vunpack.c.l.b16 %v3843
      %v4085 = vunpack.c.l.b16 %v3844
      %v4086 = vunpack.c.l.b16 %v3845
      %v4087 = vpack.c.b16 %v4080, %v4079
      %v4088 = vpack.c.b16 %v4082, %v4081
      %v4089 = vpack.c.b16 %v4084, %v4083
      %v4090 = vpack.c.b16 %v4086, %v4085
      %v4092 = vsel %vm1297, %v3812, 0
      %v4095 = vsel %vm1297, %v4087, 0
      %v4098 = vsel %vm1297, %v4088, 0
      %v4101 = vsel %vm1297, %v4089, 0
      %v4104 = vsel %vm1297, %v4090, 0
      %4106 = vmatprep.subr.bf16.mxu0 0
      %4107 = vmatpush1.bf16.xpose.msra.mxu0 %v4095
      %4108 = vmatprep.subr.bf16.mxu0 0
      %4109 = vmatpush1.bf16.xpose.msra.mxu0 %v4098
      %4110 = vmatprep.subr.bf16.mxu0 0
      %4111 = vmatpush1.bf16.xpose.msra.mxu0 %v4101
      %4112 = vmatprep.subr.bf16.mxu0 0
      %4113 = vmatpush1.bf16.xpose.msra.mxu0 %v4104
      %4114 = vmatprep.subr.bf16.mxu0 0
      %4115 = vmatpush1.bf16.xpose.msra.mxu0 0
      %4116 = vmatprep.subr.bf16.mxu0 0
      %4117 = vmatpush1.bf16.xpose.msra.mxu0 0
      %4118 = vmatprep.subr.bf16.mxu0 0
      %4119 = vmatpush1.bf16.xpose.msra.mxu0 0
      %4120 = vmatprep.subr.bf16.mxu0 0
      %4121 = vmatpush1.bf16.xpose.msra.mxu0 0
      %4122 = vmatprep.subr.bf16.mxu0 0
      %4123 = vmatpush1.bf16.xpose.msra.mxu0 0
      %4124 = vmatprep.subr.bf16.mxu0 0
      %4125 = vmatpush1.bf16.xpose.msra.mxu0 0
      %4126 = vmatprep.subr.bf16.mxu0 0
      %4127 = vmatpush1.bf16.xpose.msra.mxu0 0
      %4128 = vmatprep.subr.bf16.mxu0 0
      %4129 = vmatpush1.bf16.xpose.msra.mxu0 0
      %4130 = vmatprep.subr.bf16.mxu0 0
      %4131 = vmatpush1.bf16.xpose.msra.mxu0 0
      %4132 = vmatprep.subr.bf16.mxu0 0
      %4133 = vmatpush1.bf16.xpose.msra.mxu0 0
      %4134 = vmatprep.subr.bf16.mxu0 0
      %4135 = vmatpush1.bf16.xpose.msra.mxu0 0
      %4136 = vmatprep.subr.bf16.mxu0 0
      %4137 = vmatpush1.bf16.xpose.msra.mxu0 0
      %4138 = vmatprep.mubr.bf16.mxu0 0
      %4139 = vmatmul.mubr.bf16.gmra.mrb[0].mxu0 %v4092
      %v4140 = vpop.f32.mrb[0].mxu0
      %v4141 = vadd.f32 0.0, %v4140
      %v4142 = vpop.f32.mrb[0].mxu0
      %v4143 = vpop.f32.mrb[0].mxu0
      %v4144 = vpop.f32.mrb[0].mxu0
      %4145 = vdwg.mxu0
      %v4146 = vsel %vm642, %v3916, 0.0
      %v4147 = vsel %vm642, %v3991, 0.0
      %v4148 = vadd.f32 %v4146, %v4147
      %v4149 = vsel %vm642, %v4066, 0.0
      %v4150 = vadd.f32 %v4148, %v4149
      %v4151 = vsel %vm642, %v4141, 0.0
      %v4152 = vadd.f32 %v4150, %v4151
      %s4153 = scalar_lea.vmem %s8, 1
      %v4154 = vld [vmem:[%s4153] sm:$0x1]
      %v4156 = vlaneseq
      %v4157 = vshrl.u32 %v4156, 7
      %v4158 = vsub.s32 0, %v4157
      %v4159 = vrot.slane %v4154, %v4158
      %v4161 = vadd.f32 %v4152, %v4159
      %v4162 = vadd.f32 %v2686, %v4161
      %s4163 = scalar_lea.vmem %s13, 1
      %v4164 = vld [vmem:[%s4163] sm:$0x1]
      %s4165 = scalar_lea.vmem %s14, 1
      %v4166 = vld [vmem:[%s4165] sm:$0x1]
      %v4167 = vsel %vm642, %v4162, 0.0
      %4168 = vadd.xlane.f32.xlu0 %v4167
      %v4169 = vpop.xlane.xlu0 %4168
      %v4170 = vmul.f32 %v4169, %v2077
      %v4171 = vsub.f32 %v4162, %v4170
      %v4172 = vmul.f32 %v4171, %v4171
      %v4173 = vsel %vm642, %v4172, 0.0
      %4174 = vadd.xlane.f32.xlu0 %v4173
      %v4175 = vpop.xlane.xlu0 %4174
      %v4176 = vmul.f32 %v4175, %v2077
      %v4177 = vadd.f32 %v4176, 1e-05
      %v4178 = vrsqrt.pop %v4177
      %v4179 = vmul.f32 %v4171, %v4178
      %v4181 = vlaneseq
      %v4182 = vshrl.u32 %v4181, 7
      %v4183 = vsub.s32 0, %v4182
      %v4184 = vrot.slane %v4164, %v4183
      %v4186 = vmul.f32 %v4179, %v4184
      %v4188 = vlaneseq
      %v4189 = vshrl.u32 %v4188, 7
      %v4190 = vsub.s32 0, %v4189
      %v4191 = vrot.slane %v4166, %v4190
      %v4193 = vadd.f32 %v4186, %v4191
      %v4194 = vpack.c.bf16 %v4193, %v4193
      %s4195 = scalar_lea.vmem %s9, 128
      %v4196 = vld [vmem:[%s4195] sm:$0xff]
      %v4197 = vld [vmem:[%s4195 + $0x8] sm:$0xff]
      %v4198 = vld [vmem:[%s4195 + $0x10] sm:$0xff]
      %v4199 = vld [vmem:[%s4195 + $0x18] sm:$0xff]
      %v4200 = vld [vmem:[%s4195 + $0x20] sm:$0xff]
      %v4201 = vld [vmem:[%s4195 + $0x28] sm:$0xff]
      %v4202 = vld [vmem:[%s4195 + $0x30] sm:$0xff]
      %v4203 = vld [vmem:[%s4195 + $0x38] sm:$0xff]
      %v4204 = vld [vmem:[%s4195 + $0x40] sm:$0xff]
      %v4205 = vld [vmem:[%s4195 + $0x48] sm:$0xff]
      %v4206 = vld [vmem:[%s4195 + $0x50] sm:$0xff]
      %v4207 = vld [vmem:[%s4195 + $0x58] sm:$0xff]
      %v4208 = vld [vmem:[%s4195 + $0x60] sm:$0xff]
      %v4209 = vld [vmem:[%s4195 + $0x68] sm:$0xff]
      %v4210 = vld [vmem:[%s4195 + $0x70] sm:$0xff]
      %v4211 = vld [vmem:[%s4195 + $0x78] sm:$0xff]
      %s4212 = scalar_lea.vmem %s10, 4
      %v4213 = vld [vmem:[%s4212] sm:$0xf]
      %v4215 = vlaneseq
      %v4216 = vshrl.u32 %v4215, 7
      %v4217 = vsub.s32 0, %v4216
      %v4218 = vrot.slane %v4213, %v4217
      %v4219 = vlaneseq
      %v4220 = vshrl.u32 %v4219, 7
      %v4221 = vsub.s32 1, %v4220
      %v4222 = vrot.slane %v4213, %v4221
      %v4223 = vlaneseq
      %v4224 = vshrl.u32 %v4223, 7
      %v4225 = vsub.s32 2, %v4224
      %v4226 = vrot.slane %v4213, %v4225
      %v4227 = vlaneseq
      %v4228 = vshrl.u32 %v4227, 7
      %v4229 = vsub.s32 3, %v4228
      %v4230 = vrot.slane %v4213, %v4229
      %v4251 = vunpack.c.l.b16 %v4196
      %v4252 = vunpack.c.h.b16 %v4196
      %v4253 = vunpack.c.l.b16 %v4197
      %v4254 = vunpack.c.h.b16 %v4197
      %v4255 = vunpack.c.l.b16 %v4198
      %v4256 = vunpack.c.h.b16 %v4198
      %v4257 = vunpack.c.l.b16 %v4199
      %v4258 = vunpack.c.h.b16 %v4199
      %v4259 = vunpack.c.l.b16 %v4200
      %v4260 = vunpack.c.h.b16 %v4200
      %v4261 = vunpack.c.l.b16 %v4201
      %v4262 = vunpack.c.h.b16 %v4201
      %v4263 = vunpack.c.l.b16 %v4202
      %v4264 = vunpack.c.h.b16 %v4202
      %v4265 = vunpack.c.l.b16 %v4203
      %v4266 = vunpack.c.h.b16 %v4203
      %v4267 = vunpack.c.l.b16 %v4204
      %v4268 = vunpack.c.h.b16 %v4204
      %v4269 = vunpack.c.l.b16 %v4205
      %v4270 = vunpack.c.h.b16 %v4205
      %v4271 = vunpack.c.l.b16 %v4206
      %v4272 = vunpack.c.h.b16 %v4206
      %v4273 = vunpack.c.l.b16 %v4207
      %v4274 = vunpack.c.h.b16 %v4207
      %v4275 = vunpack.c.l.b16 %v4208
      %v4276 = vunpack.c.h.b16 %v4208
      %v4277 = vunpack.c.l.b16 %v4209
      %v4278 = vunpack.c.h.b16 %v4209
      %v4279 = vunpack.c.l.b16 %v4210
      %v4280 = vunpack.c.h.b16 %v4210
      %v4281 = vunpack.c.l.b16 %v4211
      %v4282 = vunpack.c.h.b16 %v4211
      %v4283 = vpack.c.b16 %v4255, %v4251
      %v4284 = vpack.c.b16 %v4256, %v4252
      %v4285 = vpack.c.b16 %v4257, %v4253
      %v4286 = vpack.c.b16 %v4258, %v4254
      %v4287 = vpack.c.b16 %v4263, %v4259
      %v4288 = vpack.c.b16 %v4264, %v4260
      %v4289 = vpack.c.b16 %v4265, %v4261
      %v4290 = vpack.c.b16 %v4266, %v4262
      %v4291 = vpack.c.b16 %v4271, %v4267
      %v4292 = vpack.c.b16 %v4272, %v4268
      %v4293 = vpack.c.b16 %v4273, %v4269
      %v4294 = vpack.c.b16 %v4274, %v4270
      %v4295 = vpack.c.b16 %v4279, %v4275
      %v4296 = vpack.c.b16 %v4280, %v4276
      %v4297 = vpack.c.b16 %v4281, %v4277
      %v4298 = vpack.c.b16 %v4282, %v4278
      %v4316 = vsel %vm642, %v4194, 0
      %4318 = vmatprep.subr.bf16.mxu0 %v4284
      %4319 = vmatpush1.bf16.msra.mxu0 %v4283
      %4320 = vmatprep.subr.bf16.mxu0 %v4288
      %4321 = vmatpush1.bf16.msra.mxu0 %v4287
      %4322 = vmatprep.subr.bf16.mxu0 %v4292
      %4323 = vmatpush1.bf16.msra.mxu0 %v4291
      %4324 = vmatprep.subr.bf16.mxu0 %v4296
      %4325 = vmatpush1.bf16.msra.mxu0 %v4295
      %4326 = vmatprep.subr.bf16.mxu0 0
      %4327 = vmatpush1.bf16.msra.mxu0 0
      %4328 = vmatprep.subr.bf16.mxu0 0
      %4329 = vmatpush1.bf16.msra.mxu0 0
      %4330 = vmatprep.subr.bf16.mxu0 0
      %4331 = vmatpush1.bf16.msra.mxu0 0
      %4332 = vmatprep.subr.bf16.mxu0 0
      %4333 = vmatpush1.bf16.msra.mxu0 0
      %4334 = vmatprep.subr.bf16.mxu0 0
      %4335 = vmatpush1.bf16.msra.mxu0 0
      %4336 = vmatprep.subr.bf16.mxu0 0
      %4337 = vmatpush1.bf16.msra.mxu0 0
      %4338 = vmatprep.subr.bf16.mxu0 0
      %4339 = vmatpush1.bf16.msra.mxu0 0
      %4340 = vmatprep.subr.bf16.mxu0 0
      %4341 = vmatpush1.bf16.msra.mxu0 0
      %4342 = vmatprep.subr.bf16.mxu0 0
      %4343 = vmatpush1.bf16.msra.mxu0 0
      %4344 = vmatprep.subr.bf16.mxu0 0
      %4345 = vmatpush1.bf16.msra.mxu0 0
      %4346 = vmatprep.subr.bf16.mxu0 0
      %4347 = vmatpush1.bf16.msra.mxu0 0
      %4348 = vmatprep.subr.bf16.mxu0 0
      %4349 = vmatpush1.bf16.msra.mxu0 0
      %4350 = vmatprep.mubr.bf16.mxu0 0
      %4351 = vmatmul.mubr.bf16.gmra.mrb[0].mxu0 %v4316
      %v4352 = vpop.f32.mrb[0].mxu0
      %v4353 = vadd.f32 %v4218, %v4352
      %v4354 = vpop.f32.mrb[0].mxu0
      %v4355 = vadd.f32 %v4222, %v4354
      %v4356 = vpop.f32.mrb[0].mxu0
      %v4357 = vpop.f32.mrb[0].mxu0
      %4358 = vdwg.mxu0
      %4359 = vmatprep.subr.bf16.mxu0 %v4286
      %4360 = vmatpush1.bf16.msra.mxu0 %v4285
      %4361 = vmatprep.subr.bf16.mxu0 %v4290
      %4362 = vmatpush1.bf16.msra.mxu0 %v4289
      %4363 = vmatprep.subr.bf16.mxu0 %v4294
      %4364 = vmatpush1.bf16.msra.mxu0 %v4293
      %4365 = vmatprep.subr.bf16.mxu0 %v4298
      %4366 = vmatpush1.bf16.msra.mxu0 %v4297
      %4367 = vmatprep.subr.bf16.mxu0 0
      %4368 = vmatpush1.bf16.msra.mxu0 0
      %4369 = vmatprep.subr.bf16.mxu0 0
      %4370 = vmatpush1.bf16.msra.mxu0 0
      %4371 = vmatprep.subr.bf16.mxu0 0
      %4372 = vmatpush1.bf16.msra.mxu0 0
      %4373 = vmatprep.subr.bf16.mxu0 0
      %4374 = vmatpush1.bf16.msra.mxu0 0
      %4375 = vmatprep.subr.bf16.mxu0 0
      %4376 = vmatpush1.bf16.msra.mxu0 0
      %4377 = vmatprep.subr.bf16.mxu0 0
      %4378 = vmatpush1.bf16.msra.mxu0 0
      %4379 = vmatprep.subr.bf16.mxu0 0
      %4380 = vmatpush1.bf16.msra.mxu0 0
      %4381 = vmatprep.subr.bf16.mxu0 0
      %4382 = vmatpush1.bf16.msra.mxu0 0
      %4383 = vmatprep.subr.bf16.mxu0 0
      %4384 = vmatpush1.bf16.msra.mxu0 0
      %4385 = vmatprep.subr.bf16.mxu0 0
      %4386 = vmatpush1.bf16.msra.mxu0 0
      %4387 = vmatprep.subr.bf16.mxu0 0
      %4388 = vmatpush1.bf16.msra.mxu0 0
      %4389 = vmatprep.subr.bf16.mxu0 0
      %4390 = vmatpush1.bf16.msra.mxu0 0
      %4391 = vmatprep.mubr.bf16.mxu0 0
      %4392 = vmatmul.mubr.bf16.gmra.mrb[0].mxu0 %v4316
      %v4393 = vpop.f32.mrb[0].mxu0
      %v4394 = vadd.f32 %v4226, %v4393
      %v4395 = vpop.f32.mrb[0].mxu0
      %v4396 = vadd.f32 %v4230, %v4395
      %v4397 = vpop.f32.mrb[0].mxu0
      %v4398 = vpop.f32.mrb[0].mxu0
      %4399 = vdwg.mxu0
      %v4400 = vmax.f32 %v4353, 0.0
      %v4401 = vmax.f32 %v4355, 0.0
      %v4402 = vmax.f32 %v4394, 0.0
      %v4403 = vmax.f32 %v4396, 0.0
      %v4404 = vpack.c.bf16 %v4400, %v4400
      %v4405 = vpack.c.bf16 %v4401, %v4401
      %v4406 = vpack.c.bf16 %v4402, %v4402
      %v4407 = vpack.c.bf16 %v4403, %v4403
      %s4408 = scalar_lea.vmem %s11, 256
      %v4409 = vld [vmem:[%s4408] sm:$0xf]
      %v4410 = vld [vmem:[%s4408 + $0x4] sm:$0xf]
      %v4411 = vld [vmem:[%s4408 + $0x8] sm:$0xf]
      %v4412 = vld [vmem:[%s4408 + $0xc] sm:$0xf]
      %v4413 = vld [vmem:[%s4408 + $0x10] sm:$0xf]
      %v4414 = vld [vmem:[%s4408 + $0x14] sm:$0xf]
      %v4415 = vld [vmem:[%s4408 + $0x18] sm:$0xf]
      %v4416 = vld [vmem:[%s4408 + $0x1c] sm:$0xf]
      %v4417 = vld [vmem:[%s4408 + $0x20] sm:$0xf]
      %v4418 = vld [vmem:[%s4408 + $0x24] sm:$0xf]
      %v4419 = vld [vmem:[%s4408 + $0x28] sm:$0xf]
      %v4420 = vld [vmem:[%s4408 + $0x2c] sm:$0xf]
      %v4421 = vld [vmem:[%s4408 + $0x30] sm:$0xf]
      %v4422 = vld [vmem:[%s4408 + $0x34] sm:$0xf]
      %v4423 = vld [vmem:[%s4408 + $0x38] sm:$0xf]
      %v4424 = vld [vmem:[%s4408 + $0x3c] sm:$0xf]
      %v4425 = vld [vmem:[%s4408 + $0x40] sm:$0xf]
      %v4426 = vld [vmem:[%s4408 + $0x44] sm:$0xf]
      %v4427 = vld [vmem:[%s4408 + $0x48] sm:$0xf]
      %v4428 = vld [vmem:[%s4408 + $0x4c] sm:$0xf]
      %v4429 = vld [vmem:[%s4408 + $0x50] sm:$0xf]
      %v4430 = vld [vmem:[%s4408 + $0x54] sm:$0xf]
      %v4431 = vld [vmem:[%s4408 + $0x58] sm:$0xf]
      %v4432 = vld [vmem:[%s4408 + $0x5c] sm:$0xf]
      %v4433 = vld [vmem:[%s4408 + $0x60] sm:$0xf]
      %v4434 = vld [vmem:[%s4408 + $0x64] sm:$0xf]
      %v4435 = vld [vmem:[%s4408 + $0x68] sm:$0xf]
      %v4436 = vld [vmem:[%s4408 + $0x6c] sm:$0xf]
      %v4437 = vld [vmem:[%s4408 + $0x70] sm:$0xf]
      %v4438 = vld [vmem:[%s4408 + $0x74] sm:$0xf]
      %v4439 = vld [vmem:[%s4408 + $0x78] sm:$0xf]
      %v4440 = vld [vmem:[%s4408 + $0x7c] sm:$0xf]
      %v4441 = vld [vmem:[%s4408 + $0x80] sm:$0xf]
      %v4442 = vld [vmem:[%s4408 + $0x84] sm:$0xf]
      %v4443 = vld [vmem:[%s4408 + $0x88] sm:$0xf]
      %v4444 = vld [vmem:[%s4408 + $0x8c] sm:$0xf]
      %v4445 = vld [vmem:[%s4408 + $0x90] sm:$0xf]
      %v4446 = vld [vmem:[%s4408 + $0x94] sm:$0xf]
      %v4447 = vld [vmem:[%s4408 + $0x98] sm:$0xf]
      %v4448 = vld [vmem:[%s4408 + $0x9c] sm:$0xf]
      %v4449 = vld [vmem:[%s4408 + $0xa0] sm:$0xf]
      %v4450 = vld [vmem:[%s4408 + $0xa4] sm:$0xf]
      %v4451 = vld [vmem:[%s4408 + $0xa8] sm:$0xf]
      %v4452 = vld [vmem:[%s4408 + $0xac] sm:$0xf]
      %v4453 = vld [vmem:[%s4408 + $0xb0] sm:$0xf]
      %v4454 = vld [vmem:[%s4408 + $0xb4] sm:$0xf]
      %v4455 = vld [vmem:[%s4408 + $0xb8] sm:$0xf]
      %v4456 = vld [vmem:[%s4408 + $0xbc] sm:$0xf]
      %v4457 = vld [vmem:[%s4408 + $0xc0] sm:$0xf]
      %v4458 = vld [vmem:[%s4408 + $0xc4] sm:$0xf]
      %v4459 = vld [vmem:[%s4408 + $0xc8] sm:$0xf]
      %v4460 = vld [vmem:[%s4408 + $0xcc] sm:$0xf]
      %v4461 = vld [vmem:[%s4408 + $0xd0] sm:$0xf]
      %v4462 = vld [vmem:[%s4408 + $0xd4] sm:$0xf]
      %v4463 = vld [vmem:[%s4408 + $0xd8] sm:$0xf]
      %v4464 = vld [vmem:[%s4408 + $0xdc] sm:$0xf]
      %v4465 = vld [vmem:[%s4408 + $0xe0] sm:$0xf]
      %v4466 = vld [vmem:[%s4408 + $0xe4] sm:$0xf]
      %v4467 = vld [vmem:[%s4408 + $0xe8] sm:$0xf]
      %v4468 = vld [vmem:[%s4408 + $0xec] sm:$0xf]
      %v4469 = vld [vmem:[%s4408 + $0xf0] sm:$0xf]
      %v4470 = vld [vmem:[%s4408 + $0xf4] sm:$0xf]
      %v4471 = vld [vmem:[%s4408 + $0xf8] sm:$0xf]
      %v4472 = vld [vmem:[%s4408 + $0xfc] sm:$0xf]
      %s4473 = scalar_lea.vmem %s12, 1
      %v4474 = vld [vmem:[%s4473] sm:$0x1]
      %v4476 = vlaneseq
      %v4477 = vshrl.u32 %v4476, 7
      %v4478 = vsub.s32 0, %v4477
      %v4479 = vrot.slane %v4474, %v4478
      %v4545 = vunpack.c.l.b16 %v4409
      %v4546 = vunpack.c.l.b16 %v4410
      %v4547 = vunpack.c.l.b16 %v4411
      %v4548 = vunpack.c.l.b16 %v4412
      %v4549 = vunpack.c.l.b16 %v4413
      %v4550 = vunpack.c.l.b16 %v4414
      %v4551 = vunpack.c.l.b16 %v4415
      %v4552 = vunpack.c.l.b16 %v4416
      %v4553 = vunpack.c.l.b16 %v4417
      %v4554 = vunpack.c.l.b16 %v4418
      %v4555 = vunpack.c.l.b16 %v4419
      %v4556 = vunpack.c.l.b16 %v4420
      %v4557 = vunpack.c.l.b16 %v4421
      %v4558 = vunpack.c.l.b16 %v4422
      %v4559 = vunpack.c.l.b16 %v4423
      %v4560 = vunpack.c.l.b16 %v4424
      %v4561 = vunpack.c.l.b16 %v4425
      %v4562 = vunpack.c.l.b16 %v4426
      %v4563 = vunpack.c.l.b16 %v4427
      %v4564 = vunpack.c.l.b16 %v4428
      %v4565 = vunpack.c.l.b16 %v4429
      %v4566 = vunpack.c.l.b16 %v4430
      %v4567 = vunpack.c.l.b16 %v4431
      %v4568 = vunpack.c.l.b16 %v4432
      %v4569 = vunpack.c.l.b16 %v4433
      %v4570 = vunpack.c.l.b16 %v4434
      %v4571 = vunpack.c.l.b16 %v4435
      %v4572 = vunpack.c.l.b16 %v4436
      %v4573 = vunpack.c.l.b16 %v4437
      %v4574 = vunpack.c.l.b16 %v4438
      %v4575 = vunpack.c.l.b16 %v4439
      %v4576 = vunpack.c.l.b16 %v4440
      %v4577 = vunpack.c.l.b16 %v4441
      %v4578 = vunpack.c.l.b16 %v4442
      %v4579 = vunpack.c.l.b16 %v4443
      %v4580 = vunpack.c.l.b16 %v4444
      %v4581 = vunpack.c.l.b16 %v4445
      %v4582 = vunpack.c.l.b16 %v4446
      %v4583 = vunpack.c.l.b16 %v4447
      %v4584 = vunpack.c.l.b16 %v4448
      %v4585 = vunpack.c.l.b16 %v4449
      %v4586 = vunpack.c.l.b16 %v4450
      %v4587 = vunpack.c.l.b16 %v4451
      %v4588 = vunpack.c.l.b16 %v4452
      %v4589 = vunpack.c.l.b16 %v4453
      %v4590 = vunpack.c.l.b16 %v4454
      %v4591 = vunpack.c.l.b16 %v4455
      %v4592 = vunpack.c.l.b16 %v4456
      %v4593 = vunpack.c.l.b16 %v4457
      %v4594 = vunpack.c.l.b16 %v4458
      %v4595 = vunpack.c.l.b16 %v4459
      %v4596 = vunpack.c.l.b16 %v4460
      %v4597 = vunpack.c.l.b16 %v4461
      %v4598 = vunpack.c.l.b16 %v4462
      %v4599 = vunpack.c.l.b16 %v4463
      %v4600 = vunpack.c.l.b16 %v4464
      %v4601 = vunpack.c.l.b16 %v4465
      %v4602 = vunpack.c.l.b16 %v4466
      %v4603 = vunpack.c.l.b16 %v4467
      %v4604 = vunpack.c.l.b16 %v4468
      %v4605 = vunpack.c.l.b16 %v4469
      %v4606 = vunpack.c.l.b16 %v4470
      %v4607 = vunpack.c.l.b16 %v4471
      %v4608 = vunpack.c.l.b16 %v4472
      %v4609 = vpack.c.b16 %v4546, %v4545
      %v4610 = vpack.c.b16 %v4548, %v4547
      %v4611 = vpack.c.b16 %v4550, %v4549
      %v4612 = vpack.c.b16 %v4552, %v4551
      %v4613 = vpack.c.b16 %v4554, %v4553
      %v4614 = vpack.c.b16 %v4556, %v4555
      %v4615 = vpack.c.b16 %v4558, %v4557
      %v4616 = vpack.c.b16 %v4560, %v4559
      %v4617 = vpack.c.b16 %v4562, %v4561
      %v4618 = vpack.c.b16 %v4564, %v4563
      %v4619 = vpack.c.b16 %v4566, %v4565
      %v4620 = vpack.c.b16 %v4568, %v4567
      %v4621 = vpack.c.b16 %v4570, %v4569
      %v4622 = vpack.c.b16 %v4572, %v4571
      %v4623 = vpack.c.b16 %v4574, %v4573
      %v4624 = vpack.c.b16 %v4576, %v4575
      %v4625 = vpack.c.b16 %v4578, %v4577
      %v4626 = vpack.c.b16 %v4580, %v4579
      %v4627 = vpack.c.b16 %v4582, %v4581
      %v4628 = vpack.c.b16 %v4584, %v4583
      %v4629 = vpack.c.b16 %v4586, %v4585
      %v4630 = vpack.c.b16 %v4588, %v4587
      %v4631 = vpack.c.b16 %v4590, %v4589
      %v4632 = vpack.c.b16 %v4592, %v4591
      %v4633 = vpack.c.b16 %v4594, %v4593
      %v4634 = vpack.c.b16 %v4596, %v4595
      %v4635 = vpack.c.b16 %v4598, %v4597
      %v4636 = vpack.c.b16 %v4600, %v4599
      %v4637 = vpack.c.b16 %v4602, %v4601
      %v4638 = vpack.c.b16 %v4604, %v4603
      %v4639 = vpack.c.b16 %v4606, %v4605
      %v4640 = vpack.c.b16 %v4608, %v4607
      %4673 = vmatprep.subr.bf16.mxu0 0
      %4674 = vmatpush1.bf16.msra.mxu0 %v4609
      %4675 = vmatprep.subr.bf16.mxu0 0
      %4676 = vmatpush1.bf16.msra.mxu0 %v4610
      %4677 = vmatprep.subr.bf16.mxu0 0
      %4678 = vmatpush1.bf16.msra.mxu0 %v4611
      %4679 = vmatprep.subr.bf16.mxu0 0
      %4680 = vmatpush1.bf16.msra.mxu0 %v4612
      %4681 = vmatprep.subr.bf16.mxu0 0
      %4682 = vmatpush1.bf16.msra.mxu0 %v4613
      %4683 = vmatprep.subr.bf16.mxu0 0
      %4684 = vmatpush1.bf16.msra.mxu0 %v4614
      %4685 = vmatprep.subr.bf16.mxu0 0
      %4686 = vmatpush1.bf16.msra.mxu0 %v4615
      %4687 = vmatprep.subr.bf16.mxu0 0
      %4688 = vmatpush1.bf16.msra.mxu0 %v4616
      %4689 = vmatprep.subr.bf16.mxu0 0
      %4690 = vmatpush1.bf16.msra.mxu0 %v4617
      %4691 = vmatprep.subr.bf16.mxu0 0
      %4692 = vmatpush1.bf16.msra.mxu0 %v4618
      %4693 = vmatprep.subr.bf16.mxu0 0
      %4694 = vmatpush1.bf16.msra.mxu0 %v4619
      %4695 = vmatprep.subr.bf16.mxu0 0
      %4696 = vmatpush1.bf16.msra.mxu0 %v4620
      %4697 = vmatprep.subr.bf16.mxu0 0
      %4698 = vmatpush1.bf16.msra.mxu0 %v4621
      %4699 = vmatprep.subr.bf16.mxu0 0
      %4700 = vmatpush1.bf16.msra.mxu0 %v4622
      %4701 = vmatprep.subr.bf16.mxu0 0
      %4702 = vmatpush1.bf16.msra.mxu0 %v4623
      %4703 = vmatprep.subr.bf16.mxu0 0
      %4704 = vmatpush1.bf16.msra.mxu0 %v4624
      %4705 = vmatprep.mubr.bf16.mxu0 %v4405
      %4706 = vmatmul.mubr.bf16.gmra.mrb[0].mxu0 %v4404
      %v4707 = vpop.f32.mrb[0].mxu0
      %v4708 = vadd.f32 %v4479, %v4707
      %v4709 = vpop.f32.mrb[0].mxu0
      %v4710 = vpop.f32.mrb[0].mxu0
      %v4711 = vpop.f32.mrb[0].mxu0
      %4712 = vdwg.mxu0
      %4713 = vmatprep.subr.bf16.mxu0 0
      %4714 = vmatpush1.bf16.msra.mxu0 %v4625
      %4715 = vmatprep.subr.bf16.mxu0 0
      %4716 = vmatpush1.bf16.msra.mxu0 %v4626
      %4717 = vmatprep.subr.bf16.mxu0 0
      %4718 = vmatpush1.bf16.msra.mxu0 %v4627
      %4719 = vmatprep.subr.bf16.mxu0 0
      %4720 = vmatpush1.bf16.msra.mxu0 %v4628
      %4721 = vmatprep.subr.bf16.mxu0 0
      %4722 = vmatpush1.bf16.msra.mxu0 %v4629
      %4723 = vmatprep.subr.bf16.mxu0 0
      %4724 = vmatpush1.bf16.msra.mxu0 %v4630
      %4725 = vmatprep.subr.bf16.mxu0 0
      %4726 = vmatpush1.bf16.msra.mxu0 %v4631
      %4727 = vmatprep.subr.bf16.mxu0 0
      %4728 = vmatpush1.bf16.msra.mxu0 %v4632
      %4729 = vmatprep.subr.bf16.mxu0 0
      %4730 = vmatpush1.bf16.msra.mxu0 %v4633
      %4731 = vmatprep.subr.bf16.mxu0 0
      %4732 = vmatpush1.bf16.msra.mxu0 %v4634
      %4733 = vmatprep.subr.bf16.mxu0 0
      %4734 = vmatpush1.bf16.msra.mxu0 %v4635
      %4735 = vmatprep.subr.bf16.mxu0 0
      %4736 = vmatpush1.bf16.msra.mxu0 %v4636
      %4737 = vmatprep.subr.bf16.mxu0 0
      %4738 = vmatpush1.bf16.msra.mxu0 %v4637
      %4739 = vmatprep.subr.bf16.mxu0 0
      %4740 = vmatpush1.bf16.msra.mxu0 %v4638
      %4741 = vmatprep.subr.bf16.mxu0 0
      %4742 = vmatpush1.bf16.msra.mxu0 %v4639
      %4743 = vmatprep.subr.bf16.mxu0 0
      %4744 = vmatpush1.bf16.msra.mxu0 %v4640
      %4745 = vmatprep.mubr.bf16.mxu0 %v4407
      %4746 = vmatmul.mubr.bf16.gmra.mrb[0].mxu0 %v4406
      %v4747 = vpop.f32.mrb[0].mxu0
      %v4748 = vadd.f32 %v4708, %v4747
      %v4749 = vpop.f32.mrb[0].mxu0
      %v4750 = vpop.f32.mrb[0].mxu0
      %v4751 = vpop.f32.mrb[0].mxu0
      %4752 = vdwg.mxu0
      %v4753 = vadd.f32 %v4193, %v4748
      %s4754 = scalar_lea.vmem %s15, 1
      %v4755 = vld [vmem:[%s4754] sm:$0x1]
      %s4756 = scalar_lea.vmem %s16, 1
      %v4757 = vld [vmem:[%s4756] sm:$0x1]
      %v4758 = vsel %vm642, %v4753, 0.0
      %4759 = vadd.xlane.f32.xlu0 %v4758
      %v4760 = vpop.xlane.xlu0 %4759
      %v4761 = vmul.f32 %v4760, %v2077
      %v4762 = vsub.f32 %v4753, %v4761
      %v4763 = vmul.f32 %v4762, %v4762
      %v4764 = vsel %vm642, %v4763, 0.0
      %4765 = vadd.xlane.f32.xlu0 %v4764
      %v4766 = vpop.xlane.xlu0 %4765
      %v4767 = vmul.f32 %v4766, %v2077
      %v4768 = vadd.f32 %v4767, 1e-05
      %v4769 = vrsqrt.pop %v4768
      %v4770 = vmul.f32 %v4762, %v4769
      %v4772 = vlaneseq
      %v4773 = vshrl.u32 %v4772, 7
      %v4774 = vsub.s32 0, %v4773
      %v4775 = vrot.slane %v4755, %v4774
      %v4777 = vmul.f32 %v4770, %v4775
      %v4779 = vlaneseq
      %v4780 = vshrl.u32 %v4779, 7
      %v4781 = vsub.s32 0, %v4780
      %v4782 = vrot.slane %v4757, %v4781
      %v4784 = vadd.f32 %v4777, %v4782
      %v4785 = vpack.c.bf16 %v4784, %v4784
      %v4786 = vld [vmem:[%s17] sm:$0xf]
      %v4787 = vld [vmem:[%s17 + $0x4] sm:$0xf]
      %v4788 = vld [vmem:[%s17 + $0x8] sm:$0xf]
      %v4789 = vld [vmem:[%s17 + $0xc] sm:$0xf]
      %v4790 = vld [vmem:[%s17 + $0x10] sm:$0xf]
      %v4791 = vld [vmem:[%s17 + $0x14] sm:$0xf]
      %v4792 = vld [vmem:[%s17 + $0x18] sm:$0xf]
      %v4793 = vld [vmem:[%s17 + $0x1c] sm:$0xf]
      %v4794 = vld [vmem:[%s18] sm:$0x1]
      %v4796 = vlaneseq
      %v4797 = vshrl.u32 %v4796, 7
      %v4798 = vsub.s32 0, %v4797
      %v4799 = vrot.slane %v4794, %v4798
      %v4809 = vunpack.c.l.b16 %v4786
      %v4810 = vunpack.c.l.b16 %v4787
      %v4811 = vunpack.c.l.b16 %v4788
      %v4812 = vunpack.c.l.b16 %v4789
      %v4813 = vunpack.c.l.b16 %v4790
      %v4814 = vunpack.c.l.b16 %v4791
      %v4815 = vunpack.c.l.b16 %v4792
      %v4816 = vunpack.c.l.b16 %v4793
      %v4817 = vpack.c.b16 %v4810, %v4809
      %v4818 = vpack.c.b16 %v4812, %v4811
      %v4819 = vpack.c.b16 %v4814, %v4813
      %v4820 = vpack.c.b16 %v4816, %v4815
      %v4826 = vsel %vm642, %v4785, 0
      %4828 = vmatprep.subr.bf16.mxu0 0
      %4829 = vmatpush1.bf16.msra.mxu0 %v4817
      %4830 = vmatprep.subr.bf16.mxu0 0
      %4831 = vmatpush1.bf16.msra.mxu0 %v4818
      %4832 = vmatprep.subr.bf16.mxu0 0
      %4833 = vmatpush1.bf16.msra.mxu0 %v4819
      %4834 = vmatprep.subr.bf16.mxu0 0
      %4835 = vmatpush1.bf16.msra.mxu0 %v4820
      %4836 = vmatprep.subr.bf16.mxu0 0
      %4837 = vmatpush1.bf16.msra.mxu0 0
      %4838 = vmatprep.subr.bf16.mxu0 0
      %4839 = vmatpush1.bf16.msra.mxu0 0
      %4840 = vmatprep.subr.bf16.mxu0 0
      %4841 = vmatpush1.bf16.msra.mxu0 0
      %4842 = vmatprep.subr.bf16.mxu0 0
      %4843 = vmatpush1.bf16.msra.mxu0 0
      %4844 = vmatprep.subr.bf16.mxu0 0
      %4845 = vmatpush1.bf16.msra.mxu0 0
      %4846 = vmatprep.subr.bf16.mxu0 0
      %4847 = vmatpush1.bf16.msra.mxu0 0
      %4848 = vmatprep.subr.bf16.mxu0 0
      %4849 = vmatpush1.bf16.msra.mxu0 0
      %4850 = vmatprep.subr.bf16.mxu0 0
      %4851 = vmatpush1.bf16.msra.mxu0 0
      %4852 = vmatprep.subr.bf16.mxu0 0
      %4853 = vmatpush1.bf16.msra.mxu0 0
      %4854 = vmatprep.subr.bf16.mxu0 0
      %4855 = vmatpush1.bf16.msra.mxu0 0
      %4856 = vmatprep.subr.bf16.mxu0 0
      %4857 = vmatpush1.bf16.msra.mxu0 0
      %4858 = vmatprep.subr.bf16.mxu0 0
      %4859 = vmatpush1.bf16.msra.mxu0 0
      %4860 = vmatprep.mubr.bf16.mxu0 0
      %4861 = vmatmul.mubr.bf16.gmra.mrb[0].mxu0 %v4826
      %v4862 = vpop.f32.mrb[0].mxu0
      %v4863 = vadd.f32 %v4799, %v4862
      %v4864 = vpop.f32.mrb[0].mxu0
      %v4865 = vpop.f32.mrb[0].mxu0
      %v4866 = vpop.f32.mrb[0].mxu0
      %4867 = vdwg.mxu0
      %4868 = vst [vmem:[%s597] sm:$0xff] %v4863
      %p4869 = scmp.lt.s32.totalorder %s30, 1
      %s4870 = scalar_select %p4869, %s30, 1
      %s4871 = smul.addr %s4870, 8
      %s4872 = scalar_lea.vmem %s19, %s4871
      // Predicated region
      $region97: #{ecg_bert_forward.1} parent=95 // pred_check
        %p4873 = pneg %p452
      $region98: #{ecg_bert_forward.1} parent=95 // pred_check_branch
        %4875 = sbr.rel (%p4873) target = $region100
      $region99: #{ecg_bert_forward.1} parent=95 // pred_region
        _
      $region100: #{ecg_bert_forward.1} parent=95 // pred_fallthru
        _
    $region96: #{ecg_bert_forward.1} parent=5 // pred_fallthru
      _
    %p4876 = scmp.le.s32.totalorder 2, %s25
    // Predicated region
    $region101: #{ecg_bert_forward.1} parent=5 // pred_check
      %p4877 = pneg %p4876
    $region102: #{ecg_bert_forward.1} parent=5 // pred_check_branch
      %4879 = sbr.rel (%p4877) target = $region104
    $region103: #{ecg_bert_forward.1} parent=5 // pred_region
      %s4880 = ssub.s32 %s25, 2
      // Predicated region
      $region105: #{ecg_bert_forward.1} parent=103 // pred_check
        %p4881 = pneg %p458
      $region106: #{ecg_bert_forward.1} parent=103 // pred_check_branch
        %4883 = sbr.rel (%p4881) target = $region108
      $region107: #{ecg_bert_forward.1} parent=103 // pred_region
        %p4884 = scmp.lt.s32.totalorder %s31, 1
        %s4885 = scalar_select %p4884, %s31, 1
        %s4886 = smul.addr %s4885, 8
        %s4887 = scalar_lea.vmem %s19, %s4886
      $region108: #{ecg_bert_forward.1} parent=103 // pred_fallthru
        _
    $region104: #{ecg_bert_forward.1} parent=5 // pred_fallthru
      _
  $region6: #{ecg_bert_forward.1} parent=0 // loop_footer
    %s29 = sadd.s32 1, %s25
  $region7: #{ecg_bert_forward.1} parent=0 // loop_footer_branch
    %24 = sbr.rel target = $region3
  $region8: #{ecg_bert_forward.1} parent=0 // loop_exit
    _

</llo_original>
